<compile_context>
chip_gen: v6e
topology: v6e:2x2x1
jax: 0.10.0
libtpu: 0.0.40
codegen_flags: <defaults>
</compile_context>

<pallas_src>
import jax
import jax.numpy as jnp
from jax import lax
from jax.experimental import pallas as pl
from jax.experimental.pallas import tpu as pltpu


# ------------------------------ fused kernel -------------------------------

def _qnet_darqn_kernel(p1_ref, h0_ref, c0_ref,
                       w1_ref, b1_ref, w2_ref, b2_ref, w3_ref, b3_ref,
                       whcat_ref, bah_ref, bhh_ref,
                       wax_ref, bax_ref, waz_ref, baz_ref,
                       wih_ref, bih_ref, wq_ref, bq_ref,
                       q_ref, h_ref, c_ref):
    f32 = jnp.float32
    bf16 = jnp.bfloat16

    # ---- conv1: relu(P1 @ W1 + b1) -> (400, 32) --------------------------
    # P1 rows are parity-ordered: row = (h%2*2 + w%2)*100 + (h//2)*10 + w//2
    a1 = jnp.dot(p1_ref[...], w1_ref[...], preferred_element_type=f32)
    a1 = jnp.maximum(a1 + b1_ref[...], 0.0)

    # ---- conv2: 4x4 / stride 2 on the 20x20 map -------------------------
    # For kernel offset (i, j) all required conv1 rows form one contiguous
    # 89-row window of the parity-ordered a1 -> a single slice per offset.
    w2k = w2_ref[...]                                  # (16, 32, 64) bf16
    acc2 = jnp.zeros((89, 64), f32)
    for i in range(4):
        for j in range(4):
            base = 100 * ((i % 2) * 2 + (j % 2)) + 10 * (i // 2) + (j // 2)
            acc2 = acc2 + jnp.dot(a1[base:base + 89, :].astype(bf16),
                                  w2k[i * 4 + j],
                                  preferred_element_type=f32)
    # a2f row 10*R + C (C <= 8) is conv2 output at spatial (R, C); rows with
    # C == 9 are harmless padding that valid conv3 taps never read.
    a2f = jnp.maximum(acc2 + b2_ref[...], 0.0)         # (89, 64)

    # ---- conv3: 3x3 / stride 1 on the 9x9 map ----------------------------
    # Same trick: one contiguous 67-row window of a2f per kernel offset.
    w3k = w3_ref[...]                                  # (9, 64, 64) bf16
    acc3 = jnp.zeros((67, 64), f32)
    for i in range(3):
        for j in range(3):
            start = 10 * i + j
            acc3 = acc3 + jnp.dot(a2f[start:start + 67, :].astype(bf16),
                                  w3k[i * 3 + j],
                                  preferred_element_type=f32)
    x3f = jnp.maximum(acc3 + b3_ref[...], 0.0)         # (67, 64)

    # compact to the 49 valid conv3 positions (row-major) == torch x.T layout
    x3 = jnp.concatenate([x3f[10 * r:10 * r + 7, :] for r in range(7)], axis=0)

    # ---- attention + LSTMCell + Q head (all f32) --------------------------
    h0 = h0_ref[...]                                   # (1, 64)
    c0 = c0_ref[...]                                   # (1, 64)

    # merged h0 projection: [attention_h | lstm W_hh] -> (1, 320)
    hproj = jnp.dot(h0, whcat_ref[...], preferred_element_type=f32)
    h_att = hproj[:, 0:64] + bah_ref[...]              # attention_h(h0)
    hh_gates = hproj[:, 64:320] + bhh_ref[...]         # h0 @ W_hh.T + b_hh

    xa = jnp.dot(x3, wax_ref[...], preferred_element_type=f32) + bax_ref[...]
    z = jnp.tanh(xa + h_att)
    z = jnp.dot(z, waz_ref[...], preferred_element_type=f32) + baz_ref[...]
    # F.softmax default dim for a 2-D tensor is dim=1 (feature axis)
    z = z - jnp.max(z, axis=1, keepdims=True)
    e = jnp.exp(z)
    attn = e / jnp.sum(e, axis=1, keepdims=True)
    out = attn * xa                                    # torch: out = z * x (x == xa)

    # sum over the 49 positions as a matmul against a ones row (MXU)
    lstm_in = jnp.dot(jnp.ones((1, 49), f32), out, preferred_element_type=f32)

    gates = (jnp.dot(lstm_in, wih_ref[...], preferred_element_type=f32)
             + bih_ref[...] + hh_gates)
    i_g = jax.nn.sigmoid(gates[:, 0:64])
    f_g = jax.nn.sigmoid(gates[:, 64:128])
    g_g = jnp.tanh(gates[:, 128:192])
    o_g = jax.nn.sigmoid(gates[:, 192:256])
    c_new = f_g * c0 + i_g * g_g
    h_new = o_g * jnp.tanh(c_new)

    q_ref[...] = jnp.dot(h_new, wq_ref[...], preferred_element_type=f32) + bq_ref[...]
    h_ref[...] = h_new
    c_ref[...] = c_new


def _fused_forward(p1, h0, c0, p):
    out_shape = (jax.ShapeDtypeStruct((1, 5), jnp.float32),
                 jax.ShapeDtypeStruct((1, 64), jnp.float32),
                 jax.ShapeDtypeStruct((1, 64), jnp.float32))
    args = (p1, h0, c0,
            p["w1m"], p["b1"], p["w2k"], p["b2"], p["w3k"], p["b3"],
            p["whcat"], p["bah"], p["bhh"],
            p["waxT"], p["bax"], p["wazT"], p["baz"],
            p["wihT"], p["bih"], p["wqT"], p["bq"])
    vmem = pl.BlockSpec(memory_space=pltpu.MemorySpace.VMEM)
    return pl.pallas_call(
        _qnet_darqn_kernel,
        out_shape=out_shape,
        in_specs=[vmem] * len(args),
        out_specs=(vmem, vmem, vmem),
    )(*args)


# -------------------------------- JAX glue ---------------------------------

def qnet_darqn_forward(params, x, hidden):
    """x: (1, 1, 84, 84) NCHW, hidden = (h (1, 64), c (1, 64))."""
    # conv1 patches in one XLA op; feature dim = 64 filter taps (C_in == 1).
    patches = lax.conv_general_dilated_patches(
        x, filter_shape=(8, 8), window_strides=(4, 4), padding='VALID',
        dimension_numbers=('NCHW', 'OIHW', 'NCHW'))           # (1, 64, 20, 20)
    # Reorder the 400 spatial positions into (h%2, w%2, h//2, w//2) parity
    # blocks so conv2's in-kernel patch windows are contiguous sublane slices.
    p1 = jnp.transpose(patches[0].reshape(64, 10, 2, 10, 2), (2, 4, 1, 3, 0))
    p1 = p1.reshape(400, 64).astype(jnp.bfloat16)
    h0, c0 = hidden
    q, h, c = _fused_forward(p1, h0.astype(jnp.float32),
                             c0.astype(jnp.float32), params)
    return q, (h, c)


def xavier_uniform(key, shape, fan_in, fan_out):
    bound = (6.0 / (fan_in + fan_out)) ** 0.5
    return jax.random.uniform(key, shape, jnp.float32, -bound, bound)


def init_raw_params(key):
    """PyTorch-layout weights following QNet_DARQN.initialize_weights()."""
    ks = jax.random.split(key, 9)
    w1 = xavier_uniform(ks[0], (32, 1, 8, 8), 1 * 8 * 8, 32 * 8 * 8)
    w2 = xavier_uniform(ks[1], (64, 32, 4, 4), 32 * 4 * 4, 64 * 4 * 4)
    w3 = xavier_uniform(ks[2], (64, 64, 3, 3), 64 * 3 * 3, 64 * 3 * 3)
    wah = xavier_uniform(ks[3], (64, 64), 64, 64)
    wax = xavier_uniform(ks[4], (64, 64), 64, 64)
    waz = xavier_uniform(ks[5], (64, 64), 64, 64)
    wq = xavier_uniform(ks[6], (5, 64), 64, 5)
    stdv = 1.0 / (64.0 ** 0.5)     # LSTMCell keeps PyTorch default weights, zero biases
    wih = jax.random.uniform(ks[7], (256, 64), jnp.float32, -stdv, stdv)
    whh = jax.random.uniform(ks[8], (256, 64), jnp.float32, -stdv, stdv)
    z = lambda n: jnp.zeros((n,), jnp.float32)
    return {"w1": w1, "b1": z(32), "w2": w2, "b2": z(64), "w3": w3, "b3": z(64),
            "wah": wah, "bah": z(64), "wax": wax, "bax": z(64),
            "waz": waz, "baz": z(64), "wq": wq, "bq": z(5),
            "wih": wih, "bih": z(256), "whh": whh, "bhh": z(256)}


def pack_params(raw):
    """Kernel-ready packing: bf16 conv weights in offset-major layout, f32
    pre-transposed head weights, merged [attention_h | W_hh] projection."""
    bf16 = jnp.bfloat16
    return {
        "w1m": raw["w1"].reshape(32, 64).T.astype(bf16),                    # (64, 32)
        "b1": raw["b1"].reshape(1, 32),
        "w2k": jnp.transpose(raw["w2"], (2, 3, 1, 0)).reshape(16, 32, 64).astype(bf16),
        "b2": raw["b2"].reshape(1, 64),
        "w3k": jnp.transpose(raw["w3"], (2, 3, 1, 0)).reshape(9, 64, 64).astype(bf16),
        "b3": raw["b3"].reshape(1, 64),
        "whcat": jnp.concatenate([raw["wah"].T, raw["whh"].T], axis=1),     # (64, 320)
        "bah": raw["bah"].reshape(1, 64),
        "bhh": raw["bhh"].reshape(1, 256),
        "waxT": raw["wax"].T, "bax": raw["bax"].reshape(1, 64),
        "wazT": raw["waz"].T, "baz": raw["baz"].reshape(1, 64),
        "wihT": raw["wih"].T, "bih": raw["bih"].reshape(1, 256),
        "wqT": raw["wq"].T, "bq": raw["bq"].reshape(1, 5),
    }


# --------------------- pure-JAX reference (for checking) -------------------

def _im2col(x, kh, kw, stride):
    C, H, W = x.shape
    oh = (H - kh) // stride + 1
    ow = (W - kw) // stride + 1
    cols = []
    for i in range(kh):
        for j in range(kw):
            cols.append(x[:, i:i + stride * oh:stride, j:j + stride * ow:stride])
    return jnp.stack(cols, axis=1).reshape(C * kh * kw, oh * ow).T


def reference_forward(raw, x, hidden):
    """Plain-JAX mirror of the PyTorch module (bf16 conv operands, f32 head)."""
    def conv_relu(a, w, b, stride):
        O, C, kh, kw = w.shape
        p = _im2col(a, kh, kw, stride).astype(jnp.bfloat16)
        wm = w.reshape(O, C * kh * kw).T.astype(jnp.bfloat16)
        y = jnp.maximum(jnp.dot(p, wm, preferred_element_type=jnp.float32) + b, 0.0)
        oh = (a.shape[1] - kh) // stride + 1
        return y.T.reshape(O, oh, oh)

    a1 = conv_relu(x[0], raw["w1"], raw["b1"], 4)
    a2 = conv_relu(a1, raw["w2"], raw["b2"], 2)
    a3 = conv_relu(a2, raw["w3"], raw["b3"], 1)
    xt = a3.reshape(64, 49).T
    h0, c0 = hidden
    h_att = h0 @ raw["wah"].T + raw["bah"]
    xa = xt @ raw["wax"].T + raw["bax"]
    z = jnp.tanh(xa + h_att)
    z = z @ raw["waz"].T + raw["baz"]
    z = jax.nn.softmax(z, axis=1)
    out = z * xa
    lstm_in = jnp.sum(out, axis=0, keepdims=True)
    gates = lstm_in @ raw["wih"].T + raw["bih"] + h0 @ raw["whh"].T + raw["bhh"]
    i_g = jax.nn.sigmoid(gates[:, 0:64]); f_g = jax.nn.sigmoid(gates[:, 64:128])
    g_g = jnp.tanh(gates[:, 128:192]); o_g = jax.nn.sigmoid(gates[:, 192:256])
    c = f_g * c0 + i_g * g_g
    h = o_g * jnp.tanh(c)
    q = h @ raw["wq"].T + raw["bq"]
    return q, (h, c)


# ----------------------------------- main -----------------------------------

if __name__ == "__main__":
    key = jax.random.PRNGKey(0)
    kp, kx, kh, kc = jax.random.split(key, 4)
    raw = init_raw_params(kp)
    params = pack_params(raw)

    # QNet_DARQN hardcodes a 7x7 conv map (49 positions) => one 84x84 frame.
    x = jax.random.normal(kx, (1, 1, 84, 84), jnp.float32)
    h0 = jax.random.normal(kh, (1, 64), jnp.float32) * 0.1
    c0 = jax.random.normal(kc, (1, 64), jnp.float32) * 0.1

    fwd = jax.jit(qnet_darqn_forward)
    q, (h, c) = fwd(params, x, (h0, c0))
    q, h, c = jax.block_until_ready((q, h, c))

    assert q.shape == (1, 5) and h.shape == (1, 64) and c.shape == (1, 64)
    assert bool(jnp.isfinite(q).all()) and bool(jnp.isfinite(h).all()) and bool(jnp.isfinite(c).all())

    # Correctness check against a plain-JAX reference (same bf16 conv operands).
    q_r, (h_r, c_r) = jax.jit(reference_forward)(raw, x, (h0, c0))
    assert bool(jnp.allclose(q, q_r, atol=5e-2, rtol=5e-2))
    assert bool(jnp.allclose(h, h_r, atol=5e-2, rtol=5e-2))
    assert bool(jnp.allclose(c, c_r, atol=5e-2, rtol=5e-2))

    print("KERNEL_OK")
</pallas_src>

<mosaic_0001>
module attributes {stable_mosaic.version = 11 : i64} {
  func.func @_qnet_darqn_kernel(%arg0: memref<400x64xbf16, #tpu.memory_space<vmem>>, %arg1: memref<1x64xf32, #tpu.memory_space<vmem>>, %arg2: memref<1x64xf32, #tpu.memory_space<vmem>>, %arg3: memref<64x32xbf16, #tpu.memory_space<vmem>>, %arg4: memref<1x32xf32, #tpu.memory_space<vmem>>, %arg5: memref<16x32x64xbf16, #tpu.memory_space<vmem>>, %arg6: memref<1x64xf32, #tpu.memory_space<vmem>>, %arg7: memref<9x64x64xbf16, #tpu.memory_space<vmem>>, %arg8: memref<1x64xf32, #tpu.memory_space<vmem>>, %arg9: memref<64x320xf32, #tpu.memory_space<vmem>>, %arg10: memref<1x64xf32, #tpu.memory_space<vmem>>, %arg11: memref<1x256xf32, #tpu.memory_space<vmem>>, %arg12: memref<64x64xf32, #tpu.memory_space<vmem>>, %arg13: memref<1x64xf32, #tpu.memory_space<vmem>>, %arg14: memref<64x64xf32, #tpu.memory_space<vmem>>, %arg15: memref<1x64xf32, #tpu.memory_space<vmem>>, %arg16: memref<64x256xf32, #tpu.memory_space<vmem>>, %arg17: memref<1x256xf32, #tpu.memory_space<vmem>>, %arg18: memref<64x5xf32, #tpu.memory_space<vmem>>, %arg19: memref<1x5xf32, #tpu.memory_space<vmem>>, %arg20: memref<1x5xf32, #tpu.memory_space<vmem>>, %arg21: memref<1x64xf32, #tpu.memory_space<vmem>>, %arg22: memref<1x64xf32, #tpu.memory_space<vmem>>) attributes {dimension_semantics = [], scalar_prefetch = 0 : i64, scratch_operands = 0 : i64, tpu.core_type = #tpu.core_type<tc>} {
    %c0 = arith.constant 0 : index
    %c0_0 = arith.constant 0 : index
    %0 = vector.load %arg0[%c0, %c0_0] : memref<400x64xbf16, #tpu.memory_space<vmem>>, vector<400x64xbf16>
    %c0_1 = arith.constant 0 : index
    %c0_2 = arith.constant 0 : index
    %1 = vector.load %arg3[%c0_1, %c0_2] : memref<64x32xbf16, #tpu.memory_space<vmem>>, vector<64x32xbf16>
    %cst = arith.constant dense<0.000000e+00> : vector<400x32xf32>
    %2 = tpu.matmul %0, %1, %cst {dimension_numbers = #tpu.dot_dimension_numbers<[1], [0], [0], [1], [0, 0, 1, 1], [], []>} : vector<400x64xbf16>, vector<64x32xbf16>, vector<400x32xf32> -> vector<400x32xf32>
    %c0_3 = arith.constant 0 : index
    %c0_4 = arith.constant 0 : index
    %3 = vector.load %arg4[%c0_3, %c0_4] : memref<1x32xf32, #tpu.memory_space<vmem>>, vector<1x32xf32>
    %4 = vector.broadcast %3 : vector<1x32xf32> to vector<400x32xf32>
    %5 = arith.addf %2, %4 : vector<400x32xf32>
    %cst_5 = arith.constant 0.000000e+00 : f32
    %6 = vector.broadcast %cst_5 : f32 to vector<400x32xf32>
    %7 = arith.maximumf %5, %6 : vector<400x32xf32>
    %c0_6 = arith.constant 0 : index
    %c0_7 = arith.constant 0 : index
    %c0_8 = arith.constant 0 : index
    %8 = vector.load %arg5[%c0_6, %c0_7, %c0_8] : memref<16x32x64xbf16, #tpu.memory_space<vmem>>, vector<16x32x64xbf16>
    %cst_9 = arith.constant 0.000000e+00 : f32
    %9 = vector.broadcast %cst_9 : f32 to vector<89x64xf32>
    %10 = vector.extract_strided_slice %7 {offsets = [0, 0], sizes = [89, 32], strides = [1, 1]} : vector<400x32xf32> to vector<89x32xf32>
    %11 = arith.truncf %10 : vector<89x32xf32> to vector<89x32xbf16>
    %12 = vector.extract_strided_slice %8 {offsets = [0, 0, 0], sizes = [1, 32, 64], strides = [1, 1, 1]} : vector<16x32x64xbf16> to vector<1x32x64xbf16>
    %13 = vector.shape_cast %12 : vector<1x32x64xbf16> to vector<32x64xbf16>
    %cst_10 = arith.constant dense<0.000000e+00> : vector<89x64xf32>
    %14 = tpu.matmul %11, %13, %cst_10 {dimension_numbers = #tpu.dot_dimension_numbers<[1], [0], [0], [1], [0, 0, 1, 1], [], []>} : vector<89x32xbf16>, vector<32x64xbf16>, vector<89x64xf32> -> vector<89x64xf32>
    %15 = arith.addf %9, %14 : vector<89x64xf32>
    %16 = vector.extract_strided_slice %7 {offsets = [100, 0], sizes = [89, 32], strides = [1, 1]} : vector<400x32xf32> to vector<89x32xf32>
    %17 = arith.truncf %16 : vector<89x32xf32> to vector<89x32xbf16>
    %18 = vector.extract_strided_slice %8 {offsets = [1, 0, 0], sizes = [1, 32, 64], strides = [1, 1, 1]} : vector<16x32x64xbf16> to vector<1x32x64xbf16>
    %19 = vector.shape_cast %18 : vector<1x32x64xbf16> to vector<32x64xbf16>
    %cst_11 = arith.constant dense<0.000000e+00> : vector<89x64xf32>
    %20 = tpu.matmul %17, %19, %cst_11 {dimension_numbers = #tpu.dot_dimension_numbers<[1], [0], [0], [1], [0, 0, 1, 1], [], []>} : vector<89x32xbf16>, vector<32x64xbf16>, vector<89x64xf32> -> vector<89x64xf32>
    %21 = arith.addf %15, %20 : vector<89x64xf32>
    %22 = vector.extract_strided_slice %7 {offsets = [1, 0], sizes = [89, 32], strides = [1, 1]} : vector<400x32xf32> to vector<89x32xf32>
    %23 = arith.truncf %22 : vector<89x32xf32> to vector<89x32xbf16>
    %24 = vector.extract_strided_slice %8 {offsets = [2, 0, 0], sizes = [1, 32, 64], strides = [1, 1, 1]} : vector<16x32x64xbf16> to vector<1x32x64xbf16>
    %25 = vector.shape_cast %24 : vector<1x32x64xbf16> to vector<32x64xbf16>
    %cst_12 = arith.constant dense<0.000000e+00> : vector<89x64xf32>
    %26 = tpu.matmul %23, %25, %cst_12 {dimension_numbers = #tpu.dot_dimension_numbers<[1], [0], [0], [1], [0, 0, 1, 1], [], []>} : vector<89x32xbf16>, vector<32x64xbf16>, vector<89x64xf32> -> vector<89x64xf32>
    %27 = arith.addf %21, %26 : vector<89x64xf32>
    %28 = vector.extract_strided_slice %7 {offsets = [101, 0], sizes = [89, 32], strides = [1, 1]} : vector<400x32xf32> to vector<89x32xf32>
    %29 = arith.truncf %28 : vector<89x32xf32> to vector<89x32xbf16>
    %30 = vector.extract_strided_slice %8 {offsets = [3, 0, 0], sizes = [1, 32, 64], strides = [1, 1, 1]} : vector<16x32x64xbf16> to vector<1x32x64xbf16>
    %31 = vector.shape_cast %30 : vector<1x32x64xbf16> to vector<32x64xbf16>
    %cst_13 = arith.constant dense<0.000000e+00> : vector<89x64xf32>
    %32 = tpu.matmul %29, %31, %cst_13 {dimension_numbers = #tpu.dot_dimension_numbers<[1], [0], [0], [1], [0, 0, 1, 1], [], []>} : vector<89x32xbf16>, vector<32x64xbf16>, vector<89x64xf32> -> vector<89x64xf32>
    %33 = arith.addf %27, %32 : vector<89x64xf32>
    %34 = vector.extract_strided_slice %7 {offsets = [200, 0], sizes = [89, 32], strides = [1, 1]} : vector<400x32xf32> to vector<89x32xf32>
    %35 = arith.truncf %34 : vector<89x32xf32> to vector<89x32xbf16>
    %36 = vector.extract_strided_slice %8 {offsets = [4, 0, 0], sizes = [1, 32, 64], strides = [1, 1, 1]} : vector<16x32x64xbf16> to vector<1x32x64xbf16>
    %37 = vector.shape_cast %36 : vector<1x32x64xbf16> to vector<32x64xbf16>
    %cst_14 = arith.constant dense<0.000000e+00> : vector<89x64xf32>
    %38 = tpu.matmul %35, %37, %cst_14 {dimension_numbers = #tpu.dot_dimension_numbers<[1], [0], [0], [1], [0, 0, 1, 1], [], []>} : vector<89x32xbf16>, vector<32x64xbf16>, vector<89x64xf32> -> vector<89x64xf32>
    %39 = arith.addf %33, %38 : vector<89x64xf32>
    %40 = vector.extract_strided_slice %7 {offsets = [300, 0], sizes = [89, 32], strides = [1, 1]} : vector<400x32xf32> to vector<89x32xf32>
    %41 = arith.truncf %40 : vector<89x32xf32> to vector<89x32xbf16>
    %42 = vector.extract_strided_slice %8 {offsets = [5, 0, 0], sizes = [1, 32, 64], strides = [1, 1, 1]} : vector<16x32x64xbf16> to vector<1x32x64xbf16>
    %43 = vector.shape_cast %42 : vector<1x32x64xbf16> to vector<32x64xbf16>
    %cst_15 = arith.constant dense<0.000000e+00> : vector<89x64xf32>
    %44 = tpu.matmul %41, %43, %cst_15 {dimension_numbers = #tpu.dot_dimension_numbers<[1], [0], [0], [1], [0, 0, 1, 1], [], []>} : vector<89x32xbf16>, vector<32x64xbf16>, vector<89x64xf32> -> vector<89x64xf32>
    %45 = arith.addf %39, %44 : vector<89x64xf32>
    %46 = vector.extract_strided_slice %7 {offsets = [201, 0], sizes = [89, 32], strides = [1, 1]} : vector<400x32xf32> to vector<89x32xf32>
    %47 = arith.truncf %46 : vector<89x32xf32> to vector<89x32xbf16>
    %48 = vector.extract_strided_slice %8 {offsets = [6, 0, 0], sizes = [1, 32, 64], strides = [1, 1, 1]} : vector<16x32x64xbf16> to vector<1x32x64xbf16>
    %49 = vector.shape_cast %48 : vector<1x32x64xbf16> to vector<32x64xbf16>
    %cst_16 = arith.constant dense<0.000000e+00> : vector<89x64xf32>
    %50 = tpu.matmul %47, %49, %cst_16 {dimension_numbers = #tpu.dot_dimension_numbers<[1], [0], [0], [1], [0, 0, 1, 1], [], []>} : vector<89x32xbf16>, vector<32x64xbf16>, vector<89x64xf32> -> vector<89x64xf32>
    %51 = arith.addf %45, %50 : vector<89x64xf32>
    %52 = vector.extract_strided_slice %7 {offsets = [301, 0], sizes = [89, 32], strides = [1, 1]} : vector<400x32xf32> to vector<89x32xf32>
    %53 = arith.truncf %52 : vector<89x32xf32> to vector<89x32xbf16>
    %54 = vector.extract_strided_slice %8 {offsets = [7, 0, 0], sizes = [1, 32, 64], strides = [1, 1, 1]} : vector<16x32x64xbf16> to vector<1x32x64xbf16>
    %55 = vector.shape_cast %54 : vector<1x32x64xbf16> to vector<32x64xbf16>
    %cst_17 = arith.constant dense<0.000000e+00> : vector<89x64xf32>
    %56 = tpu.matmul %53, %55, %cst_17 {dimension_numbers = #tpu.dot_dimension_numbers<[1], [0], [0], [1], [0, 0, 1, 1], [], []>} : vector<89x32xbf16>, vector<32x64xbf16>, vector<89x64xf32> -> vector<89x64xf32>
    %57 = arith.addf %51, %56 : vector<89x64xf32>
    %58 = vector.extract_strided_slice %7 {offsets = [10, 0], sizes = [89, 32], strides = [1, 1]} : vector<400x32xf32> to vector<89x32xf32>
    %59 = arith.truncf %58 : vector<89x32xf32> to vector<89x32xbf16>
    %60 = vector.extract_strided_slice %8 {offsets = [8, 0, 0], sizes = [1, 32, 64], strides = [1, 1, 1]} : vector<16x32x64xbf16> to vector<1x32x64xbf16>
    %61 = vector.shape_cast %60 : vector<1x32x64xbf16> to vector<32x64xbf16>
    %cst_18 = arith.constant dense<0.000000e+00> : vector<89x64xf32>
    %62 = tpu.matmul %59, %61, %cst_18 {dimension_numbers = #tpu.dot_dimension_numbers<[1], [0], [0], [1], [0, 0, 1, 1], [], []>} : vector<89x32xbf16>, vector<32x64xbf16>, vector<89x64xf32> -> vector<89x64xf32>
    %63 = arith.addf %57, %62 : vector<89x64xf32>
    %64 = vector.extract_strided_slice %7 {offsets = [110, 0], sizes = [89, 32], strides = [1, 1]} : vector<400x32xf32> to vector<89x32xf32>
    %65 = arith.truncf %64 : vector<89x32xf32> to vector<89x32xbf16>
    %66 = vector.extract_strided_slice %8 {offsets = [9, 0, 0], sizes = [1, 32, 64], strides = [1, 1, 1]} : vector<16x32x64xbf16> to vector<1x32x64xbf16>
    %67 = vector.shape_cast %66 : vector<1x32x64xbf16> to vector<32x64xbf16>
    %cst_19 = arith.constant dense<0.000000e+00> : vector<89x64xf32>
    %68 = tpu.matmul %65, %67, %cst_19 {dimension_numbers = #tpu.dot_dimension_numbers<[1], [0], [0], [1], [0, 0, 1, 1], [], []>} : vector<89x32xbf16>, vector<32x64xbf16>, vector<89x64xf32> -> vector<89x64xf32>
    %69 = arith.addf %63, %68 : vector<89x64xf32>
    %70 = vector.extract_strided_slice %7 {offsets = [11, 0], sizes = [89, 32], strides = [1, 1]} : vector<400x32xf32> to vector<89x32xf32>
    %71 = arith.truncf %70 : vector<89x32xf32> to vector<89x32xbf16>
    %72 = vector.extract_strided_slice %8 {offsets = [10, 0, 0], sizes = [1, 32, 64], strides = [1, 1, 1]} : vector<16x32x64xbf16> to vector<1x32x64xbf16>
    %73 = vector.shape_cast %72 : vector<1x32x64xbf16> to vector<32x64xbf16>
    %cst_20 = arith.constant dense<0.000000e+00> : vector<89x64xf32>
    %74 = tpu.matmul %71, %73, %cst_20 {dimension_numbers = #tpu.dot_dimension_numbers<[1], [0], [0], [1], [0, 0, 1, 1], [], []>} : vector<89x32xbf16>, vector<32x64xbf16>, vector<89x64xf32> -> vector<89x64xf32>
    %75 = arith.addf %69, %74 : vector<89x64xf32>
    %76 = vector.extract_strided_slice %7 {offsets = [111, 0], sizes = [89, 32], strides = [1, 1]} : vector<400x32xf32> to vector<89x32xf32>
    %77 = arith.truncf %76 : vector<89x32xf32> to vector<89x32xbf16>
    %78 = vector.extract_strided_slice %8 {offsets = [11, 0, 0], sizes = [1, 32, 64], strides = [1, 1, 1]} : vector<16x32x64xbf16> to vector<1x32x64xbf16>
    %79 = vector.shape_cast %78 : vector<1x32x64xbf16> to vector<32x64xbf16>
    %cst_21 = arith.constant dense<0.000000e+00> : vector<89x64xf32>
    %80 = tpu.matmul %77, %79, %cst_21 {dimension_numbers = #tpu.dot_dimension_numbers<[1], [0], [0], [1], [0, 0, 1, 1], [], []>} : vector<89x32xbf16>, vector<32x64xbf16>, vector<89x64xf32> -> vector<89x64xf32>
    %81 = arith.addf %75, %80 : vector<89x64xf32>
    %82 = vector.extract_strided_slice %7 {offsets = [210, 0], sizes = [89, 32], strides = [1, 1]} : vector<400x32xf32> to vector<89x32xf32>
    %83 = arith.truncf %82 : vector<89x32xf32> to vector<89x32xbf16>
    %84 = vector.extract_strided_slice %8 {offsets = [12, 0, 0], sizes = [1, 32, 64], strides = [1, 1, 1]} : vector<16x32x64xbf16> to vector<1x32x64xbf16>
    %85 = vector.shape_cast %84 : vector<1x32x64xbf16> to vector<32x64xbf16>
    %cst_22 = arith.constant dense<0.000000e+00> : vector<89x64xf32>
    %86 = tpu.matmul %83, %85, %cst_22 {dimension_numbers = #tpu.dot_dimension_numbers<[1], [0], [0], [1], [0, 0, 1, 1], [], []>} : vector<89x32xbf16>, vector<32x64xbf16>, vector<89x64xf32> -> vector<89x64xf32>
    %87 = arith.addf %81, %86 : vector<89x64xf32>
    %88 = vector.extract_strided_slice %7 {offsets = [310, 0], sizes = [89, 32], strides = [1, 1]} : vector<400x32xf32> to vector<89x32xf32>
    %89 = arith.truncf %88 : vector<89x32xf32> to vector<89x32xbf16>
    %90 = vector.extract_strided_slice %8 {offsets = [13, 0, 0], sizes = [1, 32, 64], strides = [1, 1, 1]} : vector<16x32x64xbf16> to vector<1x32x64xbf16>
    %91 = vector.shape_cast %90 : vector<1x32x64xbf16> to vector<32x64xbf16>
    %cst_23 = arith.constant dense<0.000000e+00> : vector<89x64xf32>
    %92 = tpu.matmul %89, %91, %cst_23 {dimension_numbers = #tpu.dot_dimension_numbers<[1], [0], [0], [1], [0, 0, 1, 1], [], []>} : vector<89x32xbf16>, vector<32x64xbf16>, vector<89x64xf32> -> vector<89x64xf32>
    %93 = arith.addf %87, %92 : vector<89x64xf32>
    %94 = vector.extract_strided_slice %7 {offsets = [211, 0], sizes = [89, 32], strides = [1, 1]} : vector<400x32xf32> to vector<89x32xf32>
    %95 = arith.truncf %94 : vector<89x32xf32> to vector<89x32xbf16>
    %96 = vector.extract_strided_slice %8 {offsets = [14, 0, 0], sizes = [1, 32, 64], strides = [1, 1, 1]} : vector<16x32x64xbf16> to vector<1x32x64xbf16>
    %97 = vector.shape_cast %96 : vector<1x32x64xbf16> to vector<32x64xbf16>
    %cst_24 = arith.constant dense<0.000000e+00> : vector<89x64xf32>
    %98 = tpu.matmul %95, %97, %cst_24 {dimension_numbers = #tpu.dot_dimension_numbers<[1], [0], [0], [1], [0, 0, 1, 1], [], []>} : vector<89x32xbf16>, vector<32x64xbf16>, vector<89x64xf32> -> vector<89x64xf32>
    %99 = arith.addf %93, %98 : vector<89x64xf32>
    %100 = vector.extract_strided_slice %7 {offsets = [311, 0], sizes = [89, 32], strides = [1, 1]} : vector<400x32xf32> to vector<89x32xf32>
    %101 = arith.truncf %100 : vector<89x32xf32> to vector<89x32xbf16>
    %102 = vector.extract_strided_slice %8 {offsets = [15, 0, 0], sizes = [1, 32, 64], strides = [1, 1, 1]} : vector<16x32x64xbf16> to vector<1x32x64xbf16>
    %103 = vector.shape_cast %102 : vector<1x32x64xbf16> to vector<32x64xbf16>
    %cst_25 = arith.constant dense<0.000000e+00> : vector<89x64xf32>
    %104 = tpu.matmul %101, %103, %cst_25 {dimension_numbers = #tpu.dot_dimension_numbers<[1], [0], [0], [1], [0, 0, 1, 1], [], []>} : vector<89x32xbf16>, vector<32x64xbf16>, vector<89x64xf32> -> vector<89x64xf32>
    %105 = arith.addf %99, %104 : vector<89x64xf32>
    %c0_26 = arith.constant 0 : index
    %c0_27 = arith.constant 0 : index
    %106 = vector.load %arg6[%c0_26, %c0_27] : memref<1x64xf32, #tpu.memory_space<vmem>>, vector<1x64xf32>
    %107 = vector.broadcast %106 : vector<1x64xf32> to vector<89x64xf32>
    %108 = arith.addf %105, %107 : vector<89x64xf32>
    %cst_28 = arith.constant 0.000000e+00 : f32
    %109 = vector.broadcast %cst_28 : f32 to vector<89x64xf32>
    %110 = arith.maximumf %108, %109 : vector<89x64xf32>
    %c0_29 = arith.constant 0 : index
    %c0_30 = arith.constant 0 : index
    %c0_31 = arith.constant 0 : index
    %111 = vector.load %arg7[%c0_29, %c0_30, %c0_31] : memref<9x64x64xbf16, #tpu.memory_space<vmem>>, vector<9x64x64xbf16>
    %cst_32 = arith.constant 0.000000e+00 : f32
    %112 = vector.broadcast %cst_32 : f32 to vector<67x64xf32>
    %113 = vector.extract_strided_slice %110 {offsets = [0, 0], sizes = [67, 64], strides = [1, 1]} : vector<89x64xf32> to vector<67x64xf32>
    %114 = arith.truncf %113 : vector<67x64xf32> to vector<67x64xbf16>
    %115 = vector.extract_strided_slice %111 {offsets = [0, 0, 0], sizes = [1, 64, 64], strides = [1, 1, 1]} : vector<9x64x64xbf16> to vector<1x64x64xbf16>
    %116 = vector.shape_cast %115 : vector<1x64x64xbf16> to vector<64x64xbf16>
    %cst_33 = arith.constant dense<0.000000e+00> : vector<67x64xf32>
    %117 = tpu.matmul %114, %116, %cst_33 {dimension_numbers = #tpu.dot_dimension_numbers<[1], [0], [0], [1], [0, 0, 1, 1], [], []>} : vector<67x64xbf16>, vector<64x64xbf16>, vector<67x64xf32> -> vector<67x64xf32>
    %118 = arith.addf %112, %117 : vector<67x64xf32>
    %119 = vector.extract_strided_slice %110 {offsets = [1, 0], sizes = [67, 64], strides = [1, 1]} : vector<89x64xf32> to vector<67x64xf32>
    %120 = arith.truncf %119 : vector<67x64xf32> to vector<67x64xbf16>
    %121 = vector.extract_strided_slice %111 {offsets = [1, 0, 0], sizes = [1, 64, 64], strides = [1, 1, 1]} : vector<9x64x64xbf16> to vector<1x64x64xbf16>
    %122 = vector.shape_cast %121 : vector<1x64x64xbf16> to vector<64x64xbf16>
    %cst_34 = arith.constant dense<0.000000e+00> : vector<67x64xf32>
    %123 = tpu.matmul %120, %122, %cst_34 {dimension_numbers = #tpu.dot_dimension_numbers<[1], [0], [0], [1], [0, 0, 1, 1], [], []>} : vector<67x64xbf16>, vector<64x64xbf16>, vector<67x64xf32> -> vector<67x64xf32>
    %124 = arith.addf %118, %123 : vector<67x64xf32>
    %125 = vector.extract_strided_slice %110 {offsets = [2, 0], sizes = [67, 64], strides = [1, 1]} : vector<89x64xf32> to vector<67x64xf32>
    %126 = arith.truncf %125 : vector<67x64xf32> to vector<67x64xbf16>
    %127 = vector.extract_strided_slice %111 {offsets = [2, 0, 0], sizes = [1, 64, 64], strides = [1, 1, 1]} : vector<9x64x64xbf16> to vector<1x64x64xbf16>
    %128 = vector.shape_cast %127 : vector<1x64x64xbf16> to vector<64x64xbf16>
    %cst_35 = arith.constant dense<0.000000e+00> : vector<67x64xf32>
    %129 = tpu.matmul %126, %128, %cst_35 {dimension_numbers = #tpu.dot_dimension_numbers<[1], [0], [0], [1], [0, 0, 1, 1], [], []>} : vector<67x64xbf16>, vector<64x64xbf16>, vector<67x64xf32> -> vector<67x64xf32>
    %130 = arith.addf %124, %129 : vector<67x64xf32>
    %131 = vector.extract_strided_slice %110 {offsets = [10, 0], sizes = [67, 64], strides = [1, 1]} : vector<89x64xf32> to vector<67x64xf32>
    %132 = arith.truncf %131 : vector<67x64xf32> to vector<67x64xbf16>
    %133 = vector.extract_strided_slice %111 {offsets = [3, 0, 0], sizes = [1, 64, 64], strides = [1, 1, 1]} : vector<9x64x64xbf16> to vector<1x64x64xbf16>
    %134 = vector.shape_cast %133 : vector<1x64x64xbf16> to vector<64x64xbf16>
    %cst_36 = arith.constant dense<0.000000e+00> : vector<67x64xf32>
    %135 = tpu.matmul %132, %134, %cst_36 {dimension_numbers = #tpu.dot_dimension_numbers<[1], [0], [0], [1], [0, 0, 1, 1], [], []>} : vector<67x64xbf16>, vector<64x64xbf16>, vector<67x64xf32> -> vector<67x64xf32>
    %136 = arith.addf %130, %135 : vector<67x64xf32>
    %137 = vector.extract_strided_slice %110 {offsets = [11, 0], sizes = [67, 64], strides = [1, 1]} : vector<89x64xf32> to vector<67x64xf32>
    %138 = arith.truncf %137 : vector<67x64xf32> to vector<67x64xbf16>
    %139 = vector.extract_strided_slice %111 {offsets = [4, 0, 0], sizes = [1, 64, 64], strides = [1, 1, 1]} : vector<9x64x64xbf16> to vector<1x64x64xbf16>
    %140 = vector.shape_cast %139 : vector<1x64x64xbf16> to vector<64x64xbf16>
    %cst_37 = arith.constant dense<0.000000e+00> : vector<67x64xf32>
    %141 = tpu.matmul %138, %140, %cst_37 {dimension_numbers = #tpu.dot_dimension_numbers<[1], [0], [0], [1], [0, 0, 1, 1], [], []>} : vector<67x64xbf16>, vector<64x64xbf16>, vector<67x64xf32> -> vector<67x64xf32>
    %142 = arith.addf %136, %141 : vector<67x64xf32>
    %143 = vector.extract_strided_slice %110 {offsets = [12, 0], sizes = [67, 64], strides = [1, 1]} : vector<89x64xf32> to vector<67x64xf32>
    %144 = arith.truncf %143 : vector<67x64xf32> to vector<67x64xbf16>
    %145 = vector.extract_strided_slice %111 {offsets = [5, 0, 0], sizes = [1, 64, 64], strides = [1, 1, 1]} : vector<9x64x64xbf16> to vector<1x64x64xbf16>
    %146 = vector.shape_cast %145 : vector<1x64x64xbf16> to vector<64x64xbf16>
    %cst_38 = arith.constant dense<0.000000e+00> : vector<67x64xf32>
    %147 = tpu.matmul %144, %146, %cst_38 {dimension_numbers = #tpu.dot_dimension_numbers<[1], [0], [0], [1], [0, 0, 1, 1], [], []>} : vector<67x64xbf16>, vector<64x64xbf16>, vector<67x64xf32> -> vector<67x64xf32>
    %148 = arith.addf %142, %147 : vector<67x64xf32>
    %149 = vector.extract_strided_slice %110 {offsets = [20, 0], sizes = [67, 64], strides = [1, 1]} : vector<89x64xf32> to vector<67x64xf32>
    %150 = arith.truncf %149 : vector<67x64xf32> to vector<67x64xbf16>
    %151 = vector.extract_strided_slice %111 {offsets = [6, 0, 0], sizes = [1, 64, 64], strides = [1, 1, 1]} : vector<9x64x64xbf16> to vector<1x64x64xbf16>
    %152 = vector.shape_cast %151 : vector<1x64x64xbf16> to vector<64x64xbf16>
    %cst_39 = arith.constant dense<0.000000e+00> : vector<67x64xf32>
    %153 = tpu.matmul %150, %152, %cst_39 {dimension_numbers = #tpu.dot_dimension_numbers<[1], [0], [0], [1], [0, 0, 1, 1], [], []>} : vector<67x64xbf16>, vector<64x64xbf16>, vector<67x64xf32> -> vector<67x64xf32>
    %154 = arith.addf %148, %153 : vector<67x64xf32>
    %155 = vector.extract_strided_slice %110 {offsets = [21, 0], sizes = [67, 64], strides = [1, 1]} : vector<89x64xf32> to vector<67x64xf32>
    %156 = arith.truncf %155 : vector<67x64xf32> to vector<67x64xbf16>
    %157 = vector.extract_strided_slice %111 {offsets = [7, 0, 0], sizes = [1, 64, 64], strides = [1, 1, 1]} : vector<9x64x64xbf16> to vector<1x64x64xbf16>
    %158 = vector.shape_cast %157 : vector<1x64x64xbf16> to vector<64x64xbf16>
    %cst_40 = arith.constant dense<0.000000e+00> : vector<67x64xf32>
    %159 = tpu.matmul %156, %158, %cst_40 {dimension_numbers = #tpu.dot_dimension_numbers<[1], [0], [0], [1], [0, 0, 1, 1], [], []>} : vector<67x64xbf16>, vector<64x64xbf16>, vector<67x64xf32> -> vector<67x64xf32>
    %160 = arith.addf %154, %159 : vector<67x64xf32>
    %161 = vector.extract_strided_slice %110 {offsets = [22, 0], sizes = [67, 64], strides = [1, 1]} : vector<89x64xf32> to vector<67x64xf32>
    %162 = arith.truncf %161 : vector<67x64xf32> to vector<67x64xbf16>
    %163 = vector.extract_strided_slice %111 {offsets = [8, 0, 0], sizes = [1, 64, 64], strides = [1, 1, 1]} : vector<9x64x64xbf16> to vector<1x64x64xbf16>
    %164 = vector.shape_cast %163 : vector<1x64x64xbf16> to vector<64x64xbf16>
    %cst_41 = arith.constant dense<0.000000e+00> : vector<67x64xf32>
    %165 = tpu.matmul %162, %164, %cst_41 {dimension_numbers = #tpu.dot_dimension_numbers<[1], [0], [0], [1], [0, 0, 1, 1], [], []>} : vector<67x64xbf16>, vector<64x64xbf16>, vector<67x64xf32> -> vector<67x64xf32>
    %166 = arith.addf %160, %165 : vector<67x64xf32>
    %c0_42 = arith.constant 0 : index
    %c0_43 = arith.constant 0 : index
    %167 = vector.load %arg8[%c0_42, %c0_43] : memref<1x64xf32, #tpu.memory_space<vmem>>, vector<1x64xf32>
    %168 = vector.broadcast %167 : vector<1x64xf32> to vector<67x64xf32>
    %169 = arith.addf %166, %168 : vector<67x64xf32>
    %cst_44 = arith.constant 0.000000e+00 : f32
    %170 = vector.broadcast %cst_44 : f32 to vector<67x64xf32>
    %171 = arith.maximumf %169, %170 : vector<67x64xf32>
    %172 = vector.extract_strided_slice %171 {offsets = [0, 0], sizes = [7, 64], strides = [1, 1]} : vector<67x64xf32> to vector<7x64xf32>
    %173 = vector.extract_strided_slice %171 {offsets = [10, 0], sizes = [7, 64], strides = [1, 1]} : vector<67x64xf32> to vector<7x64xf32>
    %174 = vector.extract_strided_slice %171 {offsets = [20, 0], sizes = [7, 64], strides = [1, 1]} : vector<67x64xf32> to vector<7x64xf32>
    %175 = vector.extract_strided_slice %171 {offsets = [30, 0], sizes = [7, 64], strides = [1, 1]} : vector<67x64xf32> to vector<7x64xf32>
    %176 = vector.extract_strided_slice %171 {offsets = [40, 0], sizes = [7, 64], strides = [1, 1]} : vector<67x64xf32> to vector<7x64xf32>
    %177 = vector.extract_strided_slice %171 {offsets = [50, 0], sizes = [7, 64], strides = [1, 1]} : vector<67x64xf32> to vector<7x64xf32>
    %178 = vector.extract_strided_slice %171 {offsets = [60, 0], sizes = [7, 64], strides = [1, 1]} : vector<67x64xf32> to vector<7x64xf32>
    %179 = tpu.concatenate %172, %173, %174, %175, %176, %177, %178 in 0 : vector<7x64xf32>, vector<7x64xf32>, vector<7x64xf32>, vector<7x64xf32>, vector<7x64xf32>, vector<7x64xf32>, vector<7x64xf32> -> vector<49x64xf32>
    %c0_45 = arith.constant 0 : index
    %c0_46 = arith.constant 0 : index
    %180 = vector.load %arg1[%c0_45, %c0_46] : memref<1x64xf32, #tpu.memory_space<vmem>>, vector<1x64xf32>
    %c0_47 = arith.constant 0 : index
    %c0_48 = arith.constant 0 : index
    %181 = vector.load %arg2[%c0_47, %c0_48] : memref<1x64xf32, #tpu.memory_space<vmem>>, vector<1x64xf32>
    %c0_49 = arith.constant 0 : index
    %c0_50 = arith.constant 0 : index
    %182 = vector.load %arg9[%c0_49, %c0_50] : memref<64x320xf32, #tpu.memory_space<vmem>>, vector<64x320xf32>
    %cst_51 = arith.constant dense<0.000000e+00> : vector<1x320xf32>
    %183 = tpu.matmul %180, %182, %cst_51 {dimension_numbers = #tpu.dot_dimension_numbers<[1], [0], [0], [1], [0, 0, 1, 1], [], []>} : vector<1x64xf32>, vector<64x320xf32>, vector<1x320xf32> -> vector<1x320xf32>
    %184 = vector.extract_strided_slice %183 {offsets = [0, 0], sizes = [1, 64], strides = [1, 1]} : vector<1x320xf32> to vector<1x64xf32>
    %c0_52 = arith.constant 0 : index
    %c0_53 = arith.constant 0 : index
    %185 = vector.load %arg10[%c0_52, %c0_53] : memref<1x64xf32, #tpu.memory_space<vmem>>, vector<1x64xf32>
    %186 = arith.addf %184, %185 : vector<1x64xf32>
    %187 = vector.extract_strided_slice %183 {offsets = [0, 64], sizes = [1, 256], strides = [1, 1]} : vector<1x320xf32> to vector<1x256xf32>
    %c0_54 = arith.constant 0 : index
    %c0_55 = arith.constant 0 : index
    %188 = vector.load %arg11[%c0_54, %c0_55] : memref<1x256xf32, #tpu.memory_space<vmem>>, vector<1x256xf32>
    %189 = arith.addf %187, %188 : vector<1x256xf32>
    %c0_56 = arith.constant 0 : index
    %c0_57 = arith.constant 0 : index
    %190 = vector.load %arg12[%c0_56, %c0_57] : memref<64x64xf32, #tpu.memory_space<vmem>>, vector<64x64xf32>
    %cst_58 = arith.constant dense<0.000000e+00> : vector<49x64xf32>
    %191 = tpu.matmul %179, %190, %cst_58 {dimension_numbers = #tpu.dot_dimension_numbers<[1], [0], [0], [1], [0, 0, 1, 1], [], []>} : vector<49x64xf32>, vector<64x64xf32>, vector<49x64xf32> -> vector<49x64xf32>
    %c0_59 = arith.constant 0 : index
    %c0_60 = arith.constant 0 : index
    %192 = vector.load %arg13[%c0_59, %c0_60] : memref<1x64xf32, #tpu.memory_space<vmem>>, vector<1x64xf32>
    %193 = vector.broadcast %192 : vector<1x64xf32> to vector<49x64xf32>
    %194 = arith.addf %191, %193 : vector<49x64xf32>
    %195 = vector.broadcast %186 : vector<1x64xf32> to vector<49x64xf32>
    %196 = arith.addf %194, %195 : vector<49x64xf32>
    %197 = math.tanh %196 : vector<49x64xf32>
    %c0_61 = arith.constant 0 : index
    %c0_62 = arith.constant 0 : index
    %198 = vector.load %arg14[%c0_61, %c0_62] : memref<64x64xf32, #tpu.memory_space<vmem>>, vector<64x64xf32>
    %cst_63 = arith.constant dense<0.000000e+00> : vector<49x64xf32>
    %199 = tpu.matmul %197, %198, %cst_63 {dimension_numbers = #tpu.dot_dimension_numbers<[1], [0], [0], [1], [0, 0, 1, 1], [], []>} : vector<49x64xf32>, vector<64x64xf32>, vector<49x64xf32> -> vector<49x64xf32>
    %c0_64 = arith.constant 0 : index
    %c0_65 = arith.constant 0 : index
    %200 = vector.load %arg15[%c0_64, %c0_65] : memref<1x64xf32, #tpu.memory_space<vmem>>, vector<1x64xf32>
    %201 = vector.broadcast %200 : vector<1x64xf32> to vector<49x64xf32>
    %202 = arith.addf %199, %201 : vector<49x64xf32>
    %cst_66 = arith.constant dense<0xFF800000> : vector<49xf32>
    %203 = vector.multi_reduction <maximumf>, %202, %cst_66 [1] : vector<49x64xf32> to vector<49xf32>
    %204 = vector.shape_cast %203 : vector<49xf32> to vector<49x1xf32>
    %205 = vector.broadcast %204 : vector<49x1xf32> to vector<49x64xf32>
    %206 = arith.subf %202, %205 : vector<49x64xf32>
    %207 = math.exp %206 : vector<49x64xf32>
    %cst_67 = arith.constant dense<0.000000e+00> : vector<49xf32>
    %208 = vector.multi_reduction <add>, %207, %cst_67 [1] : vector<49x64xf32> to vector<49xf32>
    %209 = vector.shape_cast %208 : vector<49xf32> to vector<49x1xf32>
    %210 = vector.broadcast %209 : vector<49x1xf32> to vector<49x64xf32>
    %211 = arith.divf %207, %210 : vector<49x64xf32>
    %212 = arith.mulf %211, %194 : vector<49x64xf32>
    %cst_68 = arith.constant 1.000000e+00 : f32
    %213 = vector.broadcast %cst_68 : f32 to vector<1x49xf32>
    %cst_69 = arith.constant dense<0.000000e+00> : vector<1x64xf32>
    %214 = tpu.matmul %213, %212, %cst_69 {dimension_numbers = #tpu.dot_dimension_numbers<[1], [0], [0], [1], [0, 0, 1, 1], [], []>} : vector<1x49xf32>, vector<49x64xf32>, vector<1x64xf32> -> vector<1x64xf32>
    %c0_70 = arith.constant 0 : index
    %c0_71 = arith.constant 0 : index
    %215 = vector.load %arg16[%c0_70, %c0_71] : memref<64x256xf32, #tpu.memory_space<vmem>>, vector<64x256xf32>
    %cst_72 = arith.constant dense<0.000000e+00> : vector<1x256xf32>
    %216 = tpu.matmul %214, %215, %cst_72 {dimension_numbers = #tpu.dot_dimension_numbers<[1], [0], [0], [1], [0, 0, 1, 1], [], []>} : vector<1x64xf32>, vector<64x256xf32>, vector<1x256xf32> -> vector<1x256xf32>
    %c0_73 = arith.constant 0 : index
    %c0_74 = arith.constant 0 : index
    %217 = vector.load %arg17[%c0_73, %c0_74] : memref<1x256xf32, #tpu.memory_space<vmem>>, vector<1x256xf32>
    %218 = arith.addf %216, %217 : vector<1x256xf32>
    %219 = arith.addf %218, %189 : vector<1x256xf32>
    %220 = vector.extract_strided_slice %219 {offsets = [0, 0], sizes = [1, 64], strides = [1, 1]} : vector<1x256xf32> to vector<1x64xf32>
    %221 = arith.negf %220 : vector<1x64xf32>
    %222 = math.exp %221 : vector<1x64xf32>
    %cst_75 = arith.constant 1.000000e+00 : f32
    %223 = vector.broadcast %cst_75 : f32 to vector<1x64xf32>
    %224 = arith.addf %223, %222 : vector<1x64xf32>
    %225 = arith.divf %223, %224 : vector<1x64xf32>
    %226 = vector.extract_strided_slice %219 {offsets = [0, 64], sizes = [1, 64], strides = [1, 1]} : vector<1x256xf32> to vector<1x64xf32>
    %227 = arith.negf %226 : vector<1x64xf32>
    %228 = math.exp %227 : vector<1x64xf32>
    %cst_76 = arith.constant 1.000000e+00 : f32
    %229 = vector.broadcast %cst_76 : f32 to vector<1x64xf32>
    %230 = arith.addf %229, %228 : vector<1x64xf32>
    %231 = arith.divf %229, %230 : vector<1x64xf32>
    %232 = vector.extract_strided_slice %219 {offsets = [0, 128], sizes = [1, 64], strides = [1, 1]} : vector<1x256xf32> to vector<1x64xf32>
    %233 = math.tanh %232 : vector<1x64xf32>
    %234 = vector.extract_strided_slice %219 {offsets = [0, 192], sizes = [1, 64], strides = [1, 1]} : vector<1x256xf32> to vector<1x64xf32>
    %235 = arith.negf %234 : vector<1x64xf32>
    %236 = math.exp %235 : vector<1x64xf32>
    %cst_77 = arith.constant 1.000000e+00 : f32
    %237 = vector.broadcast %cst_77 : f32 to vector<1x64xf32>
    %238 = arith.addf %237, %236 : vector<1x64xf32>
    %239 = arith.divf %237, %238 : vector<1x64xf32>
    %240 = arith.mulf %231, %181 : vector<1x64xf32>
    %241 = arith.mulf %225, %233 : vector<1x64xf32>
    %242 = arith.addf %240, %241 : vector<1x64xf32>
    %243 = math.tanh %242 : vector<1x64xf32>
    %244 = arith.mulf %239, %243 : vector<1x64xf32>
    %c0_78 = arith.constant 0 : index
    %c0_79 = arith.constant 0 : index
    %245 = vector.load %arg18[%c0_78, %c0_79] : memref<64x5xf32, #tpu.memory_space<vmem>>, vector<64x5xf32>
    %cst_80 = arith.constant dense<0.000000e+00> : vector<1x5xf32>
    %246 = tpu.matmul %244, %245, %cst_80 {dimension_numbers = #tpu.dot_dimension_numbers<[1], [0], [0], [1], [0, 0, 1, 1], [], []>} : vector<1x64xf32>, vector<64x5xf32>, vector<1x5xf32> -> vector<1x5xf32>
    %c0_81 = arith.constant 0 : index
    %c0_82 = arith.constant 0 : index
    %247 = vector.load %arg19[%c0_81, %c0_82] : memref<1x5xf32, #tpu.memory_space<vmem>>, vector<1x5xf32>
    %248 = arith.addf %246, %247 : vector<1x5xf32>
    %c0_83 = arith.constant 0 : index
    %c0_84 = arith.constant 0 : index
    %249 = vector.load %arg20[%c0_83, %c0_84] : memref<1x5xf32, #tpu.memory_space<vmem>>, vector<1x5xf32>
    tpu.vector_store %arg20[%c0_83, %c0_84], %248 {strides = array<i32>} : memref<1x5xf32, #tpu.memory_space<vmem>>, vector<1x5xf32>,
    %c0_85 = arith.constant 0 : index
    %c0_86 = arith.constant 0 : index
    %250 = vector.load %arg21[%c0_85, %c0_86] : memref<1x64xf32, #tpu.memory_space<vmem>>, vector<1x64xf32>
    tpu.vector_store %arg21[%c0_85, %c0_86], %244 {strides = array<i32>} : memref<1x64xf32, #tpu.memory_space<vmem>>, vector<1x64xf32>,
    %c0_87 = arith.constant 0 : index
    %c0_88 = arith.constant 0 : index
    %251 = vector.load %arg22[%c0_87, %c0_88] : memref<1x64xf32, #tpu.memory_space<vmem>>, vector<1x64xf32>
    tpu.vector_store %arg22[%c0_87, %c0_88], %242 {strides = array<i32>} : memref<1x64xf32, #tpu.memory_space<vmem>>, vector<1x64xf32>,
    return
  }
}

</mosaic_0001>

<llo_original>
// kernel: qnet_darqn_forward.1
$region0: #{qnet_darqn_forward.1}
  #allocation0 [shape = 'u32[]', space=smem, size = 0x4, offset = 0x4, fixed_abs, tag = 'smem constant byte address 0x4 - core index']
  #allocation1 [shape = 'u32[144,128]{1,0:T(1,128)}', space=vmem, size = 0x12000, scoped, tag = 'internal scratch']
  %s0 = inlined_call_operand.vmem [shape: bf16[400,64], index: 0, kind: input, shape index: {}]
  %s1 = inlined_call_operand.vmem [shape: f32[1,64], index: 1, kind: input, shape index: {}]
  %s2 = inlined_call_operand.vmem [shape: f32[1,64], index: 2, kind: input, shape index: {}]
  %s3 = inlined_call_operand.vmem [shape: bf16[64,32], index: 3, kind: input, shape index: {}]
  %s4 = inlined_call_operand.vmem [shape: f32[1,32], index: 4, kind: input, shape index: {}]
  %s5 = inlined_call_operand.vmem [shape: bf16[16,32,64], index: 5, kind: input, shape index: {}]
  %s6 = inlined_call_operand.vmem [shape: f32[1,64], index: 6, kind: input, shape index: {}]
  %s7 = inlined_call_operand.vmem [shape: bf16[9,64,64], index: 7, kind: input, shape index: {}]
  %s8 = inlined_call_operand.vmem [shape: f32[1,64], index: 8, kind: input, shape index: {}]
  %s9 = inlined_call_operand.vmem [shape: f32[64,320], index: 9, kind: input, shape index: {}]
  %s10 = inlined_call_operand.vmem [shape: f32[1,64], index: 10, kind: input, shape index: {}]
  %s11 = inlined_call_operand.vmem [shape: f32[1,256], index: 11, kind: input, shape index: {}]
  %s12 = inlined_call_operand.vmem [shape: f32[64,64], index: 12, kind: input, shape index: {}]
  %s13 = inlined_call_operand.vmem [shape: f32[1,64], index: 13, kind: input, shape index: {}]
  %s14 = inlined_call_operand.vmem [shape: f32[64,64], index: 14, kind: input, shape index: {}]
  %s15 = inlined_call_operand.vmem [shape: f32[1,64], index: 15, kind: input, shape index: {}]
  %s16 = inlined_call_operand.vmem [shape: f32[64,256], index: 16, kind: input, shape index: {}]
  %s17 = inlined_call_operand.vmem [shape: f32[1,256], index: 17, kind: input, shape index: {}]
  %s18 = inlined_call_operand.vmem [shape: f32[64,5], index: 18, kind: input, shape index: {}]
  %s19 = inlined_call_operand.vmem [shape: f32[1,5], index: 19, kind: input, shape index: {}]
  %s20 = inlined_call_operand.hbm [shape: f32[1,5], index: 20, kind: output, shape index: {0}]
  %s21 = inlined_call_operand.hbm [shape: f32[1,64], index: 21, kind: output, shape index: {1}]
  %s22 = inlined_call_operand.hbm [shape: f32[1,64], index: 22, kind: output, shape index: {2}]
  %23 = xla_tuple %s20, %s21, %s22
  %s24 = sld [smem:[#allocation0]]
  $region106: #{qnet_darqn_forward.1} parent=0
    _
  %s26 = ssub.s32 1, %s24
  %s27 = scalar_select 0, %s26, %s24
  $region1: #{qnet_darqn_forward.1} parent=0
    #allocation2 [shape = 'u8[512]{0}', space=vmem, size = 0x400, scoped, tag = 'output window, operand 0, single buffered']
    #allocation3 [shape = 's32[1]{0}', space=sflag, size = 0x4, scoped, tag = 'scoped memory for qnet_darqn_forward.1']
    #allocation4 [shape = 'u8[512]{0}', space=vmem, size = 0x400, scoped, tag = 'output window, operand 1, single buffered']
    #allocation5 [shape = 's32[1]{0}', space=sflag, size = 0x4, scoped, tag = 'scoped memory for qnet_darqn_forward.1']
    #allocation6 [shape = 'u8[512]{0}', space=vmem, size = 0x400, scoped, tag = 'output window, operand 2, single buffered']
    %28 = vsyncpa [#allocation3], 0
    %29 = vsyncpa [#allocation5], 0
    // Predicated region
    $region2: #{qnet_darqn_forward.1} parent=1 // pred_check
      _
    $region3: #{qnet_darqn_forward.1} parent=1 // pred_check_branch
      %31 = sbr.rel (0) target = $region5
    $region4: #{qnet_darqn_forward.1} parent=1 // pred_region
      _
    $region5: #{qnet_darqn_forward.1} parent=1 // pred_fallthru
      _
    // Predicated region
    $region6: #{qnet_darqn_forward.1} parent=1 // pred_check
      _
    $region7: #{qnet_darqn_forward.1} parent=1 // pred_check_branch
      %33 = sbr.rel (0) target = $region9
    $region8: #{qnet_darqn_forward.1} parent=1 // pred_region
      _
    $region9: #{qnet_darqn_forward.1} parent=1 // pred_fallthru
      _
    // Predicated region
    $region10: #{qnet_darqn_forward.1} parent=1 // pred_check
      _
    $region11: #{qnet_darqn_forward.1} parent=1 // pred_check_branch
      %35 = sbr.rel (0) target = $region13
    $region12: #{qnet_darqn_forward.1} parent=1 // pred_region
      _
    $region13: #{qnet_darqn_forward.1} parent=1 // pred_fallthru
      _
    // Predicated region
    $region14: #{qnet_darqn_forward.1} parent=1 // pred_check
      _
    $region15: #{qnet_darqn_forward.1} parent=1 // pred_check_branch
      %37 = sbr.rel (0) target = $region17
    $region16: #{qnet_darqn_forward.1} parent=1 // pred_region
      _
    $region17: #{qnet_darqn_forward.1} parent=1 // pred_fallthru
      _
    // Predicated region
    $region18: #{qnet_darqn_forward.1} parent=1 // pred_check
      _
    $region19: #{qnet_darqn_forward.1} parent=1 // pred_check_branch
      %39 = sbr.rel (0) target = $region21
    $region20: #{qnet_darqn_forward.1} parent=1 // pred_region
      _
    $region21: #{qnet_darqn_forward.1} parent=1 // pred_fallthru
      _
    // Predicated region
    $region22: #{qnet_darqn_forward.1} parent=1 // pred_check
      _
    $region23: #{qnet_darqn_forward.1} parent=1 // pred_check_branch
      %41 = sbr.rel (0) target = $region25
    $region24: #{qnet_darqn_forward.1} parent=1 // pred_region
      _
    $region25: #{qnet_darqn_forward.1} parent=1 // pred_fallthru
      _
    // Predicated region
    $region26: #{qnet_darqn_forward.1} parent=1 // pred_check
      _
    $region27: #{qnet_darqn_forward.1} parent=1 // pred_check_branch
      %43 = sbr.rel (0) target = $region29
    $region28: #{qnet_darqn_forward.1} parent=1 // pred_region
      _
    $region29: #{qnet_darqn_forward.1} parent=1 // pred_fallthru
      _
    // Predicated region
    $region30: #{qnet_darqn_forward.1} parent=1 // pred_check
      _
    $region31: #{qnet_darqn_forward.1} parent=1 // pred_check_branch
      %45 = sbr.rel (0) target = $region33
    $region32: #{qnet_darqn_forward.1} parent=1 // pred_region
      _
    $region33: #{qnet_darqn_forward.1} parent=1 // pred_fallthru
      _
    // Predicated region
    $region34: #{qnet_darqn_forward.1} parent=1 // pred_check
      _
    $region35: #{qnet_darqn_forward.1} parent=1 // pred_check_branch
      %47 = sbr.rel (0) target = $region37
    $region36: #{qnet_darqn_forward.1} parent=1 // pred_region
      _
    $region37: #{qnet_darqn_forward.1} parent=1 // pred_fallthru
      _
    // Predicated region
    $region38: #{qnet_darqn_forward.1} parent=1 // pred_check
      _
    $region39: #{qnet_darqn_forward.1} parent=1 // pred_check_branch
      %49 = sbr.rel (0) target = $region41
    $region40: #{qnet_darqn_forward.1} parent=1 // pred_region
      _
    $region41: #{qnet_darqn_forward.1} parent=1 // pred_fallthru
      _
    // Predicated region
    $region42: #{qnet_darqn_forward.1} parent=1 // pred_check
      _
    $region43: #{qnet_darqn_forward.1} parent=1 // pred_check_branch
      %51 = sbr.rel (0) target = $region45
    $region44: #{qnet_darqn_forward.1} parent=1 // pred_region
      _
    $region45: #{qnet_darqn_forward.1} parent=1 // pred_fallthru
      _
    // Predicated region
    $region46: #{qnet_darqn_forward.1} parent=1 // pred_check
      _
    $region47: #{qnet_darqn_forward.1} parent=1 // pred_check_branch
      %53 = sbr.rel (0) target = $region49
    $region48: #{qnet_darqn_forward.1} parent=1 // pred_region
      _
    $region49: #{qnet_darqn_forward.1} parent=1 // pred_fallthru
      _
    // Predicated region
    $region50: #{qnet_darqn_forward.1} parent=1 // pred_check
      _
    $region51: #{qnet_darqn_forward.1} parent=1 // pred_check_branch
      %55 = sbr.rel (0) target = $region53
    $region52: #{qnet_darqn_forward.1} parent=1 // pred_region
      _
    $region53: #{qnet_darqn_forward.1} parent=1 // pred_fallthru
      _
    // Predicated region
    $region54: #{qnet_darqn_forward.1} parent=1 // pred_check
      _
    $region55: #{qnet_darqn_forward.1} parent=1 // pred_check_branch
      %57 = sbr.rel (0) target = $region57
    $region56: #{qnet_darqn_forward.1} parent=1 // pred_region
      _
    $region57: #{qnet_darqn_forward.1} parent=1 // pred_fallthru
      _
    // Predicated region
    $region58: #{qnet_darqn_forward.1} parent=1 // pred_check
      _
    $region59: #{qnet_darqn_forward.1} parent=1 // pred_check_branch
      %59 = sbr.rel (0) target = $region61
    $region60: #{qnet_darqn_forward.1} parent=1 // pred_region
      _
    $region61: #{qnet_darqn_forward.1} parent=1 // pred_fallthru
      _
    // Predicated region
    $region62: #{qnet_darqn_forward.1} parent=1 // pred_check
      _
    $region63: #{qnet_darqn_forward.1} parent=1 // pred_check_branch
      %61 = sbr.rel (0) target = $region65
    $region64: #{qnet_darqn_forward.1} parent=1 // pred_region
      _
    $region65: #{qnet_darqn_forward.1} parent=1 // pred_fallthru
      _
    // Predicated region
    $region66: #{qnet_darqn_forward.1} parent=1 // pred_check
      _
    $region67: #{qnet_darqn_forward.1} parent=1 // pred_check_branch
      %63 = sbr.rel (0) target = $region69
    $region68: #{qnet_darqn_forward.1} parent=1 // pred_region
      _
    $region69: #{qnet_darqn_forward.1} parent=1 // pred_fallthru
      _
    // Predicated region
    $region70: #{qnet_darqn_forward.1} parent=1 // pred_check
      _
    $region71: #{qnet_darqn_forward.1} parent=1 // pred_check_branch
      %65 = sbr.rel (0) target = $region73
    $region72: #{qnet_darqn_forward.1} parent=1 // pred_region
      _
    $region73: #{qnet_darqn_forward.1} parent=1 // pred_fallthru
      _
    // Predicated region
    $region74: #{qnet_darqn_forward.1} parent=1 // pred_check
      _
    $region75: #{qnet_darqn_forward.1} parent=1 // pred_check_branch
      %67 = sbr.rel (0) target = $region77
    $region76: #{qnet_darqn_forward.1} parent=1 // pred_region
      _
    $region77: #{qnet_darqn_forward.1} parent=1 // pred_fallthru
      _
    // Predicated region
    $region78: #{qnet_darqn_forward.1} parent=1 // pred_check
      _
    $region79: #{qnet_darqn_forward.1} parent=1 // pred_check_branch
      %69 = sbr.rel (0) target = $region81
    $region80: #{qnet_darqn_forward.1} parent=1 // pred_region
      _
    $region81: #{qnet_darqn_forward.1} parent=1 // pred_fallthru
      _
    %v71 = vld [vmem:[%s0] sm:$0xf]
    %v72 = vld [vmem:[%s0 + $0x4] sm:$0xf]
    %v73 = vld [vmem:[%s0 + $0x8] sm:$0xf]
    %v74 = vld [vmem:[%s0 + $0xc] sm:$0xf]
    %v75 = vld [vmem:[%s0 + $0x10] sm:$0xf]
    %v76 = vld [vmem:[%s0 + $0x14] sm:$0xf]
    %v77 = vld [vmem:[%s0 + $0x18] sm:$0xf]
    %v78 = vld [vmem:[%s0 + $0x1c] sm:$0xf]
    %v79 = vld [vmem:[%s0 + $0x20] sm:$0xf]
    %v80 = vld [vmem:[%s0 + $0x24] sm:$0xf]
    %v81 = vld [vmem:[%s0 + $0x28] sm:$0xf]
    %v82 = vld [vmem:[%s0 + $0x2c] sm:$0xf]
    %v83 = vld [vmem:[%s0 + $0x30] sm:$0xf]
    %v84 = vld [vmem:[%s0 + $0x34] sm:$0xf]
    %v85 = vld [vmem:[%s0 + $0x38] sm:$0xf]
    %v86 = vld [vmem:[%s0 + $0x3c] sm:$0xf]
    %v87 = vld [vmem:[%s0 + $0x40] sm:$0xf]
    %v88 = vld [vmem:[%s0 + $0x44] sm:$0xf]
    %v89 = vld [vmem:[%s0 + $0x48] sm:$0xf]
    %v90 = vld [vmem:[%s0 + $0x4c] sm:$0xf]
    %v91 = vld [vmem:[%s0 + $0x50] sm:$0xf]
    %v92 = vld [vmem:[%s0 + $0x54] sm:$0xf]
    %v93 = vld [vmem:[%s0 + $0x58] sm:$0xf]
    %v94 = vld [vmem:[%s0 + $0x5c] sm:$0xf]
    %v95 = vld [vmem:[%s0 + $0x60] sm:$0xf]
    %v96 = vld [vmem:[%s0 + $0x64] sm:$0xf]
    %v97 = vld [vmem:[%s0 + $0x68] sm:$0xf]
    %v98 = vld [vmem:[%s0 + $0x6c] sm:$0xf]
    %v99 = vld [vmem:[%s0 + $0x70] sm:$0xf]
    %v100 = vld [vmem:[%s0 + $0x74] sm:$0xf]
    %v101 = vld [vmem:[%s0 + $0x78] sm:$0xf]
    %v102 = vld [vmem:[%s0 + $0x7c] sm:$0xf]
    %v103 = vld [vmem:[%s0 + $0x80] sm:$0xf]
    %v104 = vld [vmem:[%s0 + $0x84] sm:$0xf]
    %v105 = vld [vmem:[%s0 + $0x88] sm:$0xf]
    %v106 = vld [vmem:[%s0 + $0x8c] sm:$0xf]
    %v107 = vld [vmem:[%s0 + $0x90] sm:$0xf]
    %v108 = vld [vmem:[%s0 + $0x94] sm:$0xf]
    %v109 = vld [vmem:[%s0 + $0x98] sm:$0xf]
    %v110 = vld [vmem:[%s0 + $0x9c] sm:$0xf]
    %v111 = vld [vmem:[%s0 + $0xa0] sm:$0xf]
    %v112 = vld [vmem:[%s0 + $0xa4] sm:$0xf]
    %v113 = vld [vmem:[%s0 + $0xa8] sm:$0xf]
    %v114 = vld [vmem:[%s0 + $0xac] sm:$0xf]
    %v115 = vld [vmem:[%s0 + $0xb0] sm:$0xf]
    %v116 = vld [vmem:[%s0 + $0xb4] sm:$0xf]
    %v117 = vld [vmem:[%s0 + $0xb8] sm:$0xf]
    %v118 = vld [vmem:[%s0 + $0xbc] sm:$0xf]
    %v119 = vld [vmem:[%s0 + $0xc0] sm:$0xf]
    %v120 = vld [vmem:[%s0 + $0xc4] sm:$0xf]
    %v121 = vld [vmem:[%s3] sm:$0xf]
    %v122 = vld [vmem:[%s3 + $0x4] sm:$0xf]
    %v123 = vld [vmem:[%s3 + $0x8] sm:$0xf]
    %v124 = vld [vmem:[%s3 + $0xc] sm:$0xf]
    %v125 = vld [vmem:[%s3 + $0x10] sm:$0xf]
    %v126 = vld [vmem:[%s3 + $0x14] sm:$0xf]
    %v127 = vld [vmem:[%s3 + $0x18] sm:$0xf]
    %v128 = vld [vmem:[%s3 + $0x1c] sm:$0xf]
    %v129 = vld [vmem:[%s4] sm:$0x1]
    %v131 = vlaneseq
    %v132 = vshrl.u32 %v131, 7
    %v133 = vsub.s32 0, %v132
    %v134 = vrot.slane %v129, %v133
    %v186 = vunpack.c.l.b16 %v71
    %v187 = vunpack.c.l.b16 %v72
    %v188 = vunpack.c.l.b16 %v73
    %v189 = vunpack.c.l.b16 %v74
    %v190 = vunpack.c.l.b16 %v75
    %v191 = vunpack.c.l.b16 %v76
    %v192 = vunpack.c.l.b16 %v77
    %v193 = vunpack.c.l.b16 %v78
    %v194 = vunpack.c.l.b16 %v79
    %v195 = vunpack.c.l.b16 %v80
    %v196 = vunpack.c.l.b16 %v81
    %v197 = vunpack.c.l.b16 %v82
    %v198 = vunpack.c.l.b16 %v83
    %v199 = vunpack.c.l.b16 %v84
    %v200 = vunpack.c.l.b16 %v85
    %v201 = vunpack.c.l.b16 %v86
    %v202 = vunpack.c.l.b16 %v87
    %v203 = vunpack.c.l.b16 %v88
    %v204 = vunpack.c.l.b16 %v89
    %v205 = vunpack.c.l.b16 %v90
    %v206 = vunpack.c.l.b16 %v91
    %v207 = vunpack.c.l.b16 %v92
    %v208 = vunpack.c.l.b16 %v93
    %v209 = vunpack.c.l.b16 %v94
    %v210 = vunpack.c.l.b16 %v95
    %v211 = vunpack.c.l.b16 %v96
    %v212 = vunpack.c.l.b16 %v97
    %v213 = vunpack.c.l.b16 %v98
    %v214 = vunpack.c.l.b16 %v99
    %v215 = vunpack.c.l.b16 %v100
    %v216 = vunpack.c.l.b16 %v101
    %v217 = vunpack.c.l.b16 %v102
    %v218 = vunpack.c.l.b16 %v103
    %v219 = vunpack.c.l.b16 %v104
    %v220 = vunpack.c.l.b16 %v105
    %v221 = vunpack.c.l.b16 %v106
    %v222 = vunpack.c.l.b16 %v107
    %v223 = vunpack.c.l.b16 %v108
    %v224 = vunpack.c.l.b16 %v109
    %v225 = vunpack.c.l.b16 %v110
    %v226 = vunpack.c.l.b16 %v111
    %v227 = vunpack.c.l.b16 %v112
    %v228 = vunpack.c.l.b16 %v113
    %v229 = vunpack.c.l.b16 %v114
    %v230 = vunpack.c.l.b16 %v115
    %v231 = vunpack.c.l.b16 %v116
    %v232 = vunpack.c.l.b16 %v117
    %v233 = vunpack.c.l.b16 %v118
    %v234 = vunpack.c.l.b16 %v119
    %v235 = vunpack.c.l.b16 %v120
    %v236 = vpack.c.b16 %v187, %v186
    %v237 = vpack.c.b16 %v189, %v188
    %v238 = vpack.c.b16 %v191, %v190
    %v239 = vpack.c.b16 %v193, %v192
    %v240 = vpack.c.b16 %v195, %v194
    %v241 = vpack.c.b16 %v197, %v196
    %v242 = vpack.c.b16 %v199, %v198
    %v243 = vpack.c.b16 %v201, %v200
    %v244 = vpack.c.b16 %v203, %v202
    %v245 = vpack.c.b16 %v205, %v204
    %v246 = vpack.c.b16 %v207, %v206
    %v247 = vpack.c.b16 %v209, %v208
    %v248 = vpack.c.b16 %v211, %v210
    %v249 = vpack.c.b16 %v213, %v212
    %v250 = vpack.c.b16 %v215, %v214
    %v251 = vpack.c.b16 %v217, %v216
    %v252 = vpack.c.b16 %v219, %v218
    %v253 = vpack.c.b16 %v221, %v220
    %v254 = vpack.c.b16 %v223, %v222
    %v255 = vpack.c.b16 %v225, %v224
    %v256 = vpack.c.b16 %v227, %v226
    %v257 = vpack.c.b16 %v229, %v228
    %v258 = vpack.c.b16 %v231, %v230
    %v259 = vpack.c.b16 %v233, %v232
    %v260 = vpack.c.b16 %v235, %v234
    %v269 = vunpack.c.l.b16 %v121
    %v270 = vunpack.c.l.b16 %v122
    %v271 = vunpack.c.l.b16 %v123
    %v272 = vunpack.c.l.b16 %v124
    %v273 = vunpack.c.l.b16 %v125
    %v274 = vunpack.c.l.b16 %v126
    %v275 = vunpack.c.l.b16 %v127
    %v276 = vunpack.c.l.b16 %v128
    %v277 = vpack.c.b16 %v270, %v269
    %v278 = vpack.c.b16 %v272, %v271
    %v279 = vpack.c.b16 %v274, %v273
    %v280 = vpack.c.b16 %v276, %v275
    %vm285 = vcmask 523264
    %v287 = vsel %vm285, %v236, 0
    %v290 = vsel %vm285, %v237, 0
    %v293 = vsel %vm285, %v238, 0
    %v296 = vsel %vm285, %v239, 0
    %v299 = vsel %vm285, %v240, 0
    %v302 = vsel %vm285, %v241, 0
    %v305 = vsel %vm285, %v242, 0
    %v308 = vsel %vm285, %v243, 0
    %v311 = vsel %vm285, %v244, 0
    %v314 = vsel %vm285, %v245, 0
    %v317 = vsel %vm285, %v246, 0
    %v320 = vsel %vm285, %v247, 0
    %v323 = vsel %vm285, %v248, 0
    %v326 = vsel %vm285, %v249, 0
    %v329 = vsel %vm285, %v250, 0
    %v332 = vsel %vm285, %v251, 0
    %v335 = vsel %vm285, %v252, 0
    %v338 = vsel %vm285, %v253, 0
    %v341 = vsel %vm285, %v254, 0
    %v344 = vsel %vm285, %v255, 0
    %v347 = vsel %vm285, %v256, 0
    %v350 = vsel %vm285, %v257, 0
    %v353 = vsel %vm285, %v258, 0
    %v356 = vsel %vm285, %v259, 0
    %v359 = vsel %vm285, %v260, 0
    %361 = vmatprep.subr.bf16.mxu0 0
    %362 = vmatpush1.bf16.msra.mxu0 0
    %363 = vmatprep.subr.bf16.mxu0 0
    %364 = vmatpush1.bf16.msra.mxu0 0
    %365 = vmatprep.subr.bf16.mxu0 0
    %366 = vmatpush1.bf16.msra.mxu0 0
    %367 = vmatprep.subr.bf16.mxu0 0
    %368 = vmatpush1.bf16.msra.mxu0 0
    %369 = vmatprep.subr.bf16.mxu0 0
    %370 = vmatpush1.bf16.msra.mxu0 %v280
    %371 = vmatprep.subr.bf16.mxu0 0
    %372 = vmatpush1.bf16.msra.mxu0 %v279
    %373 = vmatprep.subr.bf16.mxu0 0
    %374 = vmatpush1.bf16.msra.mxu0 %v278
    %375 = vmatprep.subr.bf16.mxu0 0
    %376 = vmatpush1.bf16.msra.mxu0 %v277
    %377 = vmatprep.subr.bf16.mxu0 0
    %378 = vmatpush2.bf16.msra.mxu0 0
    %379 = vmatprep.subr.bf16.mxu0 0
    %380 = vmatpush2.bf16.msra.mxu0 0
    %381 = vmatprep.subr.bf16.mxu0 0
    %382 = vmatpush2.bf16.msra.mxu0 0
    %383 = vmatprep.subr.bf16.mxu0 0
    %384 = vmatpush2.bf16.msra.mxu0 0
    %385 = vmatprep.subr.bf16.mxu0 0
    %386 = vmatpush2.bf16.msra.mxu0 0
    %387 = vmatprep.subr.bf16.mxu0 0
    %388 = vmatpush2.bf16.msra.mxu0 0
    %389 = vmatprep.subr.bf16.mxu0 0
    %390 = vmatpush2.bf16.msra.mxu0 0
    %391 = vmatprep.subr.bf16.mxu0 0
    %392 = vmatpush2.bf16.msra.mxu0 0
    %393 = vmatprep.mubr.bf16.mxu0 0
    %394 = vmatmul.mubr.bf16.gmra.mxu0 %v287
    %v395 = vpop.f32.mrf.mxu0
    %v396 = vadd.f32 %v134, %v395
    %v397 = vpop.f32.mrf.mxu0
    %v398 = vpop.f32.mrf.mxu0
    %v399 = vadd.f32 %v134, %v398
    %v400 = vpop.f32.mrf.mxu0
    %401 = vmatprep.mubr.bf16.mxu0 0
    %402 = vmatmul.mubr.bf16.gmra.mxu0 %v290
    %v403 = vpop.f32.mrf.mxu0
    %v404 = vadd.f32 %v134, %v403
    %v405 = vpop.f32.mrf.mxu0
    %v406 = vpop.f32.mrf.mxu0
    %v407 = vadd.f32 %v134, %v406
    %v408 = vpop.f32.mrf.mxu0
    %409 = vmatprep.mubr.bf16.mxu0 0
    %410 = vmatmul.mubr.bf16.gmra.mxu0 %v293
    %v411 = vpop.f32.mrf.mxu0
    %v412 = vadd.f32 %v134, %v411
    %v413 = vpop.f32.mrf.mxu0
    %v414 = vpop.f32.mrf.mxu0
    %v415 = vadd.f32 %v134, %v414
    %v416 = vpop.f32.mrf.mxu0
    %417 = vmatprep.mubr.bf16.mxu0 0
    %418 = vmatmul.mubr.bf16.gmra.mxu0 %v296
    %v419 = vpop.f32.mrf.mxu0
    %v420 = vadd.f32 %v134, %v419
    %v421 = vpop.f32.mrf.mxu0
    %v422 = vpop.f32.mrf.mxu0
    %v423 = vadd.f32 %v134, %v422
    %v424 = vpop.f32.mrf.mxu0
    %425 = vmatprep.mubr.bf16.mxu0 0
    %426 = vmatmul.mubr.bf16.gmra.mxu0 %v299
    %v427 = vpop.f32.mrf.mxu0
    %v428 = vadd.f32 %v134, %v427
    %v429 = vpop.f32.mrf.mxu0
    %v430 = vpop.f32.mrf.mxu0
    %v431 = vadd.f32 %v134, %v430
    %v432 = vpop.f32.mrf.mxu0
    %433 = vmatprep.mubr.bf16.mxu0 0
    %434 = vmatmul.mubr.bf16.gmra.mxu0 %v302
    %v435 = vpop.f32.mrf.mxu0
    %v436 = vadd.f32 %v134, %v435
    %v437 = vpop.f32.mrf.mxu0
    %v438 = vpop.f32.mrf.mxu0
    %v439 = vadd.f32 %v134, %v438
    %v440 = vpop.f32.mrf.mxu0
    %441 = vmatprep.mubr.bf16.mxu0 0
    %442 = vmatmul.mubr.bf16.gmra.mxu0 %v305
    %v443 = vpop.f32.mrf.mxu0
    %v444 = vadd.f32 %v134, %v443
    %v445 = vpop.f32.mrf.mxu0
    %v446 = vpop.f32.mrf.mxu0
    %v447 = vadd.f32 %v134, %v446
    %v448 = vpop.f32.mrf.mxu0
    %449 = vmatprep.mubr.bf16.mxu0 0
    %450 = vmatmul.mubr.bf16.gmra.mxu0 %v308
    %v451 = vpop.f32.mrf.mxu0
    %v452 = vadd.f32 %v134, %v451
    %v453 = vpop.f32.mrf.mxu0
    %v454 = vpop.f32.mrf.mxu0
    %v455 = vadd.f32 %v134, %v454
    %v456 = vpop.f32.mrf.mxu0
    %457 = vmatprep.mubr.bf16.mxu0 0
    %458 = vmatmul.mubr.bf16.gmra.mxu0 %v311
    %v459 = vpop.f32.mrf.mxu0
    %v460 = vadd.f32 %v134, %v459
    %v461 = vpop.f32.mrf.mxu0
    %v462 = vpop.f32.mrf.mxu0
    %v463 = vadd.f32 %v134, %v462
    %v464 = vpop.f32.mrf.mxu0
    %465 = vmatprep.mubr.bf16.mxu0 0
    %466 = vmatmul.mubr.bf16.gmra.mxu0 %v314
    %v467 = vpop.f32.mrf.mxu0
    %v468 = vadd.f32 %v134, %v467
    %v469 = vpop.f32.mrf.mxu0
    %v470 = vpop.f32.mrf.mxu0
    %v471 = vadd.f32 %v134, %v470
    %v472 = vpop.f32.mrf.mxu0
    %473 = vmatprep.mubr.bf16.mxu0 0
    %474 = vmatmul.mubr.bf16.gmra.mxu0 %v317
    %v475 = vpop.f32.mrf.mxu0
    %v476 = vadd.f32 %v134, %v475
    %v477 = vpop.f32.mrf.mxu0
    %v478 = vpop.f32.mrf.mxu0
    %v479 = vadd.f32 %v134, %v478
    %v480 = vpop.f32.mrf.mxu0
    %481 = vmatprep.mubr.bf16.mxu0 0
    %482 = vmatmul.mubr.bf16.gmra.mxu0 %v320
    %v483 = vpop.f32.mrf.mxu0
    %v484 = vadd.f32 %v134, %v483
    %v485 = vpop.f32.mrf.mxu0
    %v486 = vpop.f32.mrf.mxu0
    %v487 = vadd.f32 %v134, %v486
    %v488 = vpop.f32.mrf.mxu0
    %489 = vmatprep.mubr.bf16.mxu0 0
    %490 = vmatmul.mubr.bf16.gmra.mxu0 %v323
    %v491 = vpop.f32.mrf.mxu0
    %v492 = vadd.f32 %v134, %v491
    %v493 = vpop.f32.mrf.mxu0
    %v494 = vpop.f32.mrf.mxu0
    %v495 = vadd.f32 %v134, %v494
    %v496 = vpop.f32.mrf.mxu0
    %497 = vmatprep.mubr.bf16.mxu0 0
    %498 = vmatmul.mubr.bf16.gmra.mxu0 %v326
    %v499 = vpop.f32.mrf.mxu0
    %v500 = vadd.f32 %v134, %v499
    %v501 = vpop.f32.mrf.mxu0
    %v502 = vpop.f32.mrf.mxu0
    %v503 = vadd.f32 %v134, %v502
    %v504 = vpop.f32.mrf.mxu0
    %505 = vmatprep.mubr.bf16.mxu0 0
    %506 = vmatmul.mubr.bf16.gmra.mxu0 %v329
    %v507 = vpop.f32.mrf.mxu0
    %v508 = vadd.f32 %v134, %v507
    %v509 = vpop.f32.mrf.mxu0
    %v510 = vpop.f32.mrf.mxu0
    %v511 = vadd.f32 %v134, %v510
    %v512 = vpop.f32.mrf.mxu0
    %513 = vmatprep.mubr.bf16.mxu0 0
    %514 = vmatmul.mubr.bf16.gmra.mxu0 %v332
    %v515 = vpop.f32.mrf.mxu0
    %v516 = vadd.f32 %v134, %v515
    %v517 = vpop.f32.mrf.mxu0
    %v518 = vpop.f32.mrf.mxu0
    %v519 = vadd.f32 %v134, %v518
    %v520 = vpop.f32.mrf.mxu0
    %521 = vmatprep.mubr.bf16.mxu0 0
    %522 = vmatmul.mubr.bf16.gmra.mxu0 %v335
    %v523 = vpop.f32.mrf.mxu0
    %v524 = vadd.f32 %v134, %v523
    %v525 = vpop.f32.mrf.mxu0
    %v526 = vpop.f32.mrf.mxu0
    %v527 = vadd.f32 %v134, %v526
    %v528 = vpop.f32.mrf.mxu0
    %529 = vmatprep.mubr.bf16.mxu0 0
    %530 = vmatmul.mubr.bf16.gmra.mxu0 %v338
    %v531 = vpop.f32.mrf.mxu0
    %v532 = vadd.f32 %v134, %v531
    %v533 = vpop.f32.mrf.mxu0
    %v534 = vpop.f32.mrf.mxu0
    %v535 = vadd.f32 %v134, %v534
    %v536 = vpop.f32.mrf.mxu0
    %537 = vmatprep.mubr.bf16.mxu0 0
    %538 = vmatmul.mubr.bf16.gmra.mxu0 %v341
    %v539 = vpop.f32.mrf.mxu0
    %v540 = vadd.f32 %v134, %v539
    %v541 = vpop.f32.mrf.mxu0
    %v542 = vpop.f32.mrf.mxu0
    %v543 = vadd.f32 %v134, %v542
    %v544 = vpop.f32.mrf.mxu0
    %545 = vmatprep.mubr.bf16.mxu0 0
    %546 = vmatmul.mubr.bf16.gmra.mxu0 %v344
    %v547 = vpop.f32.mrf.mxu0
    %v548 = vadd.f32 %v134, %v547
    %v549 = vpop.f32.mrf.mxu0
    %v550 = vpop.f32.mrf.mxu0
    %v551 = vadd.f32 %v134, %v550
    %v552 = vpop.f32.mrf.mxu0
    %553 = vmatprep.mubr.bf16.mxu0 0
    %554 = vmatmul.mubr.bf16.gmra.mxu0 %v347
    %v555 = vpop.f32.mrf.mxu0
    %v556 = vadd.f32 %v134, %v555
    %v557 = vpop.f32.mrf.mxu0
    %v558 = vpop.f32.mrf.mxu0
    %v559 = vadd.f32 %v134, %v558
    %v560 = vpop.f32.mrf.mxu0
    %561 = vmatprep.mubr.bf16.mxu0 0
    %562 = vmatmul.mubr.bf16.gmra.mxu0 %v350
    %v563 = vpop.f32.mrf.mxu0
    %v564 = vadd.f32 %v134, %v563
    %v565 = vpop.f32.mrf.mxu0
    %v566 = vpop.f32.mrf.mxu0
    %v567 = vadd.f32 %v134, %v566
    %v568 = vpop.f32.mrf.mxu0
    %569 = vmatprep.mubr.bf16.mxu0 0
    %570 = vmatmul.mubr.bf16.gmra.mxu0 %v353
    %v571 = vpop.f32.mrf.mxu0
    %v572 = vadd.f32 %v134, %v571
    %v573 = vpop.f32.mrf.mxu0
    %v574 = vpop.f32.mrf.mxu0
    %v575 = vadd.f32 %v134, %v574
    %v576 = vpop.f32.mrf.mxu0
    %577 = vmatprep.mubr.bf16.mxu0 0
    %578 = vmatmul.mubr.bf16.gmra.mxu0 %v356
    %v579 = vpop.f32.mrf.mxu0
    %v580 = vadd.f32 %v134, %v579
    %v581 = vpop.f32.mrf.mxu0
    %v582 = vpop.f32.mrf.mxu0
    %v583 = vadd.f32 %v134, %v582
    %v584 = vpop.f32.mrf.mxu0
    %585 = vmatprep.mubr.bf16.mxu0 0
    %586 = vmatmul.mubr.bf16.gmra.mxu0 %v359
    %v587 = vpop.f32.mrf.mxu0
    %v588 = vadd.f32 %v134, %v587
    %v589 = vpop.f32.mrf.mxu0
    %v590 = vpop.f32.mrf.mxu0
    %v591 = vadd.f32 %v134, %v590
    %v592 = vpop.f32.mrf.mxu0
    %593 = vdwg.mxu0
    %v594 = vmax.f32 %v396, 0.0
    %v595 = vmax.f32 %v399, 0.0
    %v596 = vmax.f32 %v404, 0.0
    %v597 = vmax.f32 %v407, 0.0
    %v598 = vmax.f32 %v412, 0.0
    %v599 = vmax.f32 %v415, 0.0
    %v600 = vmax.f32 %v420, 0.0
    %v601 = vmax.f32 %v423, 0.0
    %v602 = vmax.f32 %v428, 0.0
    %v603 = vmax.f32 %v431, 0.0
    %v604 = vmax.f32 %v436, 0.0
    %v605 = vmax.f32 %v439, 0.0
    %v606 = vmax.f32 %v444, 0.0
    %v607 = vmax.f32 %v447, 0.0
    %v608 = vmax.f32 %v452, 0.0
    %v609 = vmax.f32 %v455, 0.0
    %v610 = vmax.f32 %v460, 0.0
    %v611 = vmax.f32 %v463, 0.0
    %v612 = vmax.f32 %v468, 0.0
    %v613 = vmax.f32 %v471, 0.0
    %v614 = vmax.f32 %v476, 0.0
    %v615 = vmax.f32 %v479, 0.0
    %v616 = vmax.f32 %v484, 0.0
    %v617 = vmax.f32 %v487, 0.0
    %v618 = vmax.f32 %v492, 0.0
    %v619 = vmax.f32 %v495, 0.0
    %v620 = vmax.f32 %v500, 0.0
    %v621 = vmax.f32 %v503, 0.0
    %v622 = vmax.f32 %v508, 0.0
    %v623 = vmax.f32 %v511, 0.0
    %v624 = vmax.f32 %v516, 0.0
    %v625 = vmax.f32 %v519, 0.0
    %v626 = vmax.f32 %v524, 0.0
    %v627 = vmax.f32 %v527, 0.0
    %v628 = vmax.f32 %v532, 0.0
    %v629 = vmax.f32 %v535, 0.0
    %v630 = vmax.f32 %v540, 0.0
    %v631 = vmax.f32 %v543, 0.0
    %v632 = vmax.f32 %v548, 0.0
    %v633 = vmax.f32 %v551, 0.0
    %v634 = vmax.f32 %v556, 0.0
    %v635 = vmax.f32 %v559, 0.0
    %v636 = vmax.f32 %v564, 0.0
    %v637 = vmax.f32 %v567, 0.0
    %v638 = vmax.f32 %v572, 0.0
    %v639 = vmax.f32 %v575, 0.0
    %v640 = vmax.f32 %v580, 0.0
    %v641 = vmax.f32 %v583, 0.0
    %v642 = vmax.f32 %v588, 0.0
    %v643 = vmax.f32 %v591, 0.0
    %v644 = vld [vmem:[%s5] sm:$0xf]
    %v645 = vld [vmem:[%s5 + $0x4] sm:$0xf]
    %v646 = vld [vmem:[%s5 + $0x8] sm:$0xf]
    %v647 = vld [vmem:[%s5 + $0xc] sm:$0xf]
    %v648 = vld [vmem:[%s5 + $0x10] sm:$0xf]
    %v649 = vld [vmem:[%s5 + $0x14] sm:$0xf]
    %v650 = vld [vmem:[%s5 + $0x18] sm:$0xf]
    %v651 = vld [vmem:[%s5 + $0x1c] sm:$0xf]
    %v652 = vld [vmem:[%s5 + $0x20] sm:$0xf]
    %v653 = vld [vmem:[%s5 + $0x24] sm:$0xf]
    %v654 = vld [vmem:[%s5 + $0x28] sm:$0xf]
    %v655 = vld [vmem:[%s5 + $0x2c] sm:$0xf]
    %v656 = vld [vmem:[%s5 + $0x30] sm:$0xf]
    %v657 = vld [vmem:[%s5 + $0x34] sm:$0xf]
    %v658 = vld [vmem:[%s5 + $0x38] sm:$0xf]
    %v659 = vld [vmem:[%s5 + $0x3c] sm:$0xf]
    %v660 = vld [vmem:[%s5 + $0x40] sm:$0xf]
    %v661 = vld [vmem:[%s5 + $0x44] sm:$0xf]
    %v662 = vld [vmem:[%s5 + $0x48] sm:$0xf]
    %v663 = vld [vmem:[%s5 + $0x4c] sm:$0xf]
    %v664 = vld [vmem:[%s5 + $0x50] sm:$0xf]
    %v665 = vld [vmem:[%s5 + $0x54] sm:$0xf]
    %v666 = vld [vmem:[%s5 + $0x58] sm:$0xf]
    %v667 = vld [vmem:[%s5 + $0x5c] sm:$0xf]
    %v668 = vld [vmem:[%s5 + $0x60] sm:$0xf]
    %v669 = vld [vmem:[%s5 + $0x64] sm:$0xf]
    %v670 = vld [vmem:[%s5 + $0x68] sm:$0xf]
    %v671 = vld [vmem:[%s5 + $0x6c] sm:$0xf]
    %v672 = vld [vmem:[%s5 + $0x70] sm:$0xf]
    %v673 = vld [vmem:[%s5 + $0x74] sm:$0xf]
    %v674 = vld [vmem:[%s5 + $0x78] sm:$0xf]
    %v675 = vld [vmem:[%s5 + $0x7c] sm:$0xf]
    %v676 = vld [vmem:[%s5 + $0x80] sm:$0xf]
    %v677 = vld [vmem:[%s5 + $0x84] sm:$0xf]
    %v678 = vld [vmem:[%s5 + $0x88] sm:$0xf]
    %v679 = vld [vmem:[%s5 + $0x8c] sm:$0xf]
    %v680 = vld [vmem:[%s5 + $0x90] sm:$0xf]
    %v681 = vld [vmem:[%s5 + $0x94] sm:$0xf]
    %v682 = vld [vmem:[%s5 + $0x98] sm:$0xf]
    %v683 = vld [vmem:[%s5 + $0x9c] sm:$0xf]
    %v684 = vld [vmem:[%s5 + $0xa0] sm:$0xf]
    %v685 = vld [vmem:[%s5 + $0xa4] sm:$0xf]
    %v686 = vld [vmem:[%s5 + $0xa8] sm:$0xf]
    %v687 = vld [vmem:[%s5 + $0xac] sm:$0xf]
    %v688 = vld [vmem:[%s5 + $0xb0] sm:$0xf]
    %v689 = vld [vmem:[%s5 + $0xb4] sm:$0xf]
    %v690 = vld [vmem:[%s5 + $0xb8] sm:$0xf]
    %v691 = vld [vmem:[%s5 + $0xbc] sm:$0xf]
    %v692 = vld [vmem:[%s5 + $0xc0] sm:$0xf]
    %v693 = vld [vmem:[%s5 + $0xc4] sm:$0xf]
    %v694 = vld [vmem:[%s5 + $0xc8] sm:$0xf]
    %v695 = vld [vmem:[%s5 + $0xcc] sm:$0xf]
    %v696 = vld [vmem:[%s5 + $0xd0] sm:$0xf]
    %v697 = vld [vmem:[%s5 + $0xd4] sm:$0xf]
    %v698 = vld [vmem:[%s5 + $0xd8] sm:$0xf]
    %v699 = vld [vmem:[%s5 + $0xdc] sm:$0xf]
    %v700 = vld [vmem:[%s5 + $0xe0] sm:$0xf]
    %v701 = vld [vmem:[%s5 + $0xe4] sm:$0xf]
    %v702 = vld [vmem:[%s5 + $0xe8] sm:$0xf]
    %v703 = vld [vmem:[%s5 + $0xec] sm:$0xf]
    %v704 = vld [vmem:[%s5 + $0xf0] sm:$0xf]
    %v705 = vld [vmem:[%s5 + $0xf4] sm:$0xf]
    %v706 = vld [vmem:[%s5 + $0xf8] sm:$0xf]
    %v707 = vld [vmem:[%s5 + $0xfc] sm:$0xf]
    %v708 = vpack.c.bf16 %v595, %v594
    %v709 = vpack.c.bf16 %v597, %v596
    %v710 = vpack.c.bf16 %v599, %v598
    %v711 = vpack.c.bf16 %v601, %v600
    %v712 = vpack.c.bf16 %v603, %v602
    %v713 = vpack.c.bf16 %v605, %v604
    %v714 = vpack.c.bf16 %v607, %v606
    %v715 = vpack.c.bf16 %v609, %v608
    %v716 = vpack.c.bf16 %v611, %v610
    %v717 = vpack.c.bf16 %v613, %v612
    %v718 = vpack.c.bf16 %v615, %v614
    %v719 = vpack.c.bf16 %v617, %v616
    %vm726 = vcmask 1045504
    %v727 = vrot.slane %v714, 2
    %v728 = vrot.slane %v715, 2
    %v729 = vsel %vm726, %v727, %v728
    %v730 = vrot.slane %v716, 2
    %v731 = vsel %vm726, %v728, %v730
    %v732 = vrot.slane %v717, 2
    %v733 = vsel %vm726, %v730, %v732
    %v734 = vrot.slane %v718, 2
    %v735 = vsel %vm726, %v732, %v734
    %v736 = vrot.slane %v719, 2
    %v737 = vsel %vm726, %v734, %v736
    %v742 = vunpack.c.l.b16 %v648
    %v743 = vunpack.c.l.b16 %v649
    %v744 = vunpack.c.l.b16 %v650
    %v745 = vunpack.c.l.b16 %v651
    %v746 = vpack.c.b16 %v743, %v742
    %v747 = vpack.c.b16 %v745, %v744
    %vm750 = vcmask 261120
    %v752 = vsel %vm750, %v729, 0
    %v755 = vsel %vm750, %v731, 0
    %v758 = vsel %vm750, %v733, 0
    %v761 = vsel %vm750, %v735, 0
    %v764 = vsel %vm750, %v737, 0
    %v767 = vsel %vm750, %v736, 0
    %769 = vmatprep.subr.bf16.mxu0 0
    %770 = vmatpush1.bf16.msra.mxu0 0
    %771 = vmatprep.subr.bf16.mxu0 0
    %772 = vmatpush1.bf16.msra.mxu0 0
    %773 = vmatprep.subr.bf16.mxu0 0
    %774 = vmatpush1.bf16.msra.mxu0 0
    %775 = vmatprep.subr.bf16.mxu0 0
    %776 = vmatpush1.bf16.msra.mxu0 0
    %777 = vmatprep.subr.bf16.mxu0 0
    %778 = vmatpush1.bf16.msra.mxu0 0
    %779 = vmatprep.subr.bf16.mxu0 0
    %780 = vmatpush1.bf16.msra.mxu0 0
    %781 = vmatprep.subr.bf16.mxu0 0
    %782 = vmatpush1.bf16.msra.mxu0 %v747
    %783 = vmatprep.subr.bf16.mxu0 0
    %784 = vmatpush1.bf16.msra.mxu0 %v746
    %785 = vmatprep.subr.bf16.mxu0 0
    %786 = vmatpush2.bf16.msra.mxu0 0
    %787 = vmatprep.subr.bf16.mxu0 0
    %788 = vmatpush2.bf16.msra.mxu0 0
    %789 = vmatprep.subr.bf16.mxu0 0
    %790 = vmatpush2.bf16.msra.mxu0 0
    %791 = vmatprep.subr.bf16.mxu0 0
    %792 = vmatpush2.bf16.msra.mxu0 0
    %793 = vmatprep.subr.bf16.mxu0 0
    %794 = vmatpush2.bf16.msra.mxu0 0
    %795 = vmatprep.subr.bf16.mxu0 0
    %796 = vmatpush2.bf16.msra.mxu0 0
    %797 = vmatprep.subr.bf16.mxu0 0
    %798 = vmatpush2.bf16.msra.mxu0 0
    %799 = vmatprep.subr.bf16.mxu0 0
    %800 = vmatpush2.bf16.msra.mxu0 0
    %801 = vmatprep.mubr.bf16.mxu0 0
    %802 = vmatmul.mubr.bf16.gmra.mxu0 %v752
    %v803 = vpop.f32.mrf.mxu0
    %v804 = vadd.f32 0.0, %v803
    %v805 = vpop.f32.mrf.mxu0
    %v806 = vpop.f32.mrf.mxu0
    %v807 = vadd.f32 0.0, %v806
    %v808 = vpop.f32.mrf.mxu0
    %809 = vmatprep.mubr.bf16.mxu0 0
    %810 = vmatmul.mubr.bf16.gmra.mxu0 %v755
    %v811 = vpop.f32.mrf.mxu0
    %v812 = vadd.f32 0.0, %v811
    %v813 = vpop.f32.mrf.mxu0
    %v814 = vpop.f32.mrf.mxu0
    %v815 = vadd.f32 0.0, %v814
    %v816 = vpop.f32.mrf.mxu0
    %817 = vmatprep.mubr.bf16.mxu0 0
    %818 = vmatmul.mubr.bf16.gmra.mxu0 %v758
    %v819 = vpop.f32.mrf.mxu0
    %v820 = vadd.f32 0.0, %v819
    %v821 = vpop.f32.mrf.mxu0
    %v822 = vpop.f32.mrf.mxu0
    %v823 = vadd.f32 0.0, %v822
    %v824 = vpop.f32.mrf.mxu0
    %825 = vmatprep.mubr.bf16.mxu0 0
    %826 = vmatmul.mubr.bf16.gmra.mxu0 %v761
    %v827 = vpop.f32.mrf.mxu0
    %v828 = vadd.f32 0.0, %v827
    %v829 = vpop.f32.mrf.mxu0
    %v830 = vpop.f32.mrf.mxu0
    %v831 = vadd.f32 0.0, %v830
    %v832 = vpop.f32.mrf.mxu0
    %833 = vmatprep.mubr.bf16.mxu0 0
    %834 = vmatmul.mubr.bf16.gmra.mxu0 %v764
    %v835 = vpop.f32.mrf.mxu0
    %v836 = vadd.f32 0.0, %v835
    %v837 = vpop.f32.mrf.mxu0
    %v838 = vpop.f32.mrf.mxu0
    %v839 = vadd.f32 0.0, %v838
    %v840 = vpop.f32.mrf.mxu0
    %841 = vmatprep.mubr.bf16.mxu0 0
    %842 = vmatmul.mubr.bf16.gmra.mxu0 %v767
    %v843 = vpop.f32.mrf.mxu0
    %v844 = vadd.f32 0.0, %v843
    %v845 = vpop.f32.mrf.mxu0
    %v846 = vpop.f32.mrf.mxu0
    %v847 = vadd.f32 0.0, %v846
    %v848 = vpop.f32.mrf.mxu0
    %849 = vdwg.mxu0
    %v854 = vunpack.c.l.b16 %v644
    %v855 = vunpack.c.l.b16 %v645
    %v856 = vunpack.c.l.b16 %v646
    %v857 = vunpack.c.l.b16 %v647
    %v858 = vpack.c.b16 %v855, %v854
    %v859 = vpack.c.b16 %v857, %v856
    %v863 = vsel %vm750, %v708, 0
    %v866 = vsel %vm750, %v709, 0
    %v869 = vsel %vm750, %v710, 0
    %v872 = vsel %vm750, %v711, 0
    %v875 = vsel %vm750, %v712, 0
    %v878 = vsel %vm750, %v713, 0
    %880 = vmatprep.subr.bf16.mxu0 0
    %881 = vmatpush1.bf16.msra.mxu0 0
    %882 = vmatprep.subr.bf16.mxu0 0
    %883 = vmatpush1.bf16.msra.mxu0 0
    %884 = vmatprep.subr.bf16.mxu0 0
    %885 = vmatpush1.bf16.msra.mxu0 0
    %886 = vmatprep.subr.bf16.mxu0 0
    %887 = vmatpush1.bf16.msra.mxu0 0
    %888 = vmatprep.subr.bf16.mxu0 0
    %889 = vmatpush1.bf16.msra.mxu0 0
    %890 = vmatprep.subr.bf16.mxu0 0
    %891 = vmatpush1.bf16.msra.mxu0 0
    %892 = vmatprep.subr.bf16.mxu0 0
    %893 = vmatpush1.bf16.msra.mxu0 %v859
    %894 = vmatprep.subr.bf16.mxu0 0
    %895 = vmatpush1.bf16.msra.mxu0 %v858
    %896 = vmatprep.subr.bf16.mxu0 0
    %897 = vmatpush2.bf16.msra.mxu0 0
    %898 = vmatprep.subr.bf16.mxu0 0
    %899 = vmatpush2.bf16.msra.mxu0 0
    %900 = vmatprep.subr.bf16.mxu0 0
    %901 = vmatpush2.bf16.msra.mxu0 0
    %902 = vmatprep.subr.bf16.mxu0 0
    %903 = vmatpush2.bf16.msra.mxu0 0
    %904 = vmatprep.subr.bf16.mxu0 0
    %905 = vmatpush2.bf16.msra.mxu0 0
    %906 = vmatprep.subr.bf16.mxu0 0
    %907 = vmatpush2.bf16.msra.mxu0 0
    %908 = vmatprep.subr.bf16.mxu0 0
    %909 = vmatpush2.bf16.msra.mxu0 0
    %910 = vmatprep.subr.bf16.mxu0 0
    %911 = vmatpush2.bf16.msra.mxu0 0
    %912 = vmatprep.mubr.bf16.mxu0 0
    %913 = vmatmul.mubr.bf16.gmra.mxu0 %v863
    %v914 = vpop.f32.mrf.mxu0
    %v915 = vadd.f32 %v804, %v914
    %v916 = vpop.f32.mrf.mxu0
    %v917 = vpop.f32.mrf.mxu0
    %v918 = vadd.f32 %v807, %v917
    %v919 = vpop.f32.mrf.mxu0
    %920 = vmatprep.mubr.bf16.mxu0 0
    %921 = vmatmul.mubr.bf16.gmra.mxu0 %v866
    %v922 = vpop.f32.mrf.mxu0
    %v923 = vadd.f32 %v812, %v922
    %v924 = vpop.f32.mrf.mxu0
    %v925 = vpop.f32.mrf.mxu0
    %v926 = vadd.f32 %v815, %v925
    %v927 = vpop.f32.mrf.mxu0
    %928 = vmatprep.mubr.bf16.mxu0 0
    %929 = vmatmul.mubr.bf16.gmra.mxu0 %v869
    %v930 = vpop.f32.mrf.mxu0
    %v931 = vadd.f32 %v820, %v930
    %v932 = vpop.f32.mrf.mxu0
    %v933 = vpop.f32.mrf.mxu0
    %v934 = vadd.f32 %v823, %v933
    %v935 = vpop.f32.mrf.mxu0
    %936 = vmatprep.mubr.bf16.mxu0 0
    %937 = vmatmul.mubr.bf16.gmra.mxu0 %v872
    %v938 = vpop.f32.mrf.mxu0
    %v939 = vadd.f32 %v828, %v938
    %v940 = vpop.f32.mrf.mxu0
    %v941 = vpop.f32.mrf.mxu0
    %v942 = vadd.f32 %v831, %v941
    %v943 = vpop.f32.mrf.mxu0
    %944 = vmatprep.mubr.bf16.mxu0 0
    %945 = vmatmul.mubr.bf16.gmra.mxu0 %v875
    %v946 = vpop.f32.mrf.mxu0
    %v947 = vadd.f32 %v836, %v946
    %v948 = vpop.f32.mrf.mxu0
    %v949 = vpop.f32.mrf.mxu0
    %v950 = vadd.f32 %v839, %v949
    %v951 = vpop.f32.mrf.mxu0
    %952 = vmatprep.mubr.bf16.mxu0 0
    %953 = vmatmul.mubr.bf16.gmra.mxu0 %v878
    %v954 = vpop.f32.mrf.mxu0
    %v955 = vadd.f32 %v844, %v954
    %v956 = vpop.f32.mrf.mxu0
    %v957 = vpop.f32.mrf.mxu0
    %v958 = vadd.f32 %v847, %v957
    %v959 = vpop.f32.mrf.mxu0
    %960 = vdwg.mxu0
    %vm961 = vsmask.f32 7424
    %v962 = vshrl.u32 %v708, 16
    %v964 = vshll.u32 %v708, 16
    %v966 = vrot.slane %v964, 1
    %v967 = vor.u32 %v962, %v966
    %v968 = vshll.u32 %v709, 16
    %v970 = vrot.slane %v968, 1
    %v971 = vsel %vm961, %v967, %v970
    %v972 = vshrl.u32 %v709, 16
    %v974 = vor.u32 %v972, %v970
    %v975 = vshll.u32 %v710, 16
    %v977 = vrot.slane %v975, 1
    %v978 = vsel %vm961, %v974, %v977
    %v979 = vshrl.u32 %v710, 16
    %v981 = vor.u32 %v979, %v977
    %v982 = vshll.u32 %v711, 16
    %v984 = vrot.slane %v982, 1
    %v985 = vsel %vm961, %v981, %v984
    %v986 = vshrl.u32 %v711, 16
    %v988 = vor.u32 %v986, %v984
    %v989 = vshll.u32 %v712, 16
    %v991 = vrot.slane %v989, 1
    %v992 = vsel %vm961, %v988, %v991
    %v993 = vshrl.u32 %v712, 16
    %v995 = vor.u32 %v993, %v991
    %v996 = vshll.u32 %v713, 16
    %v998 = vrot.slane %v996, 1
    %v999 = vsel %vm961, %v995, %v998
    %v1000 = vshrl.u32 %v713, 16
    %v1002 = vor.u32 %v1000, %v998
    %v1007 = vunpack.c.l.b16 %v652
    %v1008 = vunpack.c.l.b16 %v653
    %v1009 = vunpack.c.l.b16 %v654
    %v1010 = vunpack.c.l.b16 %v655
    %v1011 = vpack.c.b16 %v1008, %v1007
    %v1012 = vpack.c.b16 %v1010, %v1009
    %v1016 = vsel %vm750, %v971, 0
    %v1019 = vsel %vm750, %v978, 0
    %v1022 = vsel %vm750, %v985, 0
    %v1025 = vsel %vm750, %v992, 0
    %v1028 = vsel %vm750, %v999, 0
    %v1031 = vsel %vm750, %v1002, 0
    %1033 = vmatprep.subr.bf16.mxu0 0
    %1034 = vmatpush1.bf16.msra.mxu0 0
    %1035 = vmatprep.subr.bf16.mxu0 0
    %1036 = vmatpush1.bf16.msra.mxu0 0
    %1037 = vmatprep.subr.bf16.mxu0 0
    %1038 = vmatpush1.bf16.msra.mxu0 0
    %1039 = vmatprep.subr.bf16.mxu0 0
    %1040 = vmatpush1.bf16.msra.mxu0 0
    %1041 = vmatprep.subr.bf16.mxu0 0
    %1042 = vmatpush1.bf16.msra.mxu0 0
    %1043 = vmatprep.subr.bf16.mxu0 0
    %1044 = vmatpush1.bf16.msra.mxu0 0
    %1045 = vmatprep.subr.bf16.mxu0 0
    %1046 = vmatpush1.bf16.msra.mxu0 %v1012
    %1047 = vmatprep.subr.bf16.mxu0 0
    %1048 = vmatpush1.bf16.msra.mxu0 %v1011
    %1049 = vmatprep.subr.bf16.mxu0 0
    %1050 = vmatpush2.bf16.msra.mxu0 0
    %1051 = vmatprep.subr.bf16.mxu0 0
    %1052 = vmatpush2.bf16.msra.mxu0 0
    %1053 = vmatprep.subr.bf16.mxu0 0
    %1054 = vmatpush2.bf16.msra.mxu0 0
    %1055 = vmatprep.subr.bf16.mxu0 0
    %1056 = vmatpush2.bf16.msra.mxu0 0
    %1057 = vmatprep.subr.bf16.mxu0 0
    %1058 = vmatpush2.bf16.msra.mxu0 0
    %1059 = vmatprep.subr.bf16.mxu0 0
    %1060 = vmatpush2.bf16.msra.mxu0 0
    %1061 = vmatprep.subr.bf16.mxu0 0
    %1062 = vmatpush2.bf16.msra.mxu0 0
    %1063 = vmatprep.subr.bf16.mxu0 0
    %1064 = vmatpush2.bf16.msra.mxu0 0
    %1065 = vmatprep.mubr.bf16.mxu0 0
    %1066 = vmatmul.mubr.bf16.gmra.mxu0 %v1016
    %v1067 = vpop.f32.mrf.mxu0
    %v1068 = vadd.f32 0.0, %v1067
    %v1069 = vpop.f32.mrf.mxu0
    %v1070 = vpop.f32.mrf.mxu0
    %v1071 = vadd.f32 0.0, %v1070
    %v1072 = vpop.f32.mrf.mxu0
    %1073 = vmatprep.mubr.bf16.mxu0 0
    %1074 = vmatmul.mubr.bf16.gmra.mxu0 %v1019
    %v1075 = vpop.f32.mrf.mxu0
    %v1076 = vadd.f32 0.0, %v1075
    %v1077 = vpop.f32.mrf.mxu0
    %v1078 = vpop.f32.mrf.mxu0
    %v1079 = vadd.f32 0.0, %v1078
    %v1080 = vpop.f32.mrf.mxu0
    %1081 = vmatprep.mubr.bf16.mxu0 0
    %1082 = vmatmul.mubr.bf16.gmra.mxu0 %v1022
    %v1083 = vpop.f32.mrf.mxu0
    %v1084 = vadd.f32 0.0, %v1083
    %v1085 = vpop.f32.mrf.mxu0
    %v1086 = vpop.f32.mrf.mxu0
    %v1087 = vadd.f32 0.0, %v1086
    %v1088 = vpop.f32.mrf.mxu0
    %1089 = vmatprep.mubr.bf16.mxu0 0
    %1090 = vmatmul.mubr.bf16.gmra.mxu0 %v1025
    %v1091 = vpop.f32.mrf.mxu0
    %v1092 = vadd.f32 0.0, %v1091
    %v1093 = vpop.f32.mrf.mxu0
    %v1094 = vpop.f32.mrf.mxu0
    %v1095 = vadd.f32 0.0, %v1094
    %v1096 = vpop.f32.mrf.mxu0
    %1097 = vmatprep.mubr.bf16.mxu0 0
    %1098 = vmatmul.mubr.bf16.gmra.mxu0 %v1028
    %v1099 = vpop.f32.mrf.mxu0
    %v1100 = vadd.f32 0.0, %v1099
    %v1101 = vpop.f32.mrf.mxu0
    %v1102 = vpop.f32.mrf.mxu0
    %v1103 = vadd.f32 0.0, %v1102
    %v1104 = vpop.f32.mrf.mxu0
    %1105 = vmatprep.mubr.bf16.mxu0 0
    %1106 = vmatmul.mubr.bf16.gmra.mxu0 %v1031
    %v1107 = vpop.f32.mrf.mxu0
    %v1108 = vadd.f32 0.0, %v1107
    %v1109 = vpop.f32.mrf.mxu0
    %v1110 = vpop.f32.mrf.mxu0
    %v1111 = vadd.f32 0.0, %v1110
    %v1112 = vpop.f32.mrf.mxu0
    %1113 = vdwg.mxu0
    %v1114 = vadd.f32 %v915, %v1068
    %v1115 = vadd.f32 %v918, %v1071
    %v1116 = vadd.f32 %v923, %v1076
    %v1117 = vadd.f32 %v926, %v1079
    %v1118 = vadd.f32 %v931, %v1084
    %v1119 = vadd.f32 %v934, %v1087
    %v1120 = vadd.f32 %v939, %v1092
    %v1121 = vadd.f32 %v942, %v1095
    %v1122 = vadd.f32 %v947, %v1100
    %v1123 = vadd.f32 %v950, %v1103
    %v1124 = vadd.f32 %v955, %v1108
    %v1125 = vadd.f32 %v958, %v1111
    %vm1126 = vsmask.f32 5376
    %v1128 = vshrl.u32 %v714, 16
    %v1130 = vrot.slane %v1128, 2
    %v1131 = vshll.u32 %v714, 16
    %v1133 = vrot.slane %v1131, 3
    %v1134 = vor.u32 %v1130, %v1133
    %v1136 = vshrl.u32 %v715, 16
    %v1138 = vrot.slane %v1136, 2
    %v1139 = vshll.u32 %v715, 16
    %v1141 = vrot.slane %v1139, 3
    %v1142 = vor.u32 %v1138, %v1141
    %v1143 = vsel %vm1126, %v1134, %v1142
    %v1145 = vshrl.u32 %v716, 16
    %v1147 = vrot.slane %v1145, 2
    %v1148 = vshll.u32 %v716, 16
    %v1150 = vrot.slane %v1148, 3
    %v1151 = vor.u32 %v1147, %v1150
    %v1152 = vsel %vm1126, %v1142, %v1151
    %v1154 = vshrl.u32 %v717, 16
    %v1156 = vrot.slane %v1154, 2
    %v1157 = vshll.u32 %v717, 16
    %v1159 = vrot.slane %v1157, 3
    %v1160 = vor.u32 %v1156, %v1159
    %v1161 = vsel %vm1126, %v1151, %v1160
    %v1163 = vshrl.u32 %v718, 16
    %v1165 = vrot.slane %v1163, 2
    %v1166 = vshll.u32 %v718, 16
    %v1168 = vrot.slane %v1166, 3
    %v1169 = vor.u32 %v1165, %v1168
    %v1170 = vsel %vm1126, %v1160, %v1169
    %v1172 = vshrl.u32 %v719, 16
    %v1174 = vrot.slane %v1172, 2
    %v1175 = vshll.u32 %v719, 16
    %v1177 = vrot.slane %v1175, 3
    %v1178 = vor.u32 %v1174, %v1177
    %v1179 = vsel %vm1126, %v1169, %v1178
    %v1184 = vunpack.c.l.b16 %v656
    %v1185 = vunpack.c.l.b16 %v657
    %v1186 = vunpack.c.l.b16 %v658
    %v1187 = vunpack.c.l.b16 %v659
    %v1188 = vpack.c.b16 %v1185, %v1184
    %v1189 = vpack.c.b16 %v1187, %v1186
    %v1193 = vsel %vm750, %v1143, 0
    %v1196 = vsel %vm750, %v1152, 0
    %v1199 = vsel %vm750, %v1161, 0
    %v1202 = vsel %vm750, %v1170, 0
    %v1205 = vsel %vm750, %v1179, 0
    %v1208 = vsel %vm750, %v1178, 0
    %1210 = vmatprep.subr.bf16.mxu0 0
    %1211 = vmatpush1.bf16.msra.mxu0 0
    %1212 = vmatprep.subr.bf16.mxu0 0
    %1213 = vmatpush1.bf16.msra.mxu0 0
    %1214 = vmatprep.subr.bf16.mxu0 0
    %1215 = vmatpush1.bf16.msra.mxu0 0
    %1216 = vmatprep.subr.bf16.mxu0 0
    %1217 = vmatpush1.bf16.msra.mxu0 0
    %1218 = vmatprep.subr.bf16.mxu0 0
    %1219 = vmatpush1.bf16.msra.mxu0 0
    %1220 = vmatprep.subr.bf16.mxu0 0
    %1221 = vmatpush1.bf16.msra.mxu0 0
    %1222 = vmatprep.subr.bf16.mxu0 0
    %1223 = vmatpush1.bf16.msra.mxu0 %v1189
    %1224 = vmatprep.subr.bf16.mxu0 0
    %1225 = vmatpush1.bf16.msra.mxu0 %v1188
    %1226 = vmatprep.subr.bf16.mxu0 0
    %1227 = vmatpush2.bf16.msra.mxu0 0
    %1228 = vmatprep.subr.bf16.mxu0 0
    %1229 = vmatpush2.bf16.msra.mxu0 0
    %1230 = vmatprep.subr.bf16.mxu0 0
    %1231 = vmatpush2.bf16.msra.mxu0 0
    %1232 = vmatprep.subr.bf16.mxu0 0
    %1233 = vmatpush2.bf16.msra.mxu0 0
    %1234 = vmatprep.subr.bf16.mxu0 0
    %1235 = vmatpush2.bf16.msra.mxu0 0
    %1236 = vmatprep.subr.bf16.mxu0 0
    %1237 = vmatpush2.bf16.msra.mxu0 0
    %1238 = vmatprep.subr.bf16.mxu0 0
    %1239 = vmatpush2.bf16.msra.mxu0 0
    %1240 = vmatprep.subr.bf16.mxu0 0
    %1241 = vmatpush2.bf16.msra.mxu0 0
    %1242 = vmatprep.mubr.bf16.mxu0 0
    %1243 = vmatmul.mubr.bf16.gmra.mxu0 %v1193
    %v1244 = vpop.f32.mrf.mxu0
    %v1245 = vadd.f32 0.0, %v1244
    %v1246 = vpop.f32.mrf.mxu0
    %v1247 = vpop.f32.mrf.mxu0
    %v1248 = vadd.f32 0.0, %v1247
    %v1249 = vpop.f32.mrf.mxu0
    %1250 = vmatprep.mubr.bf16.mxu0 0
    %1251 = vmatmul.mubr.bf16.gmra.mxu0 %v1196
    %v1252 = vpop.f32.mrf.mxu0
    %v1253 = vadd.f32 0.0, %v1252
    %v1254 = vpop.f32.mrf.mxu0
    %v1255 = vpop.f32.mrf.mxu0
    %v1256 = vadd.f32 0.0, %v1255
    %v1257 = vpop.f32.mrf.mxu0
    %1258 = vmatprep.mubr.bf16.mxu0 0
    %1259 = vmatmul.mubr.bf16.gmra.mxu0 %v1199
    %v1260 = vpop.f32.mrf.mxu0
    %v1261 = vadd.f32 0.0, %v1260
    %v1262 = vpop.f32.mrf.mxu0
    %v1263 = vpop.f32.mrf.mxu0
    %v1264 = vadd.f32 0.0, %v1263
    %v1265 = vpop.f32.mrf.mxu0
    %1266 = vmatprep.mubr.bf16.mxu0 0
    %1267 = vmatmul.mubr.bf16.gmra.mxu0 %v1202
    %v1268 = vpop.f32.mrf.mxu0
    %v1269 = vadd.f32 0.0, %v1268
    %v1270 = vpop.f32.mrf.mxu0
    %v1271 = vpop.f32.mrf.mxu0
    %v1272 = vadd.f32 0.0, %v1271
    %v1273 = vpop.f32.mrf.mxu0
    %1274 = vmatprep.mubr.bf16.mxu0 0
    %1275 = vmatmul.mubr.bf16.gmra.mxu0 %v1205
    %v1276 = vpop.f32.mrf.mxu0
    %v1277 = vadd.f32 0.0, %v1276
    %v1278 = vpop.f32.mrf.mxu0
    %v1279 = vpop.f32.mrf.mxu0
    %v1280 = vadd.f32 0.0, %v1279
    %v1281 = vpop.f32.mrf.mxu0
    %1282 = vmatprep.mubr.bf16.mxu0 0
    %1283 = vmatmul.mubr.bf16.gmra.mxu0 %v1208
    %v1284 = vpop.f32.mrf.mxu0
    %v1285 = vadd.f32 0.0, %v1284
    %v1286 = vpop.f32.mrf.mxu0
    %v1287 = vpop.f32.mrf.mxu0
    %v1288 = vadd.f32 0.0, %v1287
    %v1289 = vpop.f32.mrf.mxu0
    %1290 = vdwg.mxu0
    %v1291 = vadd.f32 %v1114, %v1245
    %v1292 = vadd.f32 %v1115, %v1248
    %v1293 = vadd.f32 %v1116, %v1253
    %v1294 = vadd.f32 %v1117, %v1256
    %v1295 = vadd.f32 %v1118, %v1261
    %v1296 = vadd.f32 %v1119, %v1264
    %v1297 = vadd.f32 %v1120, %v1269
    %v1298 = vadd.f32 %v1121, %v1272
    %v1299 = vadd.f32 %v1122, %v1277
    %v1300 = vadd.f32 %v1123, %v1280
    %v1301 = vadd.f32 %v1124, %v1285
    %v1302 = vadd.f32 %v1125, %v1288
    %v1303 = vpack.c.bf16 %v620, %v619
    %v1304 = vpack.c.bf16 %v622, %v621
    %v1305 = vpack.c.bf16 %v624, %v623
    %v1306 = vpack.c.bf16 %v626, %v625
    %v1307 = vpack.c.bf16 %v628, %v627
    %v1308 = vpack.c.bf16 %v630, %v629
    %v1313 = vunpack.c.l.b16 %v660
    %v1314 = vunpack.c.l.b16 %v661
    %v1315 = vunpack.c.l.b16 %v662
    %v1316 = vunpack.c.l.b16 %v663
    %v1317 = vpack.c.b16 %v1314, %v1313
    %v1318 = vpack.c.b16 %v1316, %v1315
    %v1322 = vsel %vm750, %v1303, 0
    %v1325 = vsel %vm750, %v1304, 0
    %v1328 = vsel %vm750, %v1305, 0
    %v1331 = vsel %vm750, %v1306, 0
    %v1334 = vsel %vm750, %v1307, 0
    %v1337 = vsel %vm750, %v1308, 0
    %1339 = vmatprep.subr.bf16.mxu0 0
    %1340 = vmatpush1.bf16.msra.mxu0 0
    %1341 = vmatprep.subr.bf16.mxu0 0
    %1342 = vmatpush1.bf16.msra.mxu0 0
    %1343 = vmatprep.subr.bf16.mxu0 0
    %1344 = vmatpush1.bf16.msra.mxu0 0
    %1345 = vmatprep.subr.bf16.mxu0 0
    %1346 = vmatpush1.bf16.msra.mxu0 0
    %1347 = vmatprep.subr.bf16.mxu0 0
    %1348 = vmatpush1.bf16.msra.mxu0 0
    %1349 = vmatprep.subr.bf16.mxu0 0
    %1350 = vmatpush1.bf16.msra.mxu0 0
    %1351 = vmatprep.subr.bf16.mxu0 0
    %1352 = vmatpush1.bf16.msra.mxu0 %v1318
    %1353 = vmatprep.subr.bf16.mxu0 0
    %1354 = vmatpush1.bf16.msra.mxu0 %v1317
    %1355 = vmatprep.subr.bf16.mxu0 0
    %1356 = vmatpush2.bf16.msra.mxu0 0
    %1357 = vmatprep.subr.bf16.mxu0 0
    %1358 = vmatpush2.bf16.msra.mxu0 0
    %1359 = vmatprep.subr.bf16.mxu0 0
    %1360 = vmatpush2.bf16.msra.mxu0 0
    %1361 = vmatprep.subr.bf16.mxu0 0
    %1362 = vmatpush2.bf16.msra.mxu0 0
    %1363 = vmatprep.subr.bf16.mxu0 0
    %1364 = vmatpush2.bf16.msra.mxu0 0
    %1365 = vmatprep.subr.bf16.mxu0 0
    %1366 = vmatpush2.bf16.msra.mxu0 0
    %1367 = vmatprep.subr.bf16.mxu0 0
    %1368 = vmatpush2.bf16.msra.mxu0 0
    %1369 = vmatprep.subr.bf16.mxu0 0
    %1370 = vmatpush2.bf16.msra.mxu0 0
    %1371 = vmatprep.mubr.bf16.mxu0 0
    %1372 = vmatmul.mubr.bf16.gmra.mxu0 %v1322
    %v1373 = vpop.f32.mrf.mxu0
    %v1374 = vadd.f32 0.0, %v1373
    %v1375 = vpop.f32.mrf.mxu0
    %v1376 = vpop.f32.mrf.mxu0
    %v1377 = vadd.f32 0.0, %v1376
    %v1378 = vpop.f32.mrf.mxu0
    %1379 = vmatprep.mubr.bf16.mxu0 0
    %1380 = vmatmul.mubr.bf16.gmra.mxu0 %v1325
    %v1381 = vpop.f32.mrf.mxu0
    %v1382 = vadd.f32 0.0, %v1381
    %v1383 = vpop.f32.mrf.mxu0
    %v1384 = vpop.f32.mrf.mxu0
    %v1385 = vadd.f32 0.0, %v1384
    %v1386 = vpop.f32.mrf.mxu0
    %1387 = vmatprep.mubr.bf16.mxu0 0
    %1388 = vmatmul.mubr.bf16.gmra.mxu0 %v1328
    %v1389 = vpop.f32.mrf.mxu0
    %v1390 = vadd.f32 0.0, %v1389
    %v1391 = vpop.f32.mrf.mxu0
    %v1392 = vpop.f32.mrf.mxu0
    %v1393 = vadd.f32 0.0, %v1392
    %v1394 = vpop.f32.mrf.mxu0
    %1395 = vmatprep.mubr.bf16.mxu0 0
    %1396 = vmatmul.mubr.bf16.gmra.mxu0 %v1331
    %v1397 = vpop.f32.mrf.mxu0
    %v1398 = vadd.f32 0.0, %v1397
    %v1399 = vpop.f32.mrf.mxu0
    %v1400 = vpop.f32.mrf.mxu0
    %v1401 = vadd.f32 0.0, %v1400
    %v1402 = vpop.f32.mrf.mxu0
    %1403 = vmatprep.mubr.bf16.mxu0 0
    %1404 = vmatmul.mubr.bf16.gmra.mxu0 %v1334
    %v1405 = vpop.f32.mrf.mxu0
    %v1406 = vadd.f32 0.0, %v1405
    %v1407 = vpop.f32.mrf.mxu0
    %v1408 = vpop.f32.mrf.mxu0
    %v1409 = vadd.f32 0.0, %v1408
    %v1410 = vpop.f32.mrf.mxu0
    %1411 = vmatprep.mubr.bf16.mxu0 0
    %1412 = vmatmul.mubr.bf16.gmra.mxu0 %v1337
    %v1413 = vpop.f32.mrf.mxu0
    %v1414 = vadd.f32 0.0, %v1413
    %v1415 = vpop.f32.mrf.mxu0
    %v1416 = vpop.f32.mrf.mxu0
    %v1417 = vadd.f32 0.0, %v1416
    %v1418 = vpop.f32.mrf.mxu0
    %1419 = vdwg.mxu0
    %v1420 = vadd.f32 %v1291, %v1374
    %v1421 = vadd.f32 %v1292, %v1377
    %v1422 = vadd.f32 %v1293, %v1382
    %v1423 = vadd.f32 %v1294, %v1385
    %v1424 = vadd.f32 %v1295, %v1390
    %v1425 = vadd.f32 %v1296, %v1393
    %v1426 = vadd.f32 %v1297, %v1398
    %v1427 = vadd.f32 %v1298, %v1401
    %v1428 = vadd.f32 %v1299, %v1406
    %v1429 = vadd.f32 %v1300, %v1409
    %v1430 = vadd.f32 %v1301, %v1414
    %v1431 = vadd.f32 %v1302, %v1417
    %v1432 = vpack.c.bf16 %v632, %v631
    %v1433 = vpack.c.bf16 %v634, %v633
    %v1434 = vpack.c.bf16 %v636, %v635
    %v1435 = vpack.c.bf16 %v638, %v637
    %v1436 = vpack.c.bf16 %v640, %v639
    %v1437 = vpack.c.bf16 %v642, %v641
    %v1444 = vrot.slane %v1432, 2
    %v1445 = vrot.slane %v1433, 2
    %v1446 = vsel %vm726, %v1444, %v1445
    %v1447 = vrot.slane %v1434, 2
    %v1448 = vsel %vm726, %v1445, %v1447
    %v1449 = vrot.slane %v1435, 2
    %v1450 = vsel %vm726, %v1447, %v1449
    %v1451 = vrot.slane %v1436, 2
    %v1452 = vsel %vm726, %v1449, %v1451
    %v1453 = vrot.slane %v1437, 2
    %v1454 = vsel %vm726, %v1451, %v1453
    %v1459 = vunpack.c.l.b16 %v664
    %v1460 = vunpack.c.l.b16 %v665
    %v1461 = vunpack.c.l.b16 %v666
    %v1462 = vunpack.c.l.b16 %v667
    %v1463 = vpack.c.b16 %v1460, %v1459
    %v1464 = vpack.c.b16 %v1462, %v1461
    %v1468 = vsel %vm750, %v1446, 0
    %v1471 = vsel %vm750, %v1448, 0
    %v1474 = vsel %vm750, %v1450, 0
    %v1477 = vsel %vm750, %v1452, 0
    %v1480 = vsel %vm750, %v1454, 0
    %v1483 = vsel %vm750, %v1453, 0
    %1485 = vmatprep.subr.bf16.mxu0 0
    %1486 = vmatpush1.bf16.msra.mxu0 0
    %1487 = vmatprep.subr.bf16.mxu0 0
    %1488 = vmatpush1.bf16.msra.mxu0 0
    %1489 = vmatprep.subr.bf16.mxu0 0
    %1490 = vmatpush1.bf16.msra.mxu0 0
    %1491 = vmatprep.subr.bf16.mxu0 0
    %1492 = vmatpush1.bf16.msra.mxu0 0
    %1493 = vmatprep.subr.bf16.mxu0 0
    %1494 = vmatpush1.bf16.msra.mxu0 0
    %1495 = vmatprep.subr.bf16.mxu0 0
    %1496 = vmatpush1.bf16.msra.mxu0 0
    %1497 = vmatprep.subr.bf16.mxu0 0
    %1498 = vmatpush1.bf16.msra.mxu0 %v1464
    %1499 = vmatprep.subr.bf16.mxu0 0
    %1500 = vmatpush1.bf16.msra.mxu0 %v1463
    %1501 = vmatprep.subr.bf16.mxu0 0
    %1502 = vmatpush2.bf16.msra.mxu0 0
    %1503 = vmatprep.subr.bf16.mxu0 0
    %1504 = vmatpush2.bf16.msra.mxu0 0
    %1505 = vmatprep.subr.bf16.mxu0 0
    %1506 = vmatpush2.bf16.msra.mxu0 0
    %1507 = vmatprep.subr.bf16.mxu0 0
    %1508 = vmatpush2.bf16.msra.mxu0 0
    %1509 = vmatprep.subr.bf16.mxu0 0
    %1510 = vmatpush2.bf16.msra.mxu0 0
    %1511 = vmatprep.subr.bf16.mxu0 0
    %1512 = vmatpush2.bf16.msra.mxu0 0
    %1513 = vmatprep.subr.bf16.mxu0 0
    %1514 = vmatpush2.bf16.msra.mxu0 0
    %1515 = vmatprep.subr.bf16.mxu0 0
    %1516 = vmatpush2.bf16.msra.mxu0 0
    %1517 = vmatprep.mubr.bf16.mxu0 0
    %1518 = vmatmul.mubr.bf16.gmra.mxu0 %v1468
    %v1519 = vpop.f32.mrf.mxu0
    %v1520 = vadd.f32 0.0, %v1519
    %v1521 = vpop.f32.mrf.mxu0
    %v1522 = vpop.f32.mrf.mxu0
    %v1523 = vadd.f32 0.0, %v1522
    %v1524 = vpop.f32.mrf.mxu0
    %1525 = vmatprep.mubr.bf16.mxu0 0
    %1526 = vmatmul.mubr.bf16.gmra.mxu0 %v1471
    %v1527 = vpop.f32.mrf.mxu0
    %v1528 = vadd.f32 0.0, %v1527
    %v1529 = vpop.f32.mrf.mxu0
    %v1530 = vpop.f32.mrf.mxu0
    %v1531 = vadd.f32 0.0, %v1530
    %v1532 = vpop.f32.mrf.mxu0
    %1533 = vmatprep.mubr.bf16.mxu0 0
    %1534 = vmatmul.mubr.bf16.gmra.mxu0 %v1474
    %v1535 = vpop.f32.mrf.mxu0
    %v1536 = vadd.f32 0.0, %v1535
    %v1537 = vpop.f32.mrf.mxu0
    %v1538 = vpop.f32.mrf.mxu0
    %v1539 = vadd.f32 0.0, %v1538
    %v1540 = vpop.f32.mrf.mxu0
    %1541 = vmatprep.mubr.bf16.mxu0 0
    %1542 = vmatmul.mubr.bf16.gmra.mxu0 %v1477
    %v1543 = vpop.f32.mrf.mxu0
    %v1544 = vadd.f32 0.0, %v1543
    %v1545 = vpop.f32.mrf.mxu0
    %v1546 = vpop.f32.mrf.mxu0
    %v1547 = vadd.f32 0.0, %v1546
    %v1548 = vpop.f32.mrf.mxu0
    %1549 = vmatprep.mubr.bf16.mxu0 0
    %1550 = vmatmul.mubr.bf16.gmra.mxu0 %v1480
    %v1551 = vpop.f32.mrf.mxu0
    %v1552 = vadd.f32 0.0, %v1551
    %v1553 = vpop.f32.mrf.mxu0
    %v1554 = vpop.f32.mrf.mxu0
    %v1555 = vadd.f32 0.0, %v1554
    %v1556 = vpop.f32.mrf.mxu0
    %1557 = vmatprep.mubr.bf16.mxu0 0
    %1558 = vmatmul.mubr.bf16.gmra.mxu0 %v1483
    %v1559 = vpop.f32.mrf.mxu0
    %v1560 = vadd.f32 0.0, %v1559
    %v1561 = vpop.f32.mrf.mxu0
    %v1562 = vpop.f32.mrf.mxu0
    %v1563 = vadd.f32 0.0, %v1562
    %v1564 = vpop.f32.mrf.mxu0
    %1565 = vdwg.mxu0
    %v1566 = vadd.f32 %v1420, %v1520
    %v1567 = vadd.f32 %v1421, %v1523
    %v1568 = vadd.f32 %v1422, %v1528
    %v1569 = vadd.f32 %v1423, %v1531
    %v1570 = vadd.f32 %v1424, %v1536
    %v1571 = vadd.f32 %v1425, %v1539
    %v1572 = vadd.f32 %v1426, %v1544
    %v1573 = vadd.f32 %v1427, %v1547
    %v1574 = vadd.f32 %v1428, %v1552
    %v1575 = vadd.f32 %v1429, %v1555
    %v1576 = vadd.f32 %v1430, %v1560
    %v1577 = vadd.f32 %v1431, %v1563
    %v1578 = vshrl.u32 %v1303, 16
    %v1580 = vshll.u32 %v1303, 16
    %v1582 = vrot.slane %v1580, 1
    %v1583 = vor.u32 %v1578, %v1582
    %v1584 = vshll.u32 %v1304, 16
    %v1586 = vrot.slane %v1584, 1
    %v1587 = vsel %vm961, %v1583, %v1586
    %v1588 = vshrl.u32 %v1304, 16
    %v1590 = vor.u32 %v1588, %v1586
    %v1591 = vshll.u32 %v1305, 16
    %v1593 = vrot.slane %v1591, 1
    %v1594 = vsel %vm961, %v1590, %v1593
    %v1595 = vshrl.u32 %v1305, 16
    %v1597 = vor.u32 %v1595, %v1593
    %v1598 = vshll.u32 %v1306, 16
    %v1600 = vrot.slane %v1598, 1
    %v1601 = vsel %vm961, %v1597, %v1600
    %v1602 = vshrl.u32 %v1306, 16
    %v1604 = vor.u32 %v1602, %v1600
    %v1605 = vshll.u32 %v1307, 16
    %v1607 = vrot.slane %v1605, 1
    %v1608 = vsel %vm961, %v1604, %v1607
    %v1609 = vshrl.u32 %v1307, 16
    %v1611 = vor.u32 %v1609, %v1607
    %v1612 = vshll.u32 %v1308, 16
    %v1614 = vrot.slane %v1612, 1
    %v1615 = vsel %vm961, %v1611, %v1614
    %v1616 = vshrl.u32 %v1308, 16
    %v1618 = vor.u32 %v1616, %v1614
    %v1623 = vunpack.c.l.b16 %v668
    %v1624 = vunpack.c.l.b16 %v669
    %v1625 = vunpack.c.l.b16 %v670
    %v1626 = vunpack.c.l.b16 %v671
    %v1627 = vpack.c.b16 %v1624, %v1623
    %v1628 = vpack.c.b16 %v1626, %v1625
    %v1632 = vsel %vm750, %v1587, 0
    %v1635 = vsel %vm750, %v1594, 0
    %v1638 = vsel %vm750, %v1601, 0
    %v1641 = vsel %vm750, %v1608, 0
    %v1644 = vsel %vm750, %v1615, 0
    %v1647 = vsel %vm750, %v1618, 0
    %1649 = vmatprep.subr.bf16.mxu0 0
    %1650 = vmatpush1.bf16.msra.mxu0 0
    %1651 = vmatprep.subr.bf16.mxu0 0
    %1652 = vmatpush1.bf16.msra.mxu0 0
    %1653 = vmatprep.subr.bf16.mxu0 0
    %1654 = vmatpush1.bf16.msra.mxu0 0
    %1655 = vmatprep.subr.bf16.mxu0 0
    %1656 = vmatpush1.bf16.msra.mxu0 0
    %1657 = vmatprep.subr.bf16.mxu0 0
    %1658 = vmatpush1.bf16.msra.mxu0 0
    %1659 = vmatprep.subr.bf16.mxu0 0
    %1660 = vmatpush1.bf16.msra.mxu0 0
    %1661 = vmatprep.subr.bf16.mxu0 0
    %1662 = vmatpush1.bf16.msra.mxu0 %v1628
    %1663 = vmatprep.subr.bf16.mxu0 0
    %1664 = vmatpush1.bf16.msra.mxu0 %v1627
    %1665 = vmatprep.subr.bf16.mxu0 0
    %1666 = vmatpush2.bf16.msra.mxu0 0
    %1667 = vmatprep.subr.bf16.mxu0 0
    %1668 = vmatpush2.bf16.msra.mxu0 0
    %1669 = vmatprep.subr.bf16.mxu0 0
    %1670 = vmatpush2.bf16.msra.mxu0 0
    %1671 = vmatprep.subr.bf16.mxu0 0
    %1672 = vmatpush2.bf16.msra.mxu0 0
    %1673 = vmatprep.subr.bf16.mxu0 0
    %1674 = vmatpush2.bf16.msra.mxu0 0
    %1675 = vmatprep.subr.bf16.mxu0 0
    %1676 = vmatpush2.bf16.msra.mxu0 0
    %1677 = vmatprep.subr.bf16.mxu0 0
    %1678 = vmatpush2.bf16.msra.mxu0 0
    %1679 = vmatprep.subr.bf16.mxu0 0
    %1680 = vmatpush2.bf16.msra.mxu0 0
    %1681 = vmatprep.mubr.bf16.mxu0 0
    %1682 = vmatmul.mubr.bf16.gmra.mxu0 %v1632
    %v1683 = vpop.f32.mrf.mxu0
    %v1684 = vadd.f32 0.0, %v1683
    %v1685 = vpop.f32.mrf.mxu0
    %v1686 = vpop.f32.mrf.mxu0
    %v1687 = vadd.f32 0.0, %v1686
    %v1688 = vpop.f32.mrf.mxu0
    %1689 = vmatprep.mubr.bf16.mxu0 0
    %1690 = vmatmul.mubr.bf16.gmra.mxu0 %v1635
    %v1691 = vpop.f32.mrf.mxu0
    %v1692 = vadd.f32 0.0, %v1691
    %v1693 = vpop.f32.mrf.mxu0
    %v1694 = vpop.f32.mrf.mxu0
    %v1695 = vadd.f32 0.0, %v1694
    %v1696 = vpop.f32.mrf.mxu0
    %1697 = vmatprep.mubr.bf16.mxu0 0
    %1698 = vmatmul.mubr.bf16.gmra.mxu0 %v1638
    %v1699 = vpop.f32.mrf.mxu0
    %v1700 = vadd.f32 0.0, %v1699
    %v1701 = vpop.f32.mrf.mxu0
    %v1702 = vpop.f32.mrf.mxu0
    %v1703 = vadd.f32 0.0, %v1702
    %v1704 = vpop.f32.mrf.mxu0
    %1705 = vmatprep.mubr.bf16.mxu0 0
    %1706 = vmatmul.mubr.bf16.gmra.mxu0 %v1641
    %v1707 = vpop.f32.mrf.mxu0
    %v1708 = vadd.f32 0.0, %v1707
    %v1709 = vpop.f32.mrf.mxu0
    %v1710 = vpop.f32.mrf.mxu0
    %v1711 = vadd.f32 0.0, %v1710
    %v1712 = vpop.f32.mrf.mxu0
    %1713 = vmatprep.mubr.bf16.mxu0 0
    %1714 = vmatmul.mubr.bf16.gmra.mxu0 %v1644
    %v1715 = vpop.f32.mrf.mxu0
    %v1716 = vadd.f32 0.0, %v1715
    %v1717 = vpop.f32.mrf.mxu0
    %v1718 = vpop.f32.mrf.mxu0
    %v1719 = vadd.f32 0.0, %v1718
    %v1720 = vpop.f32.mrf.mxu0
    %1721 = vmatprep.mubr.bf16.mxu0 0
    %1722 = vmatmul.mubr.bf16.gmra.mxu0 %v1647
    %v1723 = vpop.f32.mrf.mxu0
    %v1724 = vadd.f32 0.0, %v1723
    %v1725 = vpop.f32.mrf.mxu0
    %v1726 = vpop.f32.mrf.mxu0
    %v1727 = vadd.f32 0.0, %v1726
    %v1728 = vpop.f32.mrf.mxu0
    %1729 = vdwg.mxu0
    %v1730 = vadd.f32 %v1566, %v1684
    %v1731 = vadd.f32 %v1567, %v1687
    %v1732 = vadd.f32 %v1568, %v1692
    %v1733 = vadd.f32 %v1569, %v1695
    %v1734 = vadd.f32 %v1570, %v1700
    %v1735 = vadd.f32 %v1571, %v1703
    %v1736 = vadd.f32 %v1572, %v1708
    %v1737 = vadd.f32 %v1573, %v1711
    %v1738 = vadd.f32 %v1574, %v1716
    %v1739 = vadd.f32 %v1575, %v1719
    %v1740 = vadd.f32 %v1576, %v1724
    %v1741 = vadd.f32 %v1577, %v1727
    %v1743 = vshrl.u32 %v1432, 16
    %v1745 = vrot.slane %v1743, 2
    %v1746 = vshll.u32 %v1432, 16
    %v1748 = vrot.slane %v1746, 3
    %v1749 = vor.u32 %v1745, %v1748
    %v1751 = vshrl.u32 %v1433, 16
    %v1753 = vrot.slane %v1751, 2
    %v1754 = vshll.u32 %v1433, 16
    %v1756 = vrot.slane %v1754, 3
    %v1757 = vor.u32 %v1753, %v1756
    %v1758 = vsel %vm1126, %v1749, %v1757
    %v1760 = vshrl.u32 %v1434, 16
    %v1762 = vrot.slane %v1760, 2
    %v1763 = vshll.u32 %v1434, 16
    %v1765 = vrot.slane %v1763, 3
    %v1766 = vor.u32 %v1762, %v1765
    %v1767 = vsel %vm1126, %v1757, %v1766
    %v1769 = vshrl.u32 %v1435, 16
    %v1771 = vrot.slane %v1769, 2
    %v1772 = vshll.u32 %v1435, 16
    %v1774 = vrot.slane %v1772, 3
    %v1775 = vor.u32 %v1771, %v1774
    %v1776 = vsel %vm1126, %v1766, %v1775
    %v1778 = vshrl.u32 %v1436, 16
    %v1780 = vrot.slane %v1778, 2
    %v1781 = vshll.u32 %v1436, 16
    %v1783 = vrot.slane %v1781, 3
    %v1784 = vor.u32 %v1780, %v1783
    %v1785 = vsel %vm1126, %v1775, %v1784
    %v1787 = vshrl.u32 %v1437, 16
    %v1789 = vrot.slane %v1787, 2
    %v1790 = vshll.u32 %v1437, 16
    %v1792 = vrot.slane %v1790, 3
    %v1793 = vor.u32 %v1789, %v1792
    %v1794 = vsel %vm1126, %v1784, %v1793
    %v1799 = vunpack.c.l.b16 %v672
    %v1800 = vunpack.c.l.b16 %v673
    %v1801 = vunpack.c.l.b16 %v674
    %v1802 = vunpack.c.l.b16 %v675
    %v1803 = vpack.c.b16 %v1800, %v1799
    %v1804 = vpack.c.b16 %v1802, %v1801
    %v1808 = vsel %vm750, %v1758, 0
    %v1811 = vsel %vm750, %v1767, 0
    %v1814 = vsel %vm750, %v1776, 0
    %v1817 = vsel %vm750, %v1785, 0
    %v1820 = vsel %vm750, %v1794, 0
    %v1823 = vsel %vm750, %v1793, 0
    %1825 = vmatprep.subr.bf16.mxu0 0
    %1826 = vmatpush1.bf16.msra.mxu0 0
    %1827 = vmatprep.subr.bf16.mxu0 0
    %1828 = vmatpush1.bf16.msra.mxu0 0
    %1829 = vmatprep.subr.bf16.mxu0 0
    %1830 = vmatpush1.bf16.msra.mxu0 0
    %1831 = vmatprep.subr.bf16.mxu0 0
    %1832 = vmatpush1.bf16.msra.mxu0 0
    %1833 = vmatprep.subr.bf16.mxu0 0
    %1834 = vmatpush1.bf16.msra.mxu0 0
    %1835 = vmatprep.subr.bf16.mxu0 0
    %1836 = vmatpush1.bf16.msra.mxu0 0
    %1837 = vmatprep.subr.bf16.mxu0 0
    %1838 = vmatpush1.bf16.msra.mxu0 %v1804
    %1839 = vmatprep.subr.bf16.mxu0 0
    %1840 = vmatpush1.bf16.msra.mxu0 %v1803
    %1841 = vmatprep.subr.bf16.mxu0 0
    %1842 = vmatpush2.bf16.msra.mxu0 0
    %1843 = vmatprep.subr.bf16.mxu0 0
    %1844 = vmatpush2.bf16.msra.mxu0 0
    %1845 = vmatprep.subr.bf16.mxu0 0
    %1846 = vmatpush2.bf16.msra.mxu0 0
    %1847 = vmatprep.subr.bf16.mxu0 0
    %1848 = vmatpush2.bf16.msra.mxu0 0
    %1849 = vmatprep.subr.bf16.mxu0 0
    %1850 = vmatpush2.bf16.msra.mxu0 0
    %1851 = vmatprep.subr.bf16.mxu0 0
    %1852 = vmatpush2.bf16.msra.mxu0 0
    %1853 = vmatprep.subr.bf16.mxu0 0
    %1854 = vmatpush2.bf16.msra.mxu0 0
    %1855 = vmatprep.subr.bf16.mxu0 0
    %1856 = vmatpush2.bf16.msra.mxu0 0
    %1857 = vmatprep.mubr.bf16.mxu0 0
    %1858 = vmatmul.mubr.bf16.gmra.mxu0 %v1808
    %v1859 = vpop.f32.mrf.mxu0
    %v1860 = vadd.f32 0.0, %v1859
    %v1861 = vpop.f32.mrf.mxu0
    %v1862 = vpop.f32.mrf.mxu0
    %v1863 = vadd.f32 0.0, %v1862
    %v1864 = vpop.f32.mrf.mxu0
    %1865 = vmatprep.mubr.bf16.mxu0 0
    %1866 = vmatmul.mubr.bf16.gmra.mxu0 %v1811
    %v1867 = vpop.f32.mrf.mxu0
    %v1868 = vadd.f32 0.0, %v1867
    %v1869 = vpop.f32.mrf.mxu0
    %v1870 = vpop.f32.mrf.mxu0
    %v1871 = vadd.f32 0.0, %v1870
    %v1872 = vpop.f32.mrf.mxu0
    %1873 = vmatprep.mubr.bf16.mxu0 0
    %1874 = vmatmul.mubr.bf16.gmra.mxu0 %v1814
    %v1875 = vpop.f32.mrf.mxu0
    %v1876 = vadd.f32 0.0, %v1875
    %v1877 = vpop.f32.mrf.mxu0
    %v1878 = vpop.f32.mrf.mxu0
    %v1879 = vadd.f32 0.0, %v1878
    %v1880 = vpop.f32.mrf.mxu0
    %1881 = vmatprep.mubr.bf16.mxu0 0
    %1882 = vmatmul.mubr.bf16.gmra.mxu0 %v1817
    %v1883 = vpop.f32.mrf.mxu0
    %v1884 = vadd.f32 0.0, %v1883
    %v1885 = vpop.f32.mrf.mxu0
    %v1886 = vpop.f32.mrf.mxu0
    %v1887 = vadd.f32 0.0, %v1886
    %v1888 = vpop.f32.mrf.mxu0
    %1889 = vmatprep.mubr.bf16.mxu0 0
    %1890 = vmatmul.mubr.bf16.gmra.mxu0 %v1820
    %v1891 = vpop.f32.mrf.mxu0
    %v1892 = vadd.f32 0.0, %v1891
    %v1893 = vpop.f32.mrf.mxu0
    %v1894 = vpop.f32.mrf.mxu0
    %v1895 = vadd.f32 0.0, %v1894
    %v1896 = vpop.f32.mrf.mxu0
    %1897 = vmatprep.mubr.bf16.mxu0 0
    %1898 = vmatmul.mubr.bf16.gmra.mxu0 %v1823
    %v1899 = vpop.f32.mrf.mxu0
    %v1900 = vadd.f32 0.0, %v1899
    %v1901 = vpop.f32.mrf.mxu0
    %v1902 = vpop.f32.mrf.mxu0
    %v1903 = vadd.f32 0.0, %v1902
    %v1904 = vpop.f32.mrf.mxu0
    %1905 = vdwg.mxu0
    %v1906 = vadd.f32 %v1730, %v1860
    %v1907 = vadd.f32 %v1731, %v1863
    %v1908 = vadd.f32 %v1732, %v1868
    %v1909 = vadd.f32 %v1733, %v1871
    %v1910 = vadd.f32 %v1734, %v1876
    %v1911 = vadd.f32 %v1735, %v1879
    %v1912 = vadd.f32 %v1736, %v1884
    %v1913 = vadd.f32 %v1737, %v1887
    %v1914 = vadd.f32 %v1738, %v1892
    %v1915 = vadd.f32 %v1739, %v1895
    %v1916 = vadd.f32 %v1740, %v1900
    %v1917 = vadd.f32 %v1741, %v1903
    %v1918 = vpack.c.bf16 %v596, %v595
    %v1919 = vpack.c.bf16 %v598, %v597
    %v1920 = vpack.c.bf16 %v600, %v599
    %v1921 = vpack.c.bf16 %v602, %v601
    %v1922 = vpack.c.bf16 %v604, %v603
    %v1923 = vpack.c.bf16 %v606, %v605
    %vm1930 = vcmask 1046528
    %v1931 = vrot.slane %v1918, 1
    %v1932 = vrot.slane %v1919, 1
    %v1933 = vsel %vm1930, %v1931, %v1932
    %v1934 = vrot.slane %v1920, 1
    %v1935 = vsel %vm1930, %v1932, %v1934
    %v1936 = vrot.slane %v1921, 1
    %v1937 = vsel %vm1930, %v1934, %v1936
    %v1938 = vrot.slane %v1922, 1
    %v1939 = vsel %vm1930, %v1936, %v1938
    %v1940 = vrot.slane %v1923, 1
    %v1941 = vsel %vm1930, %v1938, %v1940
    %v1946 = vunpack.c.l.b16 %v676
    %v1947 = vunpack.c.l.b16 %v677
    %v1948 = vunpack.c.l.b16 %v678
    %v1949 = vunpack.c.l.b16 %v679
    %v1950 = vpack.c.b16 %v1947, %v1946
    %v1951 = vpack.c.b16 %v1949, %v1948
    %v1955 = vsel %vm750, %v1933, 0
    %v1958 = vsel %vm750, %v1935, 0
    %v1961 = vsel %vm750, %v1937, 0
    %v1964 = vsel %vm750, %v1939, 0
    %v1967 = vsel %vm750, %v1941, 0
    %v1970 = vsel %vm750, %v1940, 0
    %1972 = vmatprep.subr.bf16.mxu0 0
    %1973 = vmatpush1.bf16.msra.mxu0 0
    %1974 = vmatprep.subr.bf16.mxu0 0
    %1975 = vmatpush1.bf16.msra.mxu0 0
    %1976 = vmatprep.subr.bf16.mxu0 0
    %1977 = vmatpush1.bf16.msra.mxu0 0
    %1978 = vmatprep.subr.bf16.mxu0 0
    %1979 = vmatpush1.bf16.msra.mxu0 0
    %1980 = vmatprep.subr.bf16.mxu0 0
    %1981 = vmatpush1.bf16.msra.mxu0 0
    %1982 = vmatprep.subr.bf16.mxu0 0
    %1983 = vmatpush1.bf16.msra.mxu0 0
    %1984 = vmatprep.subr.bf16.mxu0 0
    %1985 = vmatpush1.bf16.msra.mxu0 %v1951
    %1986 = vmatprep.subr.bf16.mxu0 0
    %1987 = vmatpush1.bf16.msra.mxu0 %v1950
    %1988 = vmatprep.subr.bf16.mxu0 0
    %1989 = vmatpush2.bf16.msra.mxu0 0
    %1990 = vmatprep.subr.bf16.mxu0 0
    %1991 = vmatpush2.bf16.msra.mxu0 0
    %1992 = vmatprep.subr.bf16.mxu0 0
    %1993 = vmatpush2.bf16.msra.mxu0 0
    %1994 = vmatprep.subr.bf16.mxu0 0
    %1995 = vmatpush2.bf16.msra.mxu0 0
    %1996 = vmatprep.subr.bf16.mxu0 0
    %1997 = vmatpush2.bf16.msra.mxu0 0
    %1998 = vmatprep.subr.bf16.mxu0 0
    %1999 = vmatpush2.bf16.msra.mxu0 0
    %2000 = vmatprep.subr.bf16.mxu0 0
    %2001 = vmatpush2.bf16.msra.mxu0 0
    %2002 = vmatprep.subr.bf16.mxu0 0
    %2003 = vmatpush2.bf16.msra.mxu0 0
    %2004 = vmatprep.mubr.bf16.mxu0 0
    %2005 = vmatmul.mubr.bf16.gmra.mxu0 %v1955
    %v2006 = vpop.f32.mrf.mxu0
    %v2007 = vadd.f32 0.0, %v2006
    %v2008 = vpop.f32.mrf.mxu0
    %v2009 = vpop.f32.mrf.mxu0
    %v2010 = vadd.f32 0.0, %v2009
    %v2011 = vpop.f32.mrf.mxu0
    %2012 = vmatprep.mubr.bf16.mxu0 0
    %2013 = vmatmul.mubr.bf16.gmra.mxu0 %v1958
    %v2014 = vpop.f32.mrf.mxu0
    %v2015 = vadd.f32 0.0, %v2014
    %v2016 = vpop.f32.mrf.mxu0
    %v2017 = vpop.f32.mrf.mxu0
    %v2018 = vadd.f32 0.0, %v2017
    %v2019 = vpop.f32.mrf.mxu0
    %2020 = vmatprep.mubr.bf16.mxu0 0
    %2021 = vmatmul.mubr.bf16.gmra.mxu0 %v1961
    %v2022 = vpop.f32.mrf.mxu0
    %v2023 = vadd.f32 0.0, %v2022
    %v2024 = vpop.f32.mrf.mxu0
    %v2025 = vpop.f32.mrf.mxu0
    %v2026 = vadd.f32 0.0, %v2025
    %v2027 = vpop.f32.mrf.mxu0
    %2028 = vmatprep.mubr.bf16.mxu0 0
    %2029 = vmatmul.mubr.bf16.gmra.mxu0 %v1964
    %v2030 = vpop.f32.mrf.mxu0
    %v2031 = vadd.f32 0.0, %v2030
    %v2032 = vpop.f32.mrf.mxu0
    %v2033 = vpop.f32.mrf.mxu0
    %v2034 = vadd.f32 0.0, %v2033
    %v2035 = vpop.f32.mrf.mxu0
    %2036 = vmatprep.mubr.bf16.mxu0 0
    %2037 = vmatmul.mubr.bf16.gmra.mxu0 %v1967
    %v2038 = vpop.f32.mrf.mxu0
    %v2039 = vadd.f32 0.0, %v2038
    %v2040 = vpop.f32.mrf.mxu0
    %v2041 = vpop.f32.mrf.mxu0
    %v2042 = vadd.f32 0.0, %v2041
    %v2043 = vpop.f32.mrf.mxu0
    %2044 = vmatprep.mubr.bf16.mxu0 0
    %2045 = vmatmul.mubr.bf16.gmra.mxu0 %v1970
    %v2046 = vpop.f32.mrf.mxu0
    %v2047 = vadd.f32 0.0, %v2046
    %v2048 = vpop.f32.mrf.mxu0
    %v2049 = vpop.f32.mrf.mxu0
    %v2050 = vadd.f32 0.0, %v2049
    %v2051 = vpop.f32.mrf.mxu0
    %2052 = vdwg.mxu0
    %v2053 = vadd.f32 %v1906, %v2007
    %v2054 = vadd.f32 %v1907, %v2010
    %v2055 = vadd.f32 %v1908, %v2015
    %v2056 = vadd.f32 %v1909, %v2018
    %v2057 = vadd.f32 %v1910, %v2023
    %v2058 = vadd.f32 %v1911, %v2026
    %v2059 = vadd.f32 %v1912, %v2031
    %v2060 = vadd.f32 %v1913, %v2034
    %v2061 = vadd.f32 %v1914, %v2039
    %v2062 = vadd.f32 %v1915, %v2042
    %v2063 = vadd.f32 %v1916, %v2047
    %v2064 = vadd.f32 %v1917, %v2050
    %v2065 = vpack.c.bf16 %v608, %v607
    %v2066 = vpack.c.bf16 %v610, %v609
    %v2067 = vpack.c.bf16 %v612, %v611
    %v2068 = vpack.c.bf16 %v614, %v613
    %v2069 = vpack.c.bf16 %v616, %v615
    %v2070 = vpack.c.bf16 %v618, %v617
    %vm2077 = vcmask 1044480
    %v2078 = vrot.slane %v2065, 3
    %v2079 = vrot.slane %v2066, 3
    %v2080 = vsel %vm2077, %v2078, %v2079
    %v2081 = vrot.slane %v2067, 3
    %v2082 = vsel %vm2077, %v2079, %v2081
    %v2083 = vrot.slane %v2068, 3
    %v2084 = vsel %vm2077, %v2081, %v2083
    %v2085 = vrot.slane %v2069, 3
    %v2086 = vsel %vm2077, %v2083, %v2085
    %v2087 = vrot.slane %v2070, 3
    %v2088 = vsel %vm2077, %v2085, %v2087
    %v2093 = vunpack.c.l.b16 %v680
    %v2094 = vunpack.c.l.b16 %v681
    %v2095 = vunpack.c.l.b16 %v682
    %v2096 = vunpack.c.l.b16 %v683
    %v2097 = vpack.c.b16 %v2094, %v2093
    %v2098 = vpack.c.b16 %v2096, %v2095
    %v2102 = vsel %vm750, %v2080, 0
    %v2105 = vsel %vm750, %v2082, 0
    %v2108 = vsel %vm750, %v2084, 0
    %v2111 = vsel %vm750, %v2086, 0
    %v2114 = vsel %vm750, %v2088, 0
    %v2117 = vsel %vm750, %v2087, 0
    %2119 = vmatprep.subr.bf16.mxu0 0
    %2120 = vmatpush1.bf16.msra.mxu0 0
    %2121 = vmatprep.subr.bf16.mxu0 0
    %2122 = vmatpush1.bf16.msra.mxu0 0
    %2123 = vmatprep.subr.bf16.mxu0 0
    %2124 = vmatpush1.bf16.msra.mxu0 0
    %2125 = vmatprep.subr.bf16.mxu0 0
    %2126 = vmatpush1.bf16.msra.mxu0 0
    %2127 = vmatprep.subr.bf16.mxu0 0
    %2128 = vmatpush1.bf16.msra.mxu0 0
    %2129 = vmatprep.subr.bf16.mxu0 0
    %2130 = vmatpush1.bf16.msra.mxu0 0
    %2131 = vmatprep.subr.bf16.mxu0 0
    %2132 = vmatpush1.bf16.msra.mxu0 %v2098
    %2133 = vmatprep.subr.bf16.mxu0 0
    %2134 = vmatpush1.bf16.msra.mxu0 %v2097
    %2135 = vmatprep.subr.bf16.mxu0 0
    %2136 = vmatpush2.bf16.msra.mxu0 0
    %2137 = vmatprep.subr.bf16.mxu0 0
    %2138 = vmatpush2.bf16.msra.mxu0 0
    %2139 = vmatprep.subr.bf16.mxu0 0
    %2140 = vmatpush2.bf16.msra.mxu0 0
    %2141 = vmatprep.subr.bf16.mxu0 0
    %2142 = vmatpush2.bf16.msra.mxu0 0
    %2143 = vmatprep.subr.bf16.mxu0 0
    %2144 = vmatpush2.bf16.msra.mxu0 0
    %2145 = vmatprep.subr.bf16.mxu0 0
    %2146 = vmatpush2.bf16.msra.mxu0 0
    %2147 = vmatprep.subr.bf16.mxu0 0
    %2148 = vmatpush2.bf16.msra.mxu0 0
    %2149 = vmatprep.subr.bf16.mxu0 0
    %2150 = vmatpush2.bf16.msra.mxu0 0
    %2151 = vmatprep.mubr.bf16.mxu0 0
    %2152 = vmatmul.mubr.bf16.gmra.mxu0 %v2102
    %v2153 = vpop.f32.mrf.mxu0
    %v2154 = vadd.f32 0.0, %v2153
    %v2155 = vpop.f32.mrf.mxu0
    %v2156 = vpop.f32.mrf.mxu0
    %v2157 = vadd.f32 0.0, %v2156
    %v2158 = vpop.f32.mrf.mxu0
    %2159 = vmatprep.mubr.bf16.mxu0 0
    %2160 = vmatmul.mubr.bf16.gmra.mxu0 %v2105
    %v2161 = vpop.f32.mrf.mxu0
    %v2162 = vadd.f32 0.0, %v2161
    %v2163 = vpop.f32.mrf.mxu0
    %v2164 = vpop.f32.mrf.mxu0
    %v2165 = vadd.f32 0.0, %v2164
    %v2166 = vpop.f32.mrf.mxu0
    %2167 = vmatprep.mubr.bf16.mxu0 0
    %2168 = vmatmul.mubr.bf16.gmra.mxu0 %v2108
    %v2169 = vpop.f32.mrf.mxu0
    %v2170 = vadd.f32 0.0, %v2169
    %v2171 = vpop.f32.mrf.mxu0
    %v2172 = vpop.f32.mrf.mxu0
    %v2173 = vadd.f32 0.0, %v2172
    %v2174 = vpop.f32.mrf.mxu0
    %2175 = vmatprep.mubr.bf16.mxu0 0
    %2176 = vmatmul.mubr.bf16.gmra.mxu0 %v2111
    %v2177 = vpop.f32.mrf.mxu0
    %v2178 = vadd.f32 0.0, %v2177
    %v2179 = vpop.f32.mrf.mxu0
    %v2180 = vpop.f32.mrf.mxu0
    %v2181 = vadd.f32 0.0, %v2180
    %v2182 = vpop.f32.mrf.mxu0
    %2183 = vmatprep.mubr.bf16.mxu0 0
    %2184 = vmatmul.mubr.bf16.gmra.mxu0 %v2114
    %v2185 = vpop.f32.mrf.mxu0
    %v2186 = vadd.f32 0.0, %v2185
    %v2187 = vpop.f32.mrf.mxu0
    %v2188 = vpop.f32.mrf.mxu0
    %v2189 = vadd.f32 0.0, %v2188
    %v2190 = vpop.f32.mrf.mxu0
    %2191 = vmatprep.mubr.bf16.mxu0 0
    %2192 = vmatmul.mubr.bf16.gmra.mxu0 %v2117
    %v2193 = vpop.f32.mrf.mxu0
    %v2194 = vadd.f32 0.0, %v2193
    %v2195 = vpop.f32.mrf.mxu0
    %v2196 = vpop.f32.mrf.mxu0
    %v2197 = vadd.f32 0.0, %v2196
    %v2198 = vpop.f32.mrf.mxu0
    %2199 = vdwg.mxu0
    %v2200 = vadd.f32 %v2053, %v2154
    %v2201 = vadd.f32 %v2054, %v2157
    %v2202 = vadd.f32 %v2055, %v2162
    %v2203 = vadd.f32 %v2056, %v2165
    %v2204 = vadd.f32 %v2057, %v2170
    %v2205 = vadd.f32 %v2058, %v2173
    %v2206 = vadd.f32 %v2059, %v2178
    %v2207 = vadd.f32 %v2060, %v2181
    %v2208 = vadd.f32 %v2061, %v2186
    %v2209 = vadd.f32 %v2062, %v2189
    %v2210 = vadd.f32 %v2063, %v2194
    %v2211 = vadd.f32 %v2064, %v2197
    %vm2212 = vsmask.f32 6400
    %v2214 = vshrl.u32 %v1918, 16
    %v2216 = vrot.slane %v2214, 1
    %v2217 = vshll.u32 %v1918, 16
    %v2219 = vrot.slane %v2217, 2
    %v2220 = vor.u32 %v2216, %v2219
    %v2222 = vshrl.u32 %v1919, 16
    %v2224 = vrot.slane %v2222, 1
    %v2225 = vshll.u32 %v1919, 16
    %v2227 = vrot.slane %v2225, 2
    %v2228 = vor.u32 %v2224, %v2227
    %v2229 = vsel %vm2212, %v2220, %v2228
    %v2231 = vshrl.u32 %v1920, 16
    %v2233 = vrot.slane %v2231, 1
    %v2234 = vshll.u32 %v1920, 16
    %v2236 = vrot.slane %v2234, 2
    %v2237 = vor.u32 %v2233, %v2236
    %v2238 = vsel %vm2212, %v2228, %v2237
    %v2240 = vshrl.u32 %v1921, 16
    %v2242 = vrot.slane %v2240, 1
    %v2243 = vshll.u32 %v1921, 16
    %v2245 = vrot.slane %v2243, 2
    %v2246 = vor.u32 %v2242, %v2245
    %v2247 = vsel %vm2212, %v2237, %v2246
    %v2249 = vshrl.u32 %v1922, 16
    %v2251 = vrot.slane %v2249, 1
    %v2252 = vshll.u32 %v1922, 16
    %v2254 = vrot.slane %v2252, 2
    %v2255 = vor.u32 %v2251, %v2254
    %v2256 = vsel %vm2212, %v2246, %v2255
    %v2258 = vshrl.u32 %v1923, 16
    %v2260 = vrot.slane %v2258, 1
    %v2261 = vshll.u32 %v1923, 16
    %v2263 = vrot.slane %v2261, 2
    %v2264 = vor.u32 %v2260, %v2263
    %v2265 = vsel %vm2212, %v2255, %v2264
    %v2270 = vunpack.c.l.b16 %v684
    %v2271 = vunpack.c.l.b16 %v685
    %v2272 = vunpack.c.l.b16 %v686
    %v2273 = vunpack.c.l.b16 %v687
    %v2274 = vpack.c.b16 %v2271, %v2270
    %v2275 = vpack.c.b16 %v2273, %v2272
    %v2279 = vsel %vm750, %v2229, 0
    %v2282 = vsel %vm750, %v2238, 0
    %v2285 = vsel %vm750, %v2247, 0
    %v2288 = vsel %vm750, %v2256, 0
    %v2291 = vsel %vm750, %v2265, 0
    %v2294 = vsel %vm750, %v2264, 0
    %2296 = vmatprep.subr.bf16.mxu0 0
    %2297 = vmatpush1.bf16.msra.mxu0 0
    %2298 = vmatprep.subr.bf16.mxu0 0
    %2299 = vmatpush1.bf16.msra.mxu0 0
    %2300 = vmatprep.subr.bf16.mxu0 0
    %2301 = vmatpush1.bf16.msra.mxu0 0
    %2302 = vmatprep.subr.bf16.mxu0 0
    %2303 = vmatpush1.bf16.msra.mxu0 0
    %2304 = vmatprep.subr.bf16.mxu0 0
    %2305 = vmatpush1.bf16.msra.mxu0 0
    %2306 = vmatprep.subr.bf16.mxu0 0
    %2307 = vmatpush1.bf16.msra.mxu0 0
    %2308 = vmatprep.subr.bf16.mxu0 0
    %2309 = vmatpush1.bf16.msra.mxu0 %v2275
    %2310 = vmatprep.subr.bf16.mxu0 0
    %2311 = vmatpush1.bf16.msra.mxu0 %v2274
    %2312 = vmatprep.subr.bf16.mxu0 0
    %2313 = vmatpush2.bf16.msra.mxu0 0
    %2314 = vmatprep.subr.bf16.mxu0 0
    %2315 = vmatpush2.bf16.msra.mxu0 0
    %2316 = vmatprep.subr.bf16.mxu0 0
    %2317 = vmatpush2.bf16.msra.mxu0 0
    %2318 = vmatprep.subr.bf16.mxu0 0
    %2319 = vmatpush2.bf16.msra.mxu0 0
    %2320 = vmatprep.subr.bf16.mxu0 0
    %2321 = vmatpush2.bf16.msra.mxu0 0
    %2322 = vmatprep.subr.bf16.mxu0 0
    %2323 = vmatpush2.bf16.msra.mxu0 0
    %2324 = vmatprep.subr.bf16.mxu0 0
    %2325 = vmatpush2.bf16.msra.mxu0 0
    %2326 = vmatprep.subr.bf16.mxu0 0
    %2327 = vmatpush2.bf16.msra.mxu0 0
    %2328 = vmatprep.mubr.bf16.mxu0 0
    %2329 = vmatmul.mubr.bf16.gmra.mxu0 %v2279
    %v2330 = vpop.f32.mrf.mxu0
    %v2331 = vadd.f32 0.0, %v2330
    %v2332 = vpop.f32.mrf.mxu0
    %v2333 = vpop.f32.mrf.mxu0
    %v2334 = vadd.f32 0.0, %v2333
    %v2335 = vpop.f32.mrf.mxu0
    %2336 = vmatprep.mubr.bf16.mxu0 0
    %2337 = vmatmul.mubr.bf16.gmra.mxu0 %v2282
    %v2338 = vpop.f32.mrf.mxu0
    %v2339 = vadd.f32 0.0, %v2338
    %v2340 = vpop.f32.mrf.mxu0
    %v2341 = vpop.f32.mrf.mxu0
    %v2342 = vadd.f32 0.0, %v2341
    %v2343 = vpop.f32.mrf.mxu0
    %2344 = vmatprep.mubr.bf16.mxu0 0
    %2345 = vmatmul.mubr.bf16.gmra.mxu0 %v2285
    %v2346 = vpop.f32.mrf.mxu0
    %v2347 = vadd.f32 0.0, %v2346
    %v2348 = vpop.f32.mrf.mxu0
    %v2349 = vpop.f32.mrf.mxu0
    %v2350 = vadd.f32 0.0, %v2349
    %v2351 = vpop.f32.mrf.mxu0
    %2352 = vmatprep.mubr.bf16.mxu0 0
    %2353 = vmatmul.mubr.bf16.gmra.mxu0 %v2288
    %v2354 = vpop.f32.mrf.mxu0
    %v2355 = vadd.f32 0.0, %v2354
    %v2356 = vpop.f32.mrf.mxu0
    %v2357 = vpop.f32.mrf.mxu0
    %v2358 = vadd.f32 0.0, %v2357
    %v2359 = vpop.f32.mrf.mxu0
    %2360 = vmatprep.mubr.bf16.mxu0 0
    %2361 = vmatmul.mubr.bf16.gmra.mxu0 %v2291
    %v2362 = vpop.f32.mrf.mxu0
    %v2363 = vadd.f32 0.0, %v2362
    %v2364 = vpop.f32.mrf.mxu0
    %v2365 = vpop.f32.mrf.mxu0
    %v2366 = vadd.f32 0.0, %v2365
    %v2367 = vpop.f32.mrf.mxu0
    %2368 = vmatprep.mubr.bf16.mxu0 0
    %2369 = vmatmul.mubr.bf16.gmra.mxu0 %v2294
    %v2370 = vpop.f32.mrf.mxu0
    %v2371 = vadd.f32 0.0, %v2370
    %v2372 = vpop.f32.mrf.mxu0
    %v2373 = vpop.f32.mrf.mxu0
    %v2374 = vadd.f32 0.0, %v2373
    %v2375 = vpop.f32.mrf.mxu0
    %2376 = vdwg.mxu0
    %v2377 = vadd.f32 %v2200, %v2331
    %v2378 = vadd.f32 %v2201, %v2334
    %v2379 = vadd.f32 %v2202, %v2339
    %v2380 = vadd.f32 %v2203, %v2342
    %v2381 = vadd.f32 %v2204, %v2347
    %v2382 = vadd.f32 %v2205, %v2350
    %v2383 = vadd.f32 %v2206, %v2355
    %v2384 = vadd.f32 %v2207, %v2358
    %v2385 = vadd.f32 %v2208, %v2363
    %v2386 = vadd.f32 %v2209, %v2366
    %v2387 = vadd.f32 %v2210, %v2371
    %v2388 = vadd.f32 %v2211, %v2374
    %vm2389 = vsmask.f32 4352
    %v2391 = vshrl.u32 %v2065, 16
    %v2393 = vrot.slane %v2391, 3
    %v2394 = vshll.u32 %v2065, 16
    %v2396 = vrot.slane %v2394, 4
    %v2397 = vor.u32 %v2393, %v2396
    %v2399 = vshrl.u32 %v2066, 16
    %v2401 = vrot.slane %v2399, 3
    %v2402 = vshll.u32 %v2066, 16
    %v2404 = vrot.slane %v2402, 4
    %v2405 = vor.u32 %v2401, %v2404
    %v2406 = vsel %vm2389, %v2397, %v2405
    %v2408 = vshrl.u32 %v2067, 16
    %v2410 = vrot.slane %v2408, 3
    %v2411 = vshll.u32 %v2067, 16
    %v2413 = vrot.slane %v2411, 4
    %v2414 = vor.u32 %v2410, %v2413
    %v2415 = vsel %vm2389, %v2405, %v2414
    %v2417 = vshrl.u32 %v2068, 16
    %v2419 = vrot.slane %v2417, 3
    %v2420 = vshll.u32 %v2068, 16
    %v2422 = vrot.slane %v2420, 4
    %v2423 = vor.u32 %v2419, %v2422
    %v2424 = vsel %vm2389, %v2414, %v2423
    %v2426 = vshrl.u32 %v2069, 16
    %v2428 = vrot.slane %v2426, 3
    %v2429 = vshll.u32 %v2069, 16
    %v2431 = vrot.slane %v2429, 4
    %v2432 = vor.u32 %v2428, %v2431
    %v2433 = vsel %vm2389, %v2423, %v2432
    %v2435 = vshrl.u32 %v2070, 16
    %v2437 = vrot.slane %v2435, 3
    %v2438 = vshll.u32 %v2070, 16
    %v2440 = vrot.slane %v2438, 4
    %v2441 = vor.u32 %v2437, %v2440
    %v2442 = vsel %vm2389, %v2432, %v2441
    %v2447 = vunpack.c.l.b16 %v688
    %v2448 = vunpack.c.l.b16 %v689
    %v2449 = vunpack.c.l.b16 %v690
    %v2450 = vunpack.c.l.b16 %v691
    %v2451 = vpack.c.b16 %v2448, %v2447
    %v2452 = vpack.c.b16 %v2450, %v2449
    %v2456 = vsel %vm750, %v2406, 0
    %v2459 = vsel %vm750, %v2415, 0
    %v2462 = vsel %vm750, %v2424, 0
    %v2465 = vsel %vm750, %v2433, 0
    %v2468 = vsel %vm750, %v2442, 0
    %v2471 = vsel %vm750, %v2441, 0
    %2473 = vmatprep.subr.bf16.mxu0 0
    %2474 = vmatpush1.bf16.msra.mxu0 0
    %2475 = vmatprep.subr.bf16.mxu0 0
    %2476 = vmatpush1.bf16.msra.mxu0 0
    %2477 = vmatprep.subr.bf16.mxu0 0
    %2478 = vmatpush1.bf16.msra.mxu0 0
    %2479 = vmatprep.subr.bf16.mxu0 0
    %2480 = vmatpush1.bf16.msra.mxu0 0
    %2481 = vmatprep.subr.bf16.mxu0 0
    %2482 = vmatpush1.bf16.msra.mxu0 0
    %2483 = vmatprep.subr.bf16.mxu0 0
    %2484 = vmatpush1.bf16.msra.mxu0 0
    %2485 = vmatprep.subr.bf16.mxu0 0
    %2486 = vmatpush1.bf16.msra.mxu0 %v2452
    %2487 = vmatprep.subr.bf16.mxu0 0
    %2488 = vmatpush1.bf16.msra.mxu0 %v2451
    %2489 = vmatprep.subr.bf16.mxu0 0
    %2490 = vmatpush2.bf16.msra.mxu0 0
    %2491 = vmatprep.subr.bf16.mxu0 0
    %2492 = vmatpush2.bf16.msra.mxu0 0
    %2493 = vmatprep.subr.bf16.mxu0 0
    %2494 = vmatpush2.bf16.msra.mxu0 0
    %2495 = vmatprep.subr.bf16.mxu0 0
    %2496 = vmatpush2.bf16.msra.mxu0 0
    %2497 = vmatprep.subr.bf16.mxu0 0
    %2498 = vmatpush2.bf16.msra.mxu0 0
    %2499 = vmatprep.subr.bf16.mxu0 0
    %2500 = vmatpush2.bf16.msra.mxu0 0
    %2501 = vmatprep.subr.bf16.mxu0 0
    %2502 = vmatpush2.bf16.msra.mxu0 0
    %2503 = vmatprep.subr.bf16.mxu0 0
    %2504 = vmatpush2.bf16.msra.mxu0 0
    %2505 = vmatprep.mubr.bf16.mxu0 0
    %2506 = vmatmul.mubr.bf16.gmra.mxu0 %v2456
    %v2507 = vpop.f32.mrf.mxu0
    %v2508 = vadd.f32 0.0, %v2507
    %v2509 = vpop.f32.mrf.mxu0
    %v2510 = vpop.f32.mrf.mxu0
    %v2511 = vadd.f32 0.0, %v2510
    %v2512 = vpop.f32.mrf.mxu0
    %2513 = vmatprep.mubr.bf16.mxu0 0
    %2514 = vmatmul.mubr.bf16.gmra.mxu0 %v2459
    %v2515 = vpop.f32.mrf.mxu0
    %v2516 = vadd.f32 0.0, %v2515
    %v2517 = vpop.f32.mrf.mxu0
    %v2518 = vpop.f32.mrf.mxu0
    %v2519 = vadd.f32 0.0, %v2518
    %v2520 = vpop.f32.mrf.mxu0
    %2521 = vmatprep.mubr.bf16.mxu0 0
    %2522 = vmatmul.mubr.bf16.gmra.mxu0 %v2462
    %v2523 = vpop.f32.mrf.mxu0
    %v2524 = vadd.f32 0.0, %v2523
    %v2525 = vpop.f32.mrf.mxu0
    %v2526 = vpop.f32.mrf.mxu0
    %v2527 = vadd.f32 0.0, %v2526
    %v2528 = vpop.f32.mrf.mxu0
    %2529 = vmatprep.mubr.bf16.mxu0 0
    %2530 = vmatmul.mubr.bf16.gmra.mxu0 %v2465
    %v2531 = vpop.f32.mrf.mxu0
    %v2532 = vadd.f32 0.0, %v2531
    %v2533 = vpop.f32.mrf.mxu0
    %v2534 = vpop.f32.mrf.mxu0
    %v2535 = vadd.f32 0.0, %v2534
    %v2536 = vpop.f32.mrf.mxu0
    %2537 = vmatprep.mubr.bf16.mxu0 0
    %2538 = vmatmul.mubr.bf16.gmra.mxu0 %v2468
    %v2539 = vpop.f32.mrf.mxu0
    %v2540 = vadd.f32 0.0, %v2539
    %v2541 = vpop.f32.mrf.mxu0
    %v2542 = vpop.f32.mrf.mxu0
    %v2543 = vadd.f32 0.0, %v2542
    %v2544 = vpop.f32.mrf.mxu0
    %2545 = vmatprep.mubr.bf16.mxu0 0
    %2546 = vmatmul.mubr.bf16.gmra.mxu0 %v2471
    %v2547 = vpop.f32.mrf.mxu0
    %v2548 = vadd.f32 0.0, %v2547
    %v2549 = vpop.f32.mrf.mxu0
    %v2550 = vpop.f32.mrf.mxu0
    %v2551 = vadd.f32 0.0, %v2550
    %v2552 = vpop.f32.mrf.mxu0
    %2553 = vdwg.mxu0
    %v2554 = vadd.f32 %v2377, %v2508
    %v2555 = vadd.f32 %v2378, %v2511
    %v2556 = vadd.f32 %v2379, %v2516
    %v2557 = vadd.f32 %v2380, %v2519
    %v2558 = vadd.f32 %v2381, %v2524
    %v2559 = vadd.f32 %v2382, %v2527
    %v2560 = vadd.f32 %v2383, %v2532
    %v2561 = vadd.f32 %v2384, %v2535
    %v2562 = vadd.f32 %v2385, %v2540
    %v2563 = vadd.f32 %v2386, %v2543
    %v2564 = vadd.f32 %v2387, %v2548
    %v2565 = vadd.f32 %v2388, %v2551
    %v2566 = vpack.c.bf16 %v621, %v620
    %v2567 = vpack.c.bf16 %v623, %v622
    %v2568 = vpack.c.bf16 %v625, %v624
    %v2569 = vpack.c.bf16 %v627, %v626
    %v2570 = vpack.c.bf16 %v629, %v628
    %v2571 = vpack.c.bf16 %v631, %v630
    %v2578 = vrot.slane %v2566, 1
    %v2579 = vrot.slane %v2567, 1
    %v2580 = vsel %vm1930, %v2578, %v2579
    %v2581 = vrot.slane %v2568, 1
    %v2582 = vsel %vm1930, %v2579, %v2581
    %v2583 = vrot.slane %v2569, 1
    %v2584 = vsel %vm1930, %v2581, %v2583
    %v2585 = vrot.slane %v2570, 1
    %v2586 = vsel %vm1930, %v2583, %v2585
    %v2587 = vrot.slane %v2571, 1
    %v2588 = vsel %vm1930, %v2585, %v2587
    %v2593 = vunpack.c.l.b16 %v692
    %v2594 = vunpack.c.l.b16 %v693
    %v2595 = vunpack.c.l.b16 %v694
    %v2596 = vunpack.c.l.b16 %v695
    %v2597 = vpack.c.b16 %v2594, %v2593
    %v2598 = vpack.c.b16 %v2596, %v2595
    %v2602 = vsel %vm750, %v2580, 0
    %v2605 = vsel %vm750, %v2582, 0
    %v2608 = vsel %vm750, %v2584, 0
    %v2611 = vsel %vm750, %v2586, 0
    %v2614 = vsel %vm750, %v2588, 0
    %v2617 = vsel %vm750, %v2587, 0
    %2619 = vmatprep.subr.bf16.mxu0 0
    %2620 = vmatpush1.bf16.msra.mxu0 0
    %2621 = vmatprep.subr.bf16.mxu0 0
    %2622 = vmatpush1.bf16.msra.mxu0 0
    %2623 = vmatprep.subr.bf16.mxu0 0
    %2624 = vmatpush1.bf16.msra.mxu0 0
    %2625 = vmatprep.subr.bf16.mxu0 0
    %2626 = vmatpush1.bf16.msra.mxu0 0
    %2627 = vmatprep.subr.bf16.mxu0 0
    %2628 = vmatpush1.bf16.msra.mxu0 0
    %2629 = vmatprep.subr.bf16.mxu0 0
    %2630 = vmatpush1.bf16.msra.mxu0 0
    %2631 = vmatprep.subr.bf16.mxu0 0
    %2632 = vmatpush1.bf16.msra.mxu0 %v2598
    %2633 = vmatprep.subr.bf16.mxu0 0
    %2634 = vmatpush1.bf16.msra.mxu0 %v2597
    %2635 = vmatprep.subr.bf16.mxu0 0
    %2636 = vmatpush2.bf16.msra.mxu0 0
    %2637 = vmatprep.subr.bf16.mxu0 0
    %2638 = vmatpush2.bf16.msra.mxu0 0
    %2639 = vmatprep.subr.bf16.mxu0 0
    %2640 = vmatpush2.bf16.msra.mxu0 0
    %2641 = vmatprep.subr.bf16.mxu0 0
    %2642 = vmatpush2.bf16.msra.mxu0 0
    %2643 = vmatprep.subr.bf16.mxu0 0
    %2644 = vmatpush2.bf16.msra.mxu0 0
    %2645 = vmatprep.subr.bf16.mxu0 0
    %2646 = vmatpush2.bf16.msra.mxu0 0
    %2647 = vmatprep.subr.bf16.mxu0 0
    %2648 = vmatpush2.bf16.msra.mxu0 0
    %2649 = vmatprep.subr.bf16.mxu0 0
    %2650 = vmatpush2.bf16.msra.mxu0 0
    %2651 = vmatprep.mubr.bf16.mxu0 0
    %2652 = vmatmul.mubr.bf16.gmra.mxu0 %v2602
    %v2653 = vpop.f32.mrf.mxu0
    %v2654 = vadd.f32 0.0, %v2653
    %v2655 = vpop.f32.mrf.mxu0
    %v2656 = vpop.f32.mrf.mxu0
    %v2657 = vadd.f32 0.0, %v2656
    %v2658 = vpop.f32.mrf.mxu0
    %2659 = vmatprep.mubr.bf16.mxu0 0
    %2660 = vmatmul.mubr.bf16.gmra.mxu0 %v2605
    %v2661 = vpop.f32.mrf.mxu0
    %v2662 = vadd.f32 0.0, %v2661
    %v2663 = vpop.f32.mrf.mxu0
    %v2664 = vpop.f32.mrf.mxu0
    %v2665 = vadd.f32 0.0, %v2664
    %v2666 = vpop.f32.mrf.mxu0
    %2667 = vmatprep.mubr.bf16.mxu0 0
    %2668 = vmatmul.mubr.bf16.gmra.mxu0 %v2608
    %v2669 = vpop.f32.mrf.mxu0
    %v2670 = vadd.f32 0.0, %v2669
    %v2671 = vpop.f32.mrf.mxu0
    %v2672 = vpop.f32.mrf.mxu0
    %v2673 = vadd.f32 0.0, %v2672
    %v2674 = vpop.f32.mrf.mxu0
    %2675 = vmatprep.mubr.bf16.mxu0 0
    %2676 = vmatmul.mubr.bf16.gmra.mxu0 %v2611
    %v2677 = vpop.f32.mrf.mxu0
    %v2678 = vadd.f32 0.0, %v2677
    %v2679 = vpop.f32.mrf.mxu0
    %v2680 = vpop.f32.mrf.mxu0
    %v2681 = vadd.f32 0.0, %v2680
    %v2682 = vpop.f32.mrf.mxu0
    %2683 = vmatprep.mubr.bf16.mxu0 0
    %2684 = vmatmul.mubr.bf16.gmra.mxu0 %v2614
    %v2685 = vpop.f32.mrf.mxu0
    %v2686 = vadd.f32 0.0, %v2685
    %v2687 = vpop.f32.mrf.mxu0
    %v2688 = vpop.f32.mrf.mxu0
    %v2689 = vadd.f32 0.0, %v2688
    %v2690 = vpop.f32.mrf.mxu0
    %2691 = vmatprep.mubr.bf16.mxu0 0
    %2692 = vmatmul.mubr.bf16.gmra.mxu0 %v2617
    %v2693 = vpop.f32.mrf.mxu0
    %v2694 = vadd.f32 0.0, %v2693
    %v2695 = vpop.f32.mrf.mxu0
    %v2696 = vpop.f32.mrf.mxu0
    %v2697 = vadd.f32 0.0, %v2696
    %v2698 = vpop.f32.mrf.mxu0
    %2699 = vdwg.mxu0
    %v2700 = vadd.f32 %v2554, %v2654
    %v2701 = vadd.f32 %v2555, %v2657
    %v2702 = vadd.f32 %v2556, %v2662
    %v2703 = vadd.f32 %v2557, %v2665
    %v2704 = vadd.f32 %v2558, %v2670
    %v2705 = vadd.f32 %v2559, %v2673
    %v2706 = vadd.f32 %v2560, %v2678
    %v2707 = vadd.f32 %v2561, %v2681
    %v2708 = vadd.f32 %v2562, %v2686
    %v2709 = vadd.f32 %v2563, %v2689
    %v2710 = vadd.f32 %v2564, %v2694
    %v2711 = vadd.f32 %v2565, %v2697
    %v2712 = vpack.c.bf16 %v633, %v632
    %v2713 = vpack.c.bf16 %v635, %v634
    %v2714 = vpack.c.bf16 %v637, %v636
    %v2715 = vpack.c.bf16 %v639, %v638
    %v2716 = vpack.c.bf16 %v641, %v640
    %v2717 = vpack.c.bf16 %v643, %v642
    %v2724 = vrot.slane %v2712, 3
    %v2725 = vrot.slane %v2713, 3
    %v2726 = vsel %vm2077, %v2724, %v2725
    %v2727 = vrot.slane %v2714, 3
    %v2728 = vsel %vm2077, %v2725, %v2727
    %v2729 = vrot.slane %v2715, 3
    %v2730 = vsel %vm2077, %v2727, %v2729
    %v2731 = vrot.slane %v2716, 3
    %v2732 = vsel %vm2077, %v2729, %v2731
    %v2733 = vrot.slane %v2717, 3
    %v2734 = vsel %vm2077, %v2731, %v2733
    %v2739 = vunpack.c.l.b16 %v696
    %v2740 = vunpack.c.l.b16 %v697
    %v2741 = vunpack.c.l.b16 %v698
    %v2742 = vunpack.c.l.b16 %v699
    %v2743 = vpack.c.b16 %v2740, %v2739
    %v2744 = vpack.c.b16 %v2742, %v2741
    %v2748 = vsel %vm750, %v2726, 0
    %v2751 = vsel %vm750, %v2728, 0
    %v2754 = vsel %vm750, %v2730, 0
    %v2757 = vsel %vm750, %v2732, 0
    %v2760 = vsel %vm750, %v2734, 0
    %v2763 = vsel %vm750, %v2733, 0
    %2765 = vmatprep.subr.bf16.mxu0 0
    %2766 = vmatpush1.bf16.msra.mxu0 0
    %2767 = vmatprep.subr.bf16.mxu0 0
    %2768 = vmatpush1.bf16.msra.mxu0 0
    %2769 = vmatprep.subr.bf16.mxu0 0
    %2770 = vmatpush1.bf16.msra.mxu0 0
    %2771 = vmatprep.subr.bf16.mxu0 0
    %2772 = vmatpush1.bf16.msra.mxu0 0
    %2773 = vmatprep.subr.bf16.mxu0 0
    %2774 = vmatpush1.bf16.msra.mxu0 0
    %2775 = vmatprep.subr.bf16.mxu0 0
    %2776 = vmatpush1.bf16.msra.mxu0 0
    %2777 = vmatprep.subr.bf16.mxu0 0
    %2778 = vmatpush1.bf16.msra.mxu0 %v2744
    %2779 = vmatprep.subr.bf16.mxu0 0
    %2780 = vmatpush1.bf16.msra.mxu0 %v2743
    %2781 = vmatprep.subr.bf16.mxu0 0
    %2782 = vmatpush2.bf16.msra.mxu0 0
    %2783 = vmatprep.subr.bf16.mxu0 0
    %2784 = vmatpush2.bf16.msra.mxu0 0
    %2785 = vmatprep.subr.bf16.mxu0 0
    %2786 = vmatpush2.bf16.msra.mxu0 0
    %2787 = vmatprep.subr.bf16.mxu0 0
    %2788 = vmatpush2.bf16.msra.mxu0 0
    %2789 = vmatprep.subr.bf16.mxu0 0
    %2790 = vmatpush2.bf16.msra.mxu0 0
    %2791 = vmatprep.subr.bf16.mxu0 0
    %2792 = vmatpush2.bf16.msra.mxu0 0
    %2793 = vmatprep.subr.bf16.mxu0 0
    %2794 = vmatpush2.bf16.msra.mxu0 0
    %2795 = vmatprep.subr.bf16.mxu0 0
    %2796 = vmatpush2.bf16.msra.mxu0 0
    %2797 = vmatprep.mubr.bf16.mxu0 0
    %2798 = vmatmul.mubr.bf16.gmra.mxu0 %v2748
    %v2799 = vpop.f32.mrf.mxu0
    %v2800 = vadd.f32 0.0, %v2799
    %v2801 = vpop.f32.mrf.mxu0
    %v2802 = vpop.f32.mrf.mxu0
    %v2803 = vadd.f32 0.0, %v2802
    %v2804 = vpop.f32.mrf.mxu0
    %2805 = vmatprep.mubr.bf16.mxu0 0
    %2806 = vmatmul.mubr.bf16.gmra.mxu0 %v2751
    %v2807 = vpop.f32.mrf.mxu0
    %v2808 = vadd.f32 0.0, %v2807
    %v2809 = vpop.f32.mrf.mxu0
    %v2810 = vpop.f32.mrf.mxu0
    %v2811 = vadd.f32 0.0, %v2810
    %v2812 = vpop.f32.mrf.mxu0
    %2813 = vmatprep.mubr.bf16.mxu0 0
    %2814 = vmatmul.mubr.bf16.gmra.mxu0 %v2754
    %v2815 = vpop.f32.mrf.mxu0
    %v2816 = vadd.f32 0.0, %v2815
    %v2817 = vpop.f32.mrf.mxu0
    %v2818 = vpop.f32.mrf.mxu0
    %v2819 = vadd.f32 0.0, %v2818
    %v2820 = vpop.f32.mrf.mxu0
    %2821 = vmatprep.mubr.bf16.mxu0 0
    %2822 = vmatmul.mubr.bf16.gmra.mxu0 %v2757
    %v2823 = vpop.f32.mrf.mxu0
    %v2824 = vadd.f32 0.0, %v2823
    %v2825 = vpop.f32.mrf.mxu0
    %v2826 = vpop.f32.mrf.mxu0
    %v2827 = vadd.f32 0.0, %v2826
    %v2828 = vpop.f32.mrf.mxu0
    %2829 = vmatprep.mubr.bf16.mxu0 0
    %2830 = vmatmul.mubr.bf16.gmra.mxu0 %v2760
    %v2831 = vpop.f32.mrf.mxu0
    %v2832 = vadd.f32 0.0, %v2831
    %v2833 = vpop.f32.mrf.mxu0
    %v2834 = vpop.f32.mrf.mxu0
    %v2835 = vadd.f32 0.0, %v2834
    %v2836 = vpop.f32.mrf.mxu0
    %2837 = vmatprep.mubr.bf16.mxu0 0
    %2838 = vmatmul.mubr.bf16.gmra.mxu0 %v2763
    %v2839 = vpop.f32.mrf.mxu0
    %v2840 = vadd.f32 0.0, %v2839
    %v2841 = vpop.f32.mrf.mxu0
    %v2842 = vpop.f32.mrf.mxu0
    %v2843 = vadd.f32 0.0, %v2842
    %v2844 = vpop.f32.mrf.mxu0
    %2845 = vdwg.mxu0
    %v2846 = vadd.f32 %v2700, %v2800
    %v2847 = vadd.f32 %v2701, %v2803
    %v2848 = vadd.f32 %v2702, %v2808
    %v2849 = vadd.f32 %v2703, %v2811
    %v2850 = vadd.f32 %v2704, %v2816
    %v2851 = vadd.f32 %v2705, %v2819
    %v2852 = vadd.f32 %v2706, %v2824
    %v2853 = vadd.f32 %v2707, %v2827
    %v2854 = vadd.f32 %v2708, %v2832
    %v2855 = vadd.f32 %v2709, %v2835
    %v2856 = vadd.f32 %v2710, %v2840
    %v2857 = vadd.f32 %v2711, %v2843
    %v2859 = vshrl.u32 %v2566, 16
    %v2861 = vrot.slane %v2859, 1
    %v2862 = vshll.u32 %v2566, 16
    %v2864 = vrot.slane %v2862, 2
    %v2865 = vor.u32 %v2861, %v2864
    %v2867 = vshrl.u32 %v2567, 16
    %v2869 = vrot.slane %v2867, 1
    %v2870 = vshll.u32 %v2567, 16
    %v2872 = vrot.slane %v2870, 2
    %v2873 = vor.u32 %v2869, %v2872
    %v2874 = vsel %vm2212, %v2865, %v2873
    %v2876 = vshrl.u32 %v2568, 16
    %v2878 = vrot.slane %v2876, 1
    %v2879 = vshll.u32 %v2568, 16
    %v2881 = vrot.slane %v2879, 2
    %v2882 = vor.u32 %v2878, %v2881
    %v2883 = vsel %vm2212, %v2873, %v2882
    %v2885 = vshrl.u32 %v2569, 16
    %v2887 = vrot.slane %v2885, 1
    %v2888 = vshll.u32 %v2569, 16
    %v2890 = vrot.slane %v2888, 2
    %v2891 = vor.u32 %v2887, %v2890
    %v2892 = vsel %vm2212, %v2882, %v2891
    %v2894 = vshrl.u32 %v2570, 16
    %v2896 = vrot.slane %v2894, 1
    %v2897 = vshll.u32 %v2570, 16
    %v2899 = vrot.slane %v2897, 2
    %v2900 = vor.u32 %v2896, %v2899
    %v2901 = vsel %vm2212, %v2891, %v2900
    %v2903 = vshrl.u32 %v2571, 16
    %v2905 = vrot.slane %v2903, 1
    %v2906 = vshll.u32 %v2571, 16
    %v2908 = vrot.slane %v2906, 2
    %v2909 = vor.u32 %v2905, %v2908
    %v2910 = vsel %vm2212, %v2900, %v2909
    %v2915 = vunpack.c.l.b16 %v700
    %v2916 = vunpack.c.l.b16 %v701
    %v2917 = vunpack.c.l.b16 %v702
    %v2918 = vunpack.c.l.b16 %v703
    %v2919 = vpack.c.b16 %v2916, %v2915
    %v2920 = vpack.c.b16 %v2918, %v2917
    %v2924 = vsel %vm750, %v2874, 0
    %v2927 = vsel %vm750, %v2883, 0
    %v2930 = vsel %vm750, %v2892, 0
    %v2933 = vsel %vm750, %v2901, 0
    %v2936 = vsel %vm750, %v2910, 0
    %v2939 = vsel %vm750, %v2909, 0
    %2941 = vmatprep.subr.bf16.mxu0 0
    %2942 = vmatpush1.bf16.msra.mxu0 0
    %2943 = vmatprep.subr.bf16.mxu0 0
    %2944 = vmatpush1.bf16.msra.mxu0 0
    %2945 = vmatprep.subr.bf16.mxu0 0
    %2946 = vmatpush1.bf16.msra.mxu0 0
    %2947 = vmatprep.subr.bf16.mxu0 0
    %2948 = vmatpush1.bf16.msra.mxu0 0
    %2949 = vmatprep.subr.bf16.mxu0 0
    %2950 = vmatpush1.bf16.msra.mxu0 0
    %2951 = vmatprep.subr.bf16.mxu0 0
    %2952 = vmatpush1.bf16.msra.mxu0 0
    %2953 = vmatprep.subr.bf16.mxu0 0
    %2954 = vmatpush1.bf16.msra.mxu0 %v2920
    %2955 = vmatprep.subr.bf16.mxu0 0
    %2956 = vmatpush1.bf16.msra.mxu0 %v2919
    %2957 = vmatprep.subr.bf16.mxu0 0
    %2958 = vmatpush2.bf16.msra.mxu0 0
    %2959 = vmatprep.subr.bf16.mxu0 0
    %2960 = vmatpush2.bf16.msra.mxu0 0
    %2961 = vmatprep.subr.bf16.mxu0 0
    %2962 = vmatpush2.bf16.msra.mxu0 0
    %2963 = vmatprep.subr.bf16.mxu0 0
    %2964 = vmatpush2.bf16.msra.mxu0 0
    %2965 = vmatprep.subr.bf16.mxu0 0
    %2966 = vmatpush2.bf16.msra.mxu0 0
    %2967 = vmatprep.subr.bf16.mxu0 0
    %2968 = vmatpush2.bf16.msra.mxu0 0
    %2969 = vmatprep.subr.bf16.mxu0 0
    %2970 = vmatpush2.bf16.msra.mxu0 0
    %2971 = vmatprep.subr.bf16.mxu0 0
    %2972 = vmatpush2.bf16.msra.mxu0 0
    %2973 = vmatprep.mubr.bf16.mxu0 0
    %2974 = vmatmul.mubr.bf16.gmra.mxu0 %v2924
    %v2975 = vpop.f32.mrf.mxu0
    %v2976 = vadd.f32 0.0, %v2975
    %v2977 = vpop.f32.mrf.mxu0
    %v2978 = vpop.f32.mrf.mxu0
    %v2979 = vadd.f32 0.0, %v2978
    %v2980 = vpop.f32.mrf.mxu0
    %2981 = vmatprep.mubr.bf16.mxu0 0
    %2982 = vmatmul.mubr.bf16.gmra.mxu0 %v2927
    %v2983 = vpop.f32.mrf.mxu0
    %v2984 = vadd.f32 0.0, %v2983
    %v2985 = vpop.f32.mrf.mxu0
    %v2986 = vpop.f32.mrf.mxu0
    %v2987 = vadd.f32 0.0, %v2986
    %v2988 = vpop.f32.mrf.mxu0
    %2989 = vmatprep.mubr.bf16.mxu0 0
    %2990 = vmatmul.mubr.bf16.gmra.mxu0 %v2930
    %v2991 = vpop.f32.mrf.mxu0
    %v2992 = vadd.f32 0.0, %v2991
    %v2993 = vpop.f32.mrf.mxu0
    %v2994 = vpop.f32.mrf.mxu0
    %v2995 = vadd.f32 0.0, %v2994
    %v2996 = vpop.f32.mrf.mxu0
    %2997 = vmatprep.mubr.bf16.mxu0 0
    %2998 = vmatmul.mubr.bf16.gmra.mxu0 %v2933
    %v2999 = vpop.f32.mrf.mxu0
    %v3000 = vadd.f32 0.0, %v2999
    %v3001 = vpop.f32.mrf.mxu0
    %v3002 = vpop.f32.mrf.mxu0
    %v3003 = vadd.f32 0.0, %v3002
    %v3004 = vpop.f32.mrf.mxu0
    %3005 = vmatprep.mubr.bf16.mxu0 0
    %3006 = vmatmul.mubr.bf16.gmra.mxu0 %v2936
    %v3007 = vpop.f32.mrf.mxu0
    %v3008 = vadd.f32 0.0, %v3007
    %v3009 = vpop.f32.mrf.mxu0
    %v3010 = vpop.f32.mrf.mxu0
    %v3011 = vadd.f32 0.0, %v3010
    %v3012 = vpop.f32.mrf.mxu0
    %3013 = vmatprep.mubr.bf16.mxu0 0
    %3014 = vmatmul.mubr.bf16.gmra.mxu0 %v2939
    %v3015 = vpop.f32.mrf.mxu0
    %v3016 = vadd.f32 0.0, %v3015
    %v3017 = vpop.f32.mrf.mxu0
    %v3018 = vpop.f32.mrf.mxu0
    %v3019 = vadd.f32 0.0, %v3018
    %v3020 = vpop.f32.mrf.mxu0
    %3021 = vdwg.mxu0
    %v3022 = vadd.f32 %v2846, %v2976
    %v3023 = vadd.f32 %v2847, %v2979
    %v3024 = vadd.f32 %v2848, %v2984
    %v3025 = vadd.f32 %v2849, %v2987
    %v3026 = vadd.f32 %v2850, %v2992
    %v3027 = vadd.f32 %v2851, %v2995
    %v3028 = vadd.f32 %v2852, %v3000
    %v3029 = vadd.f32 %v2853, %v3003
    %v3030 = vadd.f32 %v2854, %v3008
    %v3031 = vadd.f32 %v2855, %v3011
    %v3032 = vadd.f32 %v2856, %v3016
    %v3033 = vadd.f32 %v2857, %v3019
    %v3035 = vshrl.u32 %v2712, 16
    %v3037 = vrot.slane %v3035, 3
    %v3038 = vshll.u32 %v2712, 16
    %v3040 = vrot.slane %v3038, 4
    %v3041 = vor.u32 %v3037, %v3040
    %v3043 = vshrl.u32 %v2713, 16
    %v3045 = vrot.slane %v3043, 3
    %v3046 = vshll.u32 %v2713, 16
    %v3048 = vrot.slane %v3046, 4
    %v3049 = vor.u32 %v3045, %v3048
    %v3050 = vsel %vm2389, %v3041, %v3049
    %v3052 = vshrl.u32 %v2714, 16
    %v3054 = vrot.slane %v3052, 3
    %v3055 = vshll.u32 %v2714, 16
    %v3057 = vrot.slane %v3055, 4
    %v3058 = vor.u32 %v3054, %v3057
    %v3059 = vsel %vm2389, %v3049, %v3058
    %v3061 = vshrl.u32 %v2715, 16
    %v3063 = vrot.slane %v3061, 3
    %v3064 = vshll.u32 %v2715, 16
    %v3066 = vrot.slane %v3064, 4
    %v3067 = vor.u32 %v3063, %v3066
    %v3068 = vsel %vm2389, %v3058, %v3067
    %v3070 = vshrl.u32 %v2716, 16
    %v3072 = vrot.slane %v3070, 3
    %v3073 = vshll.u32 %v2716, 16
    %v3075 = vrot.slane %v3073, 4
    %v3076 = vor.u32 %v3072, %v3075
    %v3077 = vsel %vm2389, %v3067, %v3076
    %v3079 = vshrl.u32 %v2717, 16
    %v3081 = vrot.slane %v3079, 3
    %v3082 = vshll.u32 %v2717, 16
    %v3084 = vrot.slane %v3082, 4
    %v3085 = vor.u32 %v3081, %v3084
    %v3086 = vsel %vm2389, %v3076, %v3085
    %v3091 = vunpack.c.l.b16 %v704
    %v3092 = vunpack.c.l.b16 %v705
    %v3093 = vunpack.c.l.b16 %v706
    %v3094 = vunpack.c.l.b16 %v707
    %v3095 = vpack.c.b16 %v3092, %v3091
    %v3096 = vpack.c.b16 %v3094, %v3093
    %v3100 = vsel %vm750, %v3050, 0
    %v3103 = vsel %vm750, %v3059, 0
    %v3106 = vsel %vm750, %v3068, 0
    %v3109 = vsel %vm750, %v3077, 0
    %v3112 = vsel %vm750, %v3086, 0
    %v3115 = vsel %vm750, %v3085, 0
    %3117 = vmatprep.subr.bf16.mxu0 0
    %3118 = vmatpush1.bf16.msra.mxu0 0
    %3119 = vmatprep.subr.bf16.mxu0 0
    %3120 = vmatpush1.bf16.msra.mxu0 0
    %3121 = vmatprep.subr.bf16.mxu0 0
    %3122 = vmatpush1.bf16.msra.mxu0 0
    %3123 = vmatprep.subr.bf16.mxu0 0
    %3124 = vmatpush1.bf16.msra.mxu0 0
    %3125 = vmatprep.subr.bf16.mxu0 0
    %3126 = vmatpush1.bf16.msra.mxu0 0
    %3127 = vmatprep.subr.bf16.mxu0 0
    %3128 = vmatpush1.bf16.msra.mxu0 0
    %3129 = vmatprep.subr.bf16.mxu0 0
    %3130 = vmatpush1.bf16.msra.mxu0 %v3096
    %3131 = vmatprep.subr.bf16.mxu0 0
    %3132 = vmatpush1.bf16.msra.mxu0 %v3095
    %3133 = vmatprep.subr.bf16.mxu0 0
    %3134 = vmatpush2.bf16.msra.mxu0 0
    %3135 = vmatprep.subr.bf16.mxu0 0
    %3136 = vmatpush2.bf16.msra.mxu0 0
    %3137 = vmatprep.subr.bf16.mxu0 0
    %3138 = vmatpush2.bf16.msra.mxu0 0
    %3139 = vmatprep.subr.bf16.mxu0 0
    %3140 = vmatpush2.bf16.msra.mxu0 0
    %3141 = vmatprep.subr.bf16.mxu0 0
    %3142 = vmatpush2.bf16.msra.mxu0 0
    %3143 = vmatprep.subr.bf16.mxu0 0
    %3144 = vmatpush2.bf16.msra.mxu0 0
    %3145 = vmatprep.subr.bf16.mxu0 0
    %3146 = vmatpush2.bf16.msra.mxu0 0
    %3147 = vmatprep.subr.bf16.mxu0 0
    %3148 = vmatpush2.bf16.msra.mxu0 0
    %3149 = vmatprep.mubr.bf16.mxu0 0
    %3150 = vmatmul.mubr.bf16.gmra.mxu0 %v3100
    %v3151 = vpop.f32.mrf.mxu0
    %v3152 = vadd.f32 0.0, %v3151
    %v3153 = vpop.f32.mrf.mxu0
    %v3154 = vpop.f32.mrf.mxu0
    %v3155 = vadd.f32 0.0, %v3154
    %v3156 = vpop.f32.mrf.mxu0
    %3157 = vmatprep.mubr.bf16.mxu0 0
    %3158 = vmatmul.mubr.bf16.gmra.mxu0 %v3103
    %v3159 = vpop.f32.mrf.mxu0
    %v3160 = vadd.f32 0.0, %v3159
    %v3161 = vpop.f32.mrf.mxu0
    %v3162 = vpop.f32.mrf.mxu0
    %v3163 = vadd.f32 0.0, %v3162
    %v3164 = vpop.f32.mrf.mxu0
    %3165 = vmatprep.mubr.bf16.mxu0 0
    %3166 = vmatmul.mubr.bf16.gmra.mxu0 %v3106
    %v3167 = vpop.f32.mrf.mxu0
    %v3168 = vadd.f32 0.0, %v3167
    %v3169 = vpop.f32.mrf.mxu0
    %v3170 = vpop.f32.mrf.mxu0
    %v3171 = vadd.f32 0.0, %v3170
    %v3172 = vpop.f32.mrf.mxu0
    %3173 = vmatprep.mubr.bf16.mxu0 0
    %3174 = vmatmul.mubr.bf16.gmra.mxu0 %v3109
    %v3175 = vpop.f32.mrf.mxu0
    %v3176 = vadd.f32 0.0, %v3175
    %v3177 = vpop.f32.mrf.mxu0
    %v3178 = vpop.f32.mrf.mxu0
    %v3179 = vadd.f32 0.0, %v3178
    %v3180 = vpop.f32.mrf.mxu0
    %3181 = vmatprep.mubr.bf16.mxu0 0
    %3182 = vmatmul.mubr.bf16.gmra.mxu0 %v3112
    %v3183 = vpop.f32.mrf.mxu0
    %v3184 = vadd.f32 0.0, %v3183
    %v3185 = vpop.f32.mrf.mxu0
    %v3186 = vpop.f32.mrf.mxu0
    %v3187 = vadd.f32 0.0, %v3186
    %v3188 = vpop.f32.mrf.mxu0
    %3189 = vmatprep.mubr.bf16.mxu0 0
    %3190 = vmatmul.mubr.bf16.gmra.mxu0 %v3115
    %v3191 = vpop.f32.mrf.mxu0
    %v3192 = vadd.f32 0.0, %v3191
    %v3193 = vpop.f32.mrf.mxu0
    %v3194 = vpop.f32.mrf.mxu0
    %v3195 = vadd.f32 0.0, %v3194
    %v3196 = vpop.f32.mrf.mxu0
    %3197 = vdwg.mxu0
    %v3198 = vadd.f32 %v3022, %v3152
    %v3199 = vadd.f32 %v3023, %v3155
    %v3200 = vadd.f32 %v3024, %v3160
    %v3201 = vadd.f32 %v3025, %v3163
    %v3202 = vadd.f32 %v3026, %v3168
    %v3203 = vadd.f32 %v3027, %v3171
    %v3204 = vadd.f32 %v3028, %v3176
    %v3205 = vadd.f32 %v3029, %v3179
    %v3206 = vadd.f32 %v3030, %v3184
    %v3207 = vadd.f32 %v3031, %v3187
    %v3208 = vadd.f32 %v3032, %v3192
    %v3209 = vadd.f32 %v3033, %v3195
    %v3210 = vld [vmem:[%s6] sm:$0x1]
    %v3212 = vlaneseq
    %v3213 = vshrl.u32 %v3212, 7
    %v3214 = vsub.s32 0, %v3213
    %v3215 = vrot.slane %v3210, %v3214
    %v3217 = vadd.f32 %v3198, %v3215
    %v3218 = vadd.f32 %v3199, %v3215
    %v3219 = vadd.f32 %v3200, %v3215
    %v3220 = vadd.f32 %v3201, %v3215
    %v3221 = vadd.f32 %v3202, %v3215
    %v3222 = vadd.f32 %v3203, %v3215
    %v3223 = vadd.f32 %v3204, %v3215
    %v3224 = vadd.f32 %v3205, %v3215
    %v3225 = vadd.f32 %v3206, %v3215
    %v3226 = vadd.f32 %v3207, %v3215
    %v3227 = vadd.f32 %v3208, %v3215
    %v3228 = vadd.f32 %v3209, %v3215
    %v3229 = vmax.f32 %v3217, 0.0
    %v3230 = vmax.f32 %v3218, 0.0
    %v3231 = vmax.f32 %v3219, 0.0
    %v3232 = vmax.f32 %v3220, 0.0
    %v3233 = vmax.f32 %v3221, 0.0
    %v3234 = vmax.f32 %v3222, 0.0
    %v3235 = vmax.f32 %v3223, 0.0
    %v3236 = vmax.f32 %v3224, 0.0
    %v3237 = vmax.f32 %v3225, 0.0
    %v3238 = vmax.f32 %v3226, 0.0
    %v3239 = vmax.f32 %v3227, 0.0
    %v3240 = vmax.f32 %v3228, 0.0
    %v3241 = vld [vmem:[%s7] sm:$0xf]
    %v3242 = vld [vmem:[%s7 + $0x4] sm:$0xf]
    %v3243 = vld [vmem:[%s7 + $0x8] sm:$0xf]
    %v3244 = vld [vmem:[%s7 + $0xc] sm:$0xf]
    %v3245 = vld [vmem:[%s7 + $0x10] sm:$0xf]
    %v3246 = vld [vmem:[%s7 + $0x14] sm:$0xf]
    %v3247 = vld [vmem:[%s7 + $0x18] sm:$0xf]
    %v3248 = vld [vmem:[%s7 + $0x1c] sm:$0xf]
    %v3249 = vld [vmem:[%s7 + $0x20] sm:$0xf]
    %v3250 = vld [vmem:[%s7 + $0x24] sm:$0xf]
    %v3251 = vld [vmem:[%s7 + $0x28] sm:$0xf]
    %v3252 = vld [vmem:[%s7 + $0x2c] sm:$0xf]
    %v3253 = vld [vmem:[%s7 + $0x30] sm:$0xf]
    %v3254 = vld [vmem:[%s7 + $0x34] sm:$0xf]
    %v3255 = vld [vmem:[%s7 + $0x38] sm:$0xf]
    %v3256 = vld [vmem:[%s7 + $0x3c] sm:$0xf]
    %v3257 = vld [vmem:[%s7 + $0x40] sm:$0xf]
    %v3258 = vld [vmem:[%s7 + $0x44] sm:$0xf]
    %v3259 = vld [vmem:[%s7 + $0x48] sm:$0xf]
    %v3260 = vld [vmem:[%s7 + $0x4c] sm:$0xf]
    %v3261 = vld [vmem:[%s7 + $0x50] sm:$0xf]
    %v3262 = vld [vmem:[%s7 + $0x54] sm:$0xf]
    %v3263 = vld [vmem:[%s7 + $0x58] sm:$0xf]
    %v3264 = vld [vmem:[%s7 + $0x5c] sm:$0xf]
    %v3265 = vld [vmem:[%s7 + $0x60] sm:$0xf]
    %v3266 = vld [vmem:[%s7 + $0x64] sm:$0xf]
    %v3267 = vld [vmem:[%s7 + $0x68] sm:$0xf]
    %v3268 = vld [vmem:[%s7 + $0x6c] sm:$0xf]
    %v3269 = vld [vmem:[%s7 + $0x70] sm:$0xf]
    %v3270 = vld [vmem:[%s7 + $0x74] sm:$0xf]
    %v3271 = vld [vmem:[%s7 + $0x78] sm:$0xf]
    %v3272 = vld [vmem:[%s7 + $0x7c] sm:$0xf]
    %v3273 = vld [vmem:[%s7 + $0x80] sm:$0xf]
    %v3274 = vld [vmem:[%s7 + $0x84] sm:$0xf]
    %v3275 = vld [vmem:[%s7 + $0x88] sm:$0xf]
    %v3276 = vld [vmem:[%s7 + $0x8c] sm:$0xf]
    %v3277 = vld [vmem:[%s7 + $0x90] sm:$0xf]
    %v3278 = vld [vmem:[%s7 + $0x94] sm:$0xf]
    %v3279 = vld [vmem:[%s7 + $0x98] sm:$0xf]
    %v3280 = vld [vmem:[%s7 + $0x9c] sm:$0xf]
    %v3281 = vld [vmem:[%s7 + $0xa0] sm:$0xf]
    %v3282 = vld [vmem:[%s7 + $0xa4] sm:$0xf]
    %v3283 = vld [vmem:[%s7 + $0xa8] sm:$0xf]
    %v3284 = vld [vmem:[%s7 + $0xac] sm:$0xf]
    %v3285 = vld [vmem:[%s7 + $0xb0] sm:$0xf]
    %v3286 = vld [vmem:[%s7 + $0xb4] sm:$0xf]
    %v3287 = vld [vmem:[%s7 + $0xb8] sm:$0xf]
    %v3288 = vld [vmem:[%s7 + $0xbc] sm:$0xf]
    %v3289 = vld [vmem:[%s7 + $0xc0] sm:$0xf]
    %v3290 = vld [vmem:[%s7 + $0xc4] sm:$0xf]
    %v3291 = vld [vmem:[%s7 + $0xc8] sm:$0xf]
    %v3292 = vld [vmem:[%s7 + $0xcc] sm:$0xf]
    %v3293 = vld [vmem:[%s7 + $0xd0] sm:$0xf]
    %v3294 = vld [vmem:[%s7 + $0xd4] sm:$0xf]
    %v3295 = vld [vmem:[%s7 + $0xd8] sm:$0xf]
    %v3296 = vld [vmem:[%s7 + $0xdc] sm:$0xf]
    %v3297 = vld [vmem:[%s7 + $0xe0] sm:$0xf]
    %v3298 = vld [vmem:[%s7 + $0xe4] sm:$0xf]
    %v3299 = vld [vmem:[%s7 + $0xe8] sm:$0xf]
    %v3300 = vld [vmem:[%s7 + $0xec] sm:$0xf]
    %v3301 = vld [vmem:[%s7 + $0xf0] sm:$0xf]
    %v3302 = vld [vmem:[%s7 + $0xf4] sm:$0xf]
    %v3303 = vld [vmem:[%s7 + $0xf8] sm:$0xf]
    %v3304 = vld [vmem:[%s7 + $0xfc] sm:$0xf]
    %v3305 = vld [vmem:[%s7 + $0x100] sm:$0xf]
    %v3306 = vld [vmem:[%s7 + $0x104] sm:$0xf]
    %v3307 = vld [vmem:[%s7 + $0x108] sm:$0xf]
    %v3308 = vld [vmem:[%s7 + $0x10c] sm:$0xf]
    %v3309 = vld [vmem:[%s7 + $0x110] sm:$0xf]
    %v3310 = vld [vmem:[%s7 + $0x114] sm:$0xf]
    %v3311 = vld [vmem:[%s7 + $0x118] sm:$0xf]
    %v3312 = vld [vmem:[%s7 + $0x11c] sm:$0xf]
    %v3313 = vpack.c.bf16 %v3230, %v3229
    %v3314 = vpack.c.bf16 %v3232, %v3231
    %v3315 = vpack.c.bf16 %v3234, %v3233
    %v3316 = vpack.c.bf16 %v3236, %v3235
    %v3317 = vpack.c.bf16 %v3237, %v3237
    %v3319 = vshrl.u32 %v3313, 16
    %v3321 = vshll.u32 %v3313, 16
    %v3323 = vrot.slane %v3321, 1
    %v3324 = vor.u32 %v3319, %v3323
    %v3326 = vshll.u32 %v3314, 16
    %v3328 = vrot.slane %v3326, 1
    %v3329 = vsel %vm961, %v3324, %v3328
    %v3330 = vshrl.u32 %v3314, 16
    %v3332 = vor.u32 %v3330, %v3328
    %v3334 = vshll.u32 %v3315, 16
    %v3336 = vrot.slane %v3334, 1
    %v3337 = vsel %vm961, %v3332, %v3336
    %v3338 = vshrl.u32 %v3315, 16
    %v3340 = vor.u32 %v3338, %v3336
    %v3342 = vshll.u32 %v3316, 16
    %v3344 = vrot.slane %v3342, 1
    %v3345 = vsel %vm961, %v3340, %v3344
    %v3346 = vshrl.u32 %v3316, 16
    %v3348 = vor.u32 %v3346, %v3344
    %v3350 = vshll.u32 %v3317, 16
    %v3352 = vrot.slane %v3350, 1
    %v3353 = vsel %vm961, %v3348, %v3352
    %v3354 = vshrl.u32 %v3317, 16
    %v3356 = vor.u32 %v3354, %v3352
    %v3365 = vunpack.c.l.b16 %v3249
    %v3366 = vunpack.c.l.b16 %v3250
    %v3367 = vunpack.c.l.b16 %v3251
    %v3368 = vunpack.c.l.b16 %v3252
    %v3369 = vunpack.c.l.b16 %v3253
    %v3370 = vunpack.c.l.b16 %v3254
    %v3371 = vunpack.c.l.b16 %v3255
    %v3372 = vunpack.c.l.b16 %v3256
    %v3373 = vpack.c.b16 %v3366, %v3365
    %v3374 = vpack.c.b16 %v3368, %v3367
    %v3375 = vpack.c.b16 %v3370, %v3369
    %v3376 = vpack.c.b16 %v3372, %v3371
    %v3382 = vsel %vm285, %v3329, 0
    %v3385 = vsel %vm285, %v3337, 0
    %v3388 = vsel %vm285, %v3345, 0
    %v3391 = vsel %vm285, %v3353, 0
    %v3394 = vsel %vm285, %v3356, 0
    %3396 = vmatprep.subr.bf16.mxu0 0
    %3397 = vmatpush1.bf16.msra.mxu0 0
    %3398 = vmatprep.subr.bf16.mxu0 0
    %3399 = vmatpush1.bf16.msra.mxu0 0
    %3400 = vmatprep.subr.bf16.mxu0 0
    %3401 = vmatpush1.bf16.msra.mxu0 0
    %3402 = vmatprep.subr.bf16.mxu0 0
    %3403 = vmatpush1.bf16.msra.mxu0 0
    %3404 = vmatprep.subr.bf16.mxu0 0
    %3405 = vmatpush1.bf16.msra.mxu0 %v3376
    %3406 = vmatprep.subr.bf16.mxu0 0
    %3407 = vmatpush1.bf16.msra.mxu0 %v3375
    %3408 = vmatprep.subr.bf16.mxu0 0
    %3409 = vmatpush1.bf16.msra.mxu0 %v3374
    %3410 = vmatprep.subr.bf16.mxu0 0
    %3411 = vmatpush1.bf16.msra.mxu0 %v3373
    %3412 = vmatprep.subr.bf16.mxu0 0
    %3413 = vmatpush2.bf16.msra.mxu0 0
    %3414 = vmatprep.subr.bf16.mxu0 0
    %3415 = vmatpush2.bf16.msra.mxu0 0
    %3416 = vmatprep.subr.bf16.mxu0 0
    %3417 = vmatpush2.bf16.msra.mxu0 0
    %3418 = vmatprep.subr.bf16.mxu0 0
    %3419 = vmatpush2.bf16.msra.mxu0 0
    %3420 = vmatprep.subr.bf16.mxu0 0
    %3421 = vmatpush2.bf16.msra.mxu0 0
    %3422 = vmatprep.subr.bf16.mxu0 0
    %3423 = vmatpush2.bf16.msra.mxu0 0
    %3424 = vmatprep.subr.bf16.mxu0 0
    %3425 = vmatpush2.bf16.msra.mxu0 0
    %3426 = vmatprep.subr.bf16.mxu0 0
    %3427 = vmatpush2.bf16.msra.mxu0 0
    %3428 = vmatprep.mubr.bf16.mxu0 0
    %3429 = vmatmul.mubr.bf16.gmra.mxu0 %v3382
    %v3430 = vpop.f32.mrf.mxu0
    %v3431 = vadd.f32 0.0, %v3430
    %v3432 = vpop.f32.mrf.mxu0
    %v3433 = vpop.f32.mrf.mxu0
    %v3434 = vadd.f32 0.0, %v3433
    %v3435 = vpop.f32.mrf.mxu0
    %3436 = vmatprep.mubr.bf16.mxu0 0
    %3437 = vmatmul.mubr.bf16.gmra.mxu0 %v3385
    %v3438 = vpop.f32.mrf.mxu0
    %v3439 = vadd.f32 0.0, %v3438
    %v3440 = vpop.f32.mrf.mxu0
    %v3441 = vpop.f32.mrf.mxu0
    %v3442 = vadd.f32 0.0, %v3441
    %v3443 = vpop.f32.mrf.mxu0
    %3444 = vmatprep.mubr.bf16.mxu0 0
    %3445 = vmatmul.mubr.bf16.gmra.mxu0 %v3388
    %v3446 = vpop.f32.mrf.mxu0
    %v3447 = vadd.f32 0.0, %v3446
    %v3448 = vpop.f32.mrf.mxu0
    %v3449 = vpop.f32.mrf.mxu0
    %v3450 = vadd.f32 0.0, %v3449
    %v3451 = vpop.f32.mrf.mxu0
    %3452 = vmatprep.mubr.bf16.mxu0 0
    %3453 = vmatmul.mubr.bf16.gmra.mxu0 %v3391
    %v3454 = vpop.f32.mrf.mxu0
    %v3455 = vadd.f32 0.0, %v3454
    %v3456 = vpop.f32.mrf.mxu0
    %v3457 = vpop.f32.mrf.mxu0
    %v3458 = vadd.f32 0.0, %v3457
    %v3459 = vpop.f32.mrf.mxu0
    %3460 = vmatprep.mubr.bf16.mxu0 0
    %3461 = vmatmul.mubr.bf16.gmra.mxu0 %v3394
    %v3462 = vpop.f32.mrf.mxu0
    %v3463 = vadd.f32 0.0, %v3462
    %v3464 = vpop.f32.mrf.mxu0
    %v3465 = vpop.f32.mrf.mxu0
    %v3466 = vpop.f32.mrf.mxu0
    %3467 = vdwg.mxu0
    %v3476 = vunpack.c.l.b16 %v3241
    %v3477 = vunpack.c.l.b16 %v3242
    %v3478 = vunpack.c.l.b16 %v3243
    %v3479 = vunpack.c.l.b16 %v3244
    %v3480 = vunpack.c.l.b16 %v3245
    %v3481 = vunpack.c.l.b16 %v3246
    %v3482 = vunpack.c.l.b16 %v3247
    %v3483 = vunpack.c.l.b16 %v3248
    %v3484 = vpack.c.b16 %v3477, %v3476
    %v3485 = vpack.c.b16 %v3479, %v3478
    %v3486 = vpack.c.b16 %v3481, %v3480
    %v3487 = vpack.c.b16 %v3483, %v3482
    %v3492 = vsel %vm285, %v3313, 0
    %v3494 = vsel %vm285, %v3314, 0
    %v3496 = vsel %vm285, %v3315, 0
    %v3498 = vsel %vm285, %v3316, 0
    %v3500 = vsel %vm285, %v3317, 0
    %3502 = vmatprep.subr.bf16.mxu0 0
    %3503 = vmatpush1.bf16.msra.mxu0 0
    %3504 = vmatprep.subr.bf16.mxu0 0
    %3505 = vmatpush1.bf16.msra.mxu0 0
    %3506 = vmatprep.subr.bf16.mxu0 0
    %3507 = vmatpush1.bf16.msra.mxu0 0
    %3508 = vmatprep.subr.bf16.mxu0 0
    %3509 = vmatpush1.bf16.msra.mxu0 0
    %3510 = vmatprep.subr.bf16.mxu0 0
    %3511 = vmatpush1.bf16.msra.mxu0 %v3487
    %3512 = vmatprep.subr.bf16.mxu0 0
    %3513 = vmatpush1.bf16.msra.mxu0 %v3486
    %3514 = vmatprep.subr.bf16.mxu0 0
    %3515 = vmatpush1.bf16.msra.mxu0 %v3485
    %3516 = vmatprep.subr.bf16.mxu0 0
    %3517 = vmatpush1.bf16.msra.mxu0 %v3484
    %3518 = vmatprep.subr.bf16.mxu0 0
    %3519 = vmatpush2.bf16.msra.mxu0 0
    %3520 = vmatprep.subr.bf16.mxu0 0
    %3521 = vmatpush2.bf16.msra.mxu0 0
    %3522 = vmatprep.subr.bf16.mxu0 0
    %3523 = vmatpush2.bf16.msra.mxu0 0
    %3524 = vmatprep.subr.bf16.mxu0 0
    %3525 = vmatpush2.bf16.msra.mxu0 0
    %3526 = vmatprep.subr.bf16.mxu0 0
    %3527 = vmatpush2.bf16.msra.mxu0 0
    %3528 = vmatprep.subr.bf16.mxu0 0
    %3529 = vmatpush2.bf16.msra.mxu0 0
    %3530 = vmatprep.subr.bf16.mxu0 0
    %3531 = vmatpush2.bf16.msra.mxu0 0
    %3532 = vmatprep.subr.bf16.mxu0 0
    %3533 = vmatpush2.bf16.msra.mxu0 0
    %3534 = vmatprep.mubr.bf16.mxu0 0
    %3535 = vmatmul.mubr.bf16.gmra.mxu0 %v3492
    %v3536 = vpop.f32.mrf.mxu0
    %v3537 = vadd.f32 %v3431, %v3536
    %v3538 = vpop.f32.mrf.mxu0
    %v3539 = vpop.f32.mrf.mxu0
    %v3540 = vadd.f32 %v3434, %v3539
    %v3541 = vpop.f32.mrf.mxu0
    %3542 = vmatprep.mubr.bf16.mxu0 0
    %3543 = vmatmul.mubr.bf16.gmra.mxu0 %v3494
    %v3544 = vpop.f32.mrf.mxu0
    %v3545 = vadd.f32 %v3439, %v3544
    %v3546 = vpop.f32.mrf.mxu0
    %v3547 = vpop.f32.mrf.mxu0
    %v3548 = vadd.f32 %v3442, %v3547
    %v3549 = vpop.f32.mrf.mxu0
    %3550 = vmatprep.mubr.bf16.mxu0 0
    %3551 = vmatmul.mubr.bf16.gmra.mxu0 %v3496
    %v3552 = vpop.f32.mrf.mxu0
    %v3553 = vadd.f32 %v3447, %v3552
    %v3554 = vpop.f32.mrf.mxu0
    %v3555 = vpop.f32.mrf.mxu0
    %v3556 = vadd.f32 %v3450, %v3555
    %v3557 = vpop.f32.mrf.mxu0
    %3558 = vmatprep.mubr.bf16.mxu0 0
    %3559 = vmatmul.mubr.bf16.gmra.mxu0 %v3498
    %v3560 = vpop.f32.mrf.mxu0
    %v3561 = vadd.f32 %v3455, %v3560
    %v3562 = vpop.f32.mrf.mxu0
    %v3563 = vpop.f32.mrf.mxu0
    %v3564 = vadd.f32 %v3458, %v3563
    %v3565 = vpop.f32.mrf.mxu0
    %3566 = vmatprep.mubr.bf16.mxu0 0
    %3567 = vmatmul.mubr.bf16.gmra.mxu0 %v3500
    %v3568 = vpop.f32.mrf.mxu0
    %v3569 = vadd.f32 %v3463, %v3568
    %v3570 = vpop.f32.mrf.mxu0
    %v3571 = vpop.f32.mrf.mxu0
    %v3572 = vpop.f32.mrf.mxu0
    %3573 = vdwg.mxu0
    %v3579 = vrot.slane %v3313, 1
    %v3580 = vrot.slane %v3314, 1
    %v3581 = vsel %vm1930, %v3579, %v3580
    %v3582 = vrot.slane %v3315, 1
    %v3583 = vsel %vm1930, %v3580, %v3582
    %v3584 = vrot.slane %v3316, 1
    %v3585 = vsel %vm1930, %v3582, %v3584
    %v3586 = vrot.slane %v3317, 1
    %v3587 = vsel %vm1930, %v3584, %v3586
    %v3596 = vunpack.c.l.b16 %v3257
    %v3597 = vunpack.c.l.b16 %v3258
    %v3598 = vunpack.c.l.b16 %v3259
    %v3599 = vunpack.c.l.b16 %v3260
    %v3600 = vunpack.c.l.b16 %v3261
    %v3601 = vunpack.c.l.b16 %v3262
    %v3602 = vunpack.c.l.b16 %v3263
    %v3603 = vunpack.c.l.b16 %v3264
    %v3604 = vpack.c.b16 %v3597, %v3596
    %v3605 = vpack.c.b16 %v3599, %v3598
    %v3606 = vpack.c.b16 %v3601, %v3600
    %v3607 = vpack.c.b16 %v3603, %v3602
    %v3613 = vsel %vm285, %v3581, 0
    %v3616 = vsel %vm285, %v3583, 0
    %v3619 = vsel %vm285, %v3585, 0
    %v3622 = vsel %vm285, %v3587, 0
    %v3625 = vsel %vm285, %v3586, 0
    %3627 = vmatprep.subr.bf16.mxu0 0
    %3628 = vmatpush1.bf16.msra.mxu0 0
    %3629 = vmatprep.subr.bf16.mxu0 0
    %3630 = vmatpush1.bf16.msra.mxu0 0
    %3631 = vmatprep.subr.bf16.mxu0 0
    %3632 = vmatpush1.bf16.msra.mxu0 0
    %3633 = vmatprep.subr.bf16.mxu0 0
    %3634 = vmatpush1.bf16.msra.mxu0 0
    %3635 = vmatprep.subr.bf16.mxu0 0
    %3636 = vmatpush1.bf16.msra.mxu0 %v3607
    %3637 = vmatprep.subr.bf16.mxu0 0
    %3638 = vmatpush1.bf16.msra.mxu0 %v3606
    %3639 = vmatprep.subr.bf16.mxu0 0
    %3640 = vmatpush1.bf16.msra.mxu0 %v3605
    %3641 = vmatprep.subr.bf16.mxu0 0
    %3642 = vmatpush1.bf16.msra.mxu0 %v3604
    %3643 = vmatprep.subr.bf16.mxu0 0
    %3644 = vmatpush2.bf16.msra.mxu0 0
    %3645 = vmatprep.subr.bf16.mxu0 0
    %3646 = vmatpush2.bf16.msra.mxu0 0
    %3647 = vmatprep.subr.bf16.mxu0 0
    %3648 = vmatpush2.bf16.msra.mxu0 0
    %3649 = vmatprep.subr.bf16.mxu0 0
    %3650 = vmatpush2.bf16.msra.mxu0 0
    %3651 = vmatprep.subr.bf16.mxu0 0
    %3652 = vmatpush2.bf16.msra.mxu0 0
    %3653 = vmatprep.subr.bf16.mxu0 0
    %3654 = vmatpush2.bf16.msra.mxu0 0
    %3655 = vmatprep.subr.bf16.mxu0 0
    %3656 = vmatpush2.bf16.msra.mxu0 0
    %3657 = vmatprep.subr.bf16.mxu0 0
    %3658 = vmatpush2.bf16.msra.mxu0 0
    %3659 = vmatprep.mubr.bf16.mxu0 0
    %3660 = vmatmul.mubr.bf16.gmra.mxu0 %v3613
    %v3661 = vpop.f32.mrf.mxu0
    %v3662 = vadd.f32 0.0, %v3661
    %v3663 = vpop.f32.mrf.mxu0
    %v3664 = vpop.f32.mrf.mxu0
    %v3665 = vadd.f32 0.0, %v3664
    %v3666 = vpop.f32.mrf.mxu0
    %3667 = vmatprep.mubr.bf16.mxu0 0
    %3668 = vmatmul.mubr.bf16.gmra.mxu0 %v3616
    %v3669 = vpop.f32.mrf.mxu0
    %v3670 = vadd.f32 0.0, %v3669
    %v3671 = vpop.f32.mrf.mxu0
    %v3672 = vpop.f32.mrf.mxu0
    %v3673 = vadd.f32 0.0, %v3672
    %v3674 = vpop.f32.mrf.mxu0
    %3675 = vmatprep.mubr.bf16.mxu0 0
    %3676 = vmatmul.mubr.bf16.gmra.mxu0 %v3619
    %v3677 = vpop.f32.mrf.mxu0
    %v3678 = vadd.f32 0.0, %v3677
    %v3679 = vpop.f32.mrf.mxu0
    %v3680 = vpop.f32.mrf.mxu0
    %v3681 = vadd.f32 0.0, %v3680
    %v3682 = vpop.f32.mrf.mxu0
    %3683 = vmatprep.mubr.bf16.mxu0 0
    %3684 = vmatmul.mubr.bf16.gmra.mxu0 %v3622
    %v3685 = vpop.f32.mrf.mxu0
    %v3686 = vadd.f32 0.0, %v3685
    %v3687 = vpop.f32.mrf.mxu0
    %v3688 = vpop.f32.mrf.mxu0
    %v3689 = vadd.f32 0.0, %v3688
    %v3690 = vpop.f32.mrf.mxu0
    %3691 = vmatprep.mubr.bf16.mxu0 0
    %3692 = vmatmul.mubr.bf16.gmra.mxu0 %v3625
    %v3693 = vpop.f32.mrf.mxu0
    %v3694 = vadd.f32 0.0, %v3693
    %v3695 = vpop.f32.mrf.mxu0
    %v3696 = vpop.f32.mrf.mxu0
    %v3697 = vpop.f32.mrf.mxu0
    %3698 = vdwg.mxu0
    %v3699 = vadd.f32 %v3537, %v3662
    %v3700 = vadd.f32 %v3540, %v3665
    %v3701 = vadd.f32 %v3545, %v3670
    %v3702 = vadd.f32 %v3548, %v3673
    %v3703 = vadd.f32 %v3553, %v3678
    %v3704 = vadd.f32 %v3556, %v3681
    %v3705 = vadd.f32 %v3561, %v3686
    %v3706 = vadd.f32 %v3564, %v3689
    %v3707 = vadd.f32 %v3569, %v3694
    %v3708 = vpack.c.bf16 %v3231, %v3230
    %v3709 = vpack.c.bf16 %v3233, %v3232
    %v3710 = vpack.c.bf16 %v3235, %v3234
    %v3711 = vpack.c.bf16 %v3237, %v3236
    %v3712 = vpack.c.bf16 %v3238, %v3238
    %v3718 = vrot.slane %v3708, 1
    %v3719 = vrot.slane %v3709, 1
    %v3720 = vsel %vm1930, %v3718, %v3719
    %v3721 = vrot.slane %v3710, 1
    %v3722 = vsel %vm1930, %v3719, %v3721
    %v3723 = vrot.slane %v3711, 1
    %v3724 = vsel %vm1930, %v3721, %v3723
    %v3725 = vrot.slane %v3712, 1
    %v3726 = vsel %vm1930, %v3723, %v3725
    %v3735 = vunpack.c.l.b16 %v3265
    %v3736 = vunpack.c.l.b16 %v3266
    %v3737 = vunpack.c.l.b16 %v3267
    %v3738 = vunpack.c.l.b16 %v3268
    %v3739 = vunpack.c.l.b16 %v3269
    %v3740 = vunpack.c.l.b16 %v3270
    %v3741 = vunpack.c.l.b16 %v3271
    %v3742 = vunpack.c.l.b16 %v3272
    %v3743 = vpack.c.b16 %v3736, %v3735
    %v3744 = vpack.c.b16 %v3738, %v3737
    %v3745 = vpack.c.b16 %v3740, %v3739
    %v3746 = vpack.c.b16 %v3742, %v3741
    %v3752 = vsel %vm285, %v3720, 0
    %v3755 = vsel %vm285, %v3722, 0
    %v3758 = vsel %vm285, %v3724, 0
    %v3761 = vsel %vm285, %v3726, 0
    %v3764 = vsel %vm285, %v3725, 0
    %3766 = vmatprep.subr.bf16.mxu0 0
    %3767 = vmatpush1.bf16.msra.mxu0 0
    %3768 = vmatprep.subr.bf16.mxu0 0
    %3769 = vmatpush1.bf16.msra.mxu0 0
    %3770 = vmatprep.subr.bf16.mxu0 0
    %3771 = vmatpush1.bf16.msra.mxu0 0
    %3772 = vmatprep.subr.bf16.mxu0 0
    %3773 = vmatpush1.bf16.msra.mxu0 0
    %3774 = vmatprep.subr.bf16.mxu0 0
    %3775 = vmatpush1.bf16.msra.mxu0 %v3746
    %3776 = vmatprep.subr.bf16.mxu0 0
    %3777 = vmatpush1.bf16.msra.mxu0 %v3745
    %3778 = vmatprep.subr.bf16.mxu0 0
    %3779 = vmatpush1.bf16.msra.mxu0 %v3744
    %3780 = vmatprep.subr.bf16.mxu0 0
    %3781 = vmatpush1.bf16.msra.mxu0 %v3743
    %3782 = vmatprep.subr.bf16.mxu0 0
    %3783 = vmatpush2.bf16.msra.mxu0 0
    %3784 = vmatprep.subr.bf16.mxu0 0
    %3785 = vmatpush2.bf16.msra.mxu0 0
    %3786 = vmatprep.subr.bf16.mxu0 0
    %3787 = vmatpush2.bf16.msra.mxu0 0
    %3788 = vmatprep.subr.bf16.mxu0 0
    %3789 = vmatpush2.bf16.msra.mxu0 0
    %3790 = vmatprep.subr.bf16.mxu0 0
    %3791 = vmatpush2.bf16.msra.mxu0 0
    %3792 = vmatprep.subr.bf16.mxu0 0
    %3793 = vmatpush2.bf16.msra.mxu0 0
    %3794 = vmatprep.subr.bf16.mxu0 0
    %3795 = vmatpush2.bf16.msra.mxu0 0
    %3796 = vmatprep.subr.bf16.mxu0 0
    %3797 = vmatpush2.bf16.msra.mxu0 0
    %3798 = vmatprep.mubr.bf16.mxu0 0
    %3799 = vmatmul.mubr.bf16.gmra.mxu0 %v3752
    %v3800 = vpop.f32.mrf.mxu0
    %v3801 = vadd.f32 0.0, %v3800
    %v3802 = vpop.f32.mrf.mxu0
    %v3803 = vpop.f32.mrf.mxu0
    %v3804 = vadd.f32 0.0, %v3803
    %v3805 = vpop.f32.mrf.mxu0
    %3806 = vmatprep.mubr.bf16.mxu0 0
    %3807 = vmatmul.mubr.bf16.gmra.mxu0 %v3755
    %v3808 = vpop.f32.mrf.mxu0
    %v3809 = vadd.f32 0.0, %v3808
    %v3810 = vpop.f32.mrf.mxu0
    %v3811 = vpop.f32.mrf.mxu0
    %v3812 = vadd.f32 0.0, %v3811
    %v3813 = vpop.f32.mrf.mxu0
    %3814 = vmatprep.mubr.bf16.mxu0 0
    %3815 = vmatmul.mubr.bf16.gmra.mxu0 %v3758
    %v3816 = vpop.f32.mrf.mxu0
    %v3817 = vadd.f32 0.0, %v3816
    %v3818 = vpop.f32.mrf.mxu0
    %v3819 = vpop.f32.mrf.mxu0
    %v3820 = vadd.f32 0.0, %v3819
    %v3821 = vpop.f32.mrf.mxu0
    %3822 = vmatprep.mubr.bf16.mxu0 0
    %3823 = vmatmul.mubr.bf16.gmra.mxu0 %v3761
    %v3824 = vpop.f32.mrf.mxu0
    %v3825 = vadd.f32 0.0, %v3824
    %v3826 = vpop.f32.mrf.mxu0
    %v3827 = vpop.f32.mrf.mxu0
    %v3828 = vadd.f32 0.0, %v3827
    %v3829 = vpop.f32.mrf.mxu0
    %3830 = vmatprep.mubr.bf16.mxu0 0
    %3831 = vmatmul.mubr.bf16.gmra.mxu0 %v3764
    %v3832 = vpop.f32.mrf.mxu0
    %v3833 = vadd.f32 0.0, %v3832
    %v3834 = vpop.f32.mrf.mxu0
    %v3835 = vpop.f32.mrf.mxu0
    %v3836 = vpop.f32.mrf.mxu0
    %3837 = vdwg.mxu0
    %v3838 = vadd.f32 %v3699, %v3801
    %v3839 = vadd.f32 %v3700, %v3804
    %v3840 = vadd.f32 %v3701, %v3809
    %v3841 = vadd.f32 %v3702, %v3812
    %v3842 = vadd.f32 %v3703, %v3817
    %v3843 = vadd.f32 %v3704, %v3820
    %v3844 = vadd.f32 %v3705, %v3825
    %v3845 = vadd.f32 %v3706, %v3828
    %v3846 = vadd.f32 %v3707, %v3833
    %v3848 = vshrl.u32 %v3708, 16
    %v3850 = vrot.slane %v3848, 1
    %v3851 = vshll.u32 %v3708, 16
    %v3853 = vrot.slane %v3851, 2
    %v3854 = vor.u32 %v3850, %v3853
    %v3856 = vshrl.u32 %v3709, 16
    %v3858 = vrot.slane %v3856, 1
    %v3859 = vshll.u32 %v3709, 16
    %v3861 = vrot.slane %v3859, 2
    %v3862 = vor.u32 %v3858, %v3861
    %v3863 = vsel %vm2212, %v3854, %v3862
    %v3865 = vshrl.u32 %v3710, 16
    %v3867 = vrot.slane %v3865, 1
    %v3868 = vshll.u32 %v3710, 16
    %v3870 = vrot.slane %v3868, 2
    %v3871 = vor.u32 %v3867, %v3870
    %v3872 = vsel %vm2212, %v3862, %v3871
    %v3874 = vshrl.u32 %v3711, 16
    %v3876 = vrot.slane %v3874, 1
    %v3877 = vshll.u32 %v3711, 16
    %v3879 = vrot.slane %v3877, 2
    %v3880 = vor.u32 %v3876, %v3879
    %v3881 = vsel %vm2212, %v3871, %v3880
    %v3883 = vshrl.u32 %v3712, 16
    %v3885 = vrot.slane %v3883, 1
    %v3886 = vshll.u32 %v3712, 16
    %v3888 = vrot.slane %v3886, 2
    %v3889 = vor.u32 %v3885, %v3888
    %v3890 = vsel %vm2212, %v3880, %v3889
    %v3899 = vunpack.c.l.b16 %v3273
    %v3900 = vunpack.c.l.b16 %v3274
    %v3901 = vunpack.c.l.b16 %v3275
    %v3902 = vunpack.c.l.b16 %v3276
    %v3903 = vunpack.c.l.b16 %v3277
    %v3904 = vunpack.c.l.b16 %v3278
    %v3905 = vunpack.c.l.b16 %v3279
    %v3906 = vunpack.c.l.b16 %v3280
    %v3907 = vpack.c.b16 %v3900, %v3899
    %v3908 = vpack.c.b16 %v3902, %v3901
    %v3909 = vpack.c.b16 %v3904, %v3903
    %v3910 = vpack.c.b16 %v3906, %v3905
    %v3916 = vsel %vm285, %v3863, 0
    %v3919 = vsel %vm285, %v3872, 0
    %v3922 = vsel %vm285, %v3881, 0
    %v3925 = vsel %vm285, %v3890, 0
    %v3928 = vsel %vm285, %v3889, 0
    %3930 = vmatprep.subr.bf16.mxu0 0
    %3931 = vmatpush1.bf16.msra.mxu0 0
    %3932 = vmatprep.subr.bf16.mxu0 0
    %3933 = vmatpush1.bf16.msra.mxu0 0
    %3934 = vmatprep.subr.bf16.mxu0 0
    %3935 = vmatpush1.bf16.msra.mxu0 0
    %3936 = vmatprep.subr.bf16.mxu0 0
    %3937 = vmatpush1.bf16.msra.mxu0 0
    %3938 = vmatprep.subr.bf16.mxu0 0
    %3939 = vmatpush1.bf16.msra.mxu0 %v3910
    %3940 = vmatprep.subr.bf16.mxu0 0
    %3941 = vmatpush1.bf16.msra.mxu0 %v3909
    %3942 = vmatprep.subr.bf16.mxu0 0
    %3943 = vmatpush1.bf16.msra.mxu0 %v3908
    %3944 = vmatprep.subr.bf16.mxu0 0
    %3945 = vmatpush1.bf16.msra.mxu0 %v3907
    %3946 = vmatprep.subr.bf16.mxu0 0
    %3947 = vmatpush2.bf16.msra.mxu0 0
    %3948 = vmatprep.subr.bf16.mxu0 0
    %3949 = vmatpush2.bf16.msra.mxu0 0
    %3950 = vmatprep.subr.bf16.mxu0 0
    %3951 = vmatpush2.bf16.msra.mxu0 0
    %3952 = vmatprep.subr.bf16.mxu0 0
    %3953 = vmatpush2.bf16.msra.mxu0 0
    %3954 = vmatprep.subr.bf16.mxu0 0
    %3955 = vmatpush2.bf16.msra.mxu0 0
    %3956 = vmatprep.subr.bf16.mxu0 0
    %3957 = vmatpush2.bf16.msra.mxu0 0
    %3958 = vmatprep.subr.bf16.mxu0 0
    %3959 = vmatpush2.bf16.msra.mxu0 0
    %3960 = vmatprep.subr.bf16.mxu0 0
    %3961 = vmatpush2.bf16.msra.mxu0 0
    %3962 = vmatprep.mubr.bf16.mxu0 0
    %3963 = vmatmul.mubr.bf16.gmra.mxu0 %v3916
    %v3964 = vpop.f32.mrf.mxu0
    %v3965 = vadd.f32 0.0, %v3964
    %v3966 = vpop.f32.mrf.mxu0
    %v3967 = vpop.f32.mrf.mxu0
    %v3968 = vadd.f32 0.0, %v3967
    %v3969 = vpop.f32.mrf.mxu0
    %3970 = vmatprep.mubr.bf16.mxu0 0
    %3971 = vmatmul.mubr.bf16.gmra.mxu0 %v3919
    %v3972 = vpop.f32.mrf.mxu0
    %v3973 = vadd.f32 0.0, %v3972
    %v3974 = vpop.f32.mrf.mxu0
    %v3975 = vpop.f32.mrf.mxu0
    %v3976 = vadd.f32 0.0, %v3975
    %v3977 = vpop.f32.mrf.mxu0
    %3978 = vmatprep.mubr.bf16.mxu0 0
    %3979 = vmatmul.mubr.bf16.gmra.mxu0 %v3922
    %v3980 = vpop.f32.mrf.mxu0
    %v3981 = vadd.f32 0.0, %v3980
    %v3982 = vpop.f32.mrf.mxu0
    %v3983 = vpop.f32.mrf.mxu0
    %v3984 = vadd.f32 0.0, %v3983
    %v3985 = vpop.f32.mrf.mxu0
    %3986 = vmatprep.mubr.bf16.mxu0 0
    %3987 = vmatmul.mubr.bf16.gmra.mxu0 %v3925
    %v3988 = vpop.f32.mrf.mxu0
    %v3989 = vadd.f32 0.0, %v3988
    %v3990 = vpop.f32.mrf.mxu0
    %v3991 = vpop.f32.mrf.mxu0
    %v3992 = vadd.f32 0.0, %v3991
    %v3993 = vpop.f32.mrf.mxu0
    %3994 = vmatprep.mubr.bf16.mxu0 0
    %3995 = vmatmul.mubr.bf16.gmra.mxu0 %v3928
    %v3996 = vpop.f32.mrf.mxu0
    %v3997 = vadd.f32 0.0, %v3996
    %v3998 = vpop.f32.mrf.mxu0
    %v3999 = vpop.f32.mrf.mxu0
    %v4000 = vpop.f32.mrf.mxu0
    %4001 = vdwg.mxu0
    %v4002 = vadd.f32 %v3838, %v3965
    %v4003 = vadd.f32 %v3839, %v3968
    %v4004 = vadd.f32 %v3840, %v3973
    %v4005 = vadd.f32 %v3841, %v3976
    %v4006 = vadd.f32 %v3842, %v3981
    %v4007 = vadd.f32 %v3843, %v3984
    %v4008 = vadd.f32 %v3844, %v3989
    %v4009 = vadd.f32 %v3845, %v3992
    %v4010 = vadd.f32 %v3846, %v3997
    %v4011 = vrot.slane %v3708, 2
    %v4012 = vrot.slane %v3709, 2
    %v4013 = vsel %vm726, %v4011, %v4012
    %v4014 = vrot.slane %v3710, 2
    %v4015 = vsel %vm726, %v4012, %v4014
    %v4016 = vrot.slane %v3711, 2
    %v4017 = vsel %vm726, %v4014, %v4016
    %v4018 = vrot.slane %v3712, 2
    %v4019 = vsel %vm726, %v4016, %v4018
    %v4028 = vunpack.c.l.b16 %v3281
    %v4029 = vunpack.c.l.b16 %v3282
    %v4030 = vunpack.c.l.b16 %v3283
    %v4031 = vunpack.c.l.b16 %v3284
    %v4032 = vunpack.c.l.b16 %v3285
    %v4033 = vunpack.c.l.b16 %v3286
    %v4034 = vunpack.c.l.b16 %v3287
    %v4035 = vunpack.c.l.b16 %v3288
    %v4036 = vpack.c.b16 %v4029, %v4028
    %v4037 = vpack.c.b16 %v4031, %v4030
    %v4038 = vpack.c.b16 %v4033, %v4032
    %v4039 = vpack.c.b16 %v4035, %v4034
    %v4045 = vsel %vm285, %v4013, 0
    %v4048 = vsel %vm285, %v4015, 0
    %v4051 = vsel %vm285, %v4017, 0
    %v4054 = vsel %vm285, %v4019, 0
    %v4057 = vsel %vm285, %v4018, 0
    %4059 = vmatprep.subr.bf16.mxu0 0
    %4060 = vmatpush1.bf16.msra.mxu0 0
    %4061 = vmatprep.subr.bf16.mxu0 0
    %4062 = vmatpush1.bf16.msra.mxu0 0
    %4063 = vmatprep.subr.bf16.mxu0 0
    %4064 = vmatpush1.bf16.msra.mxu0 0
    %4065 = vmatprep.subr.bf16.mxu0 0
    %4066 = vmatpush1.bf16.msra.mxu0 0
    %4067 = vmatprep.subr.bf16.mxu0 0
    %4068 = vmatpush1.bf16.msra.mxu0 %v4039
    %4069 = vmatprep.subr.bf16.mxu0 0
    %4070 = vmatpush1.bf16.msra.mxu0 %v4038
    %4071 = vmatprep.subr.bf16.mxu0 0
    %4072 = vmatpush1.bf16.msra.mxu0 %v4037
    %4073 = vmatprep.subr.bf16.mxu0 0
    %4074 = vmatpush1.bf16.msra.mxu0 %v4036
    %4075 = vmatprep.subr.bf16.mxu0 0
    %4076 = vmatpush2.bf16.msra.mxu0 0
    %4077 = vmatprep.subr.bf16.mxu0 0
    %4078 = vmatpush2.bf16.msra.mxu0 0
    %4079 = vmatprep.subr.bf16.mxu0 0
    %4080 = vmatpush2.bf16.msra.mxu0 0
    %4081 = vmatprep.subr.bf16.mxu0 0
    %4082 = vmatpush2.bf16.msra.mxu0 0
    %4083 = vmatprep.subr.bf16.mxu0 0
    %4084 = vmatpush2.bf16.msra.mxu0 0
    %4085 = vmatprep.subr.bf16.mxu0 0
    %4086 = vmatpush2.bf16.msra.mxu0 0
    %4087 = vmatprep.subr.bf16.mxu0 0
    %4088 = vmatpush2.bf16.msra.mxu0 0
    %4089 = vmatprep.subr.bf16.mxu0 0
    %4090 = vmatpush2.bf16.msra.mxu0 0
    %4091 = vmatprep.mubr.bf16.mxu0 0
    %4092 = vmatmul.mubr.bf16.gmra.mxu0 %v4045
    %v4093 = vpop.f32.mrf.mxu0
    %v4094 = vadd.f32 0.0, %v4093
    %v4095 = vpop.f32.mrf.mxu0
    %v4096 = vpop.f32.mrf.mxu0
    %v4097 = vadd.f32 0.0, %v4096
    %v4098 = vpop.f32.mrf.mxu0
    %4099 = vmatprep.mubr.bf16.mxu0 0
    %4100 = vmatmul.mubr.bf16.gmra.mxu0 %v4048
    %v4101 = vpop.f32.mrf.mxu0
    %v4102 = vadd.f32 0.0, %v4101
    %v4103 = vpop.f32.mrf.mxu0
    %v4104 = vpop.f32.mrf.mxu0
    %v4105 = vadd.f32 0.0, %v4104
    %v4106 = vpop.f32.mrf.mxu0
    %4107 = vmatprep.mubr.bf16.mxu0 0
    %4108 = vmatmul.mubr.bf16.gmra.mxu0 %v4051
    %v4109 = vpop.f32.mrf.mxu0
    %v4110 = vadd.f32 0.0, %v4109
    %v4111 = vpop.f32.mrf.mxu0
    %v4112 = vpop.f32.mrf.mxu0
    %v4113 = vadd.f32 0.0, %v4112
    %v4114 = vpop.f32.mrf.mxu0
    %4115 = vmatprep.mubr.bf16.mxu0 0
    %4116 = vmatmul.mubr.bf16.gmra.mxu0 %v4054
    %v4117 = vpop.f32.mrf.mxu0
    %v4118 = vadd.f32 0.0, %v4117
    %v4119 = vpop.f32.mrf.mxu0
    %v4120 = vpop.f32.mrf.mxu0
    %v4121 = vadd.f32 0.0, %v4120
    %v4122 = vpop.f32.mrf.mxu0
    %4123 = vmatprep.mubr.bf16.mxu0 0
    %4124 = vmatmul.mubr.bf16.gmra.mxu0 %v4057
    %v4125 = vpop.f32.mrf.mxu0
    %v4126 = vadd.f32 0.0, %v4125
    %v4127 = vpop.f32.mrf.mxu0
    %v4128 = vpop.f32.mrf.mxu0
    %v4129 = vpop.f32.mrf.mxu0
    %4130 = vdwg.mxu0
    %v4131 = vadd.f32 %v4002, %v4094
    %v4132 = vadd.f32 %v4003, %v4097
    %v4133 = vadd.f32 %v4004, %v4102
    %v4134 = vadd.f32 %v4005, %v4105
    %v4135 = vadd.f32 %v4006, %v4110
    %v4136 = vadd.f32 %v4007, %v4113
    %v4137 = vadd.f32 %v4008, %v4118
    %v4138 = vadd.f32 %v4009, %v4121
    %v4139 = vadd.f32 %v4010, %v4126
    %v4140 = vpack.c.bf16 %v3238, %v3237
    %v4141 = vpack.c.bf16 %v3239, %v3239
    %v4144 = vrot.slane %v3314, 2
    %v4145 = vrot.slane %v3315, 2
    %v4146 = vsel %vm726, %v4144, %v4145
    %v4147 = vrot.slane %v3316, 2
    %v4148 = vsel %vm726, %v4145, %v4147
    %v4149 = vrot.slane %v4140, 2
    %v4150 = vsel %vm726, %v4147, %v4149
    %v4151 = vrot.slane %v4141, 2
    %v4152 = vsel %vm726, %v4149, %v4151
    %v4161 = vunpack.c.l.b16 %v3289
    %v4162 = vunpack.c.l.b16 %v3290
    %v4163 = vunpack.c.l.b16 %v3291
    %v4164 = vunpack.c.l.b16 %v3292
    %v4165 = vunpack.c.l.b16 %v3293
    %v4166 = vunpack.c.l.b16 %v3294
    %v4167 = vunpack.c.l.b16 %v3295
    %v4168 = vunpack.c.l.b16 %v3296
    %v4169 = vpack.c.b16 %v4162, %v4161
    %v4170 = vpack.c.b16 %v4164, %v4163
    %v4171 = vpack.c.b16 %v4166, %v4165
    %v4172 = vpack.c.b16 %v4168, %v4167
    %v4178 = vsel %vm285, %v4146, 0
    %v4181 = vsel %vm285, %v4148, 0
    %v4184 = vsel %vm285, %v4150, 0
    %v4187 = vsel %vm285, %v4152, 0
    %v4190 = vsel %vm285, %v4151, 0
    %4192 = vmatprep.subr.bf16.mxu0 0
    %4193 = vmatpush1.bf16.msra.mxu0 0
    %4194 = vmatprep.subr.bf16.mxu0 0
    %4195 = vmatpush1.bf16.msra.mxu0 0
    %4196 = vmatprep.subr.bf16.mxu0 0
    %4197 = vmatpush1.bf16.msra.mxu0 0
    %4198 = vmatprep.subr.bf16.mxu0 0
    %4199 = vmatpush1.bf16.msra.mxu0 0
    %4200 = vmatprep.subr.bf16.mxu0 0
    %4201 = vmatpush1.bf16.msra.mxu0 %v4172
    %4202 = vmatprep.subr.bf16.mxu0 0
    %4203 = vmatpush1.bf16.msra.mxu0 %v4171
    %4204 = vmatprep.subr.bf16.mxu0 0
    %4205 = vmatpush1.bf16.msra.mxu0 %v4170
    %4206 = vmatprep.subr.bf16.mxu0 0
    %4207 = vmatpush1.bf16.msra.mxu0 %v4169
    %4208 = vmatprep.subr.bf16.mxu0 0
    %4209 = vmatpush2.bf16.msra.mxu0 0
    %4210 = vmatprep.subr.bf16.mxu0 0
    %4211 = vmatpush2.bf16.msra.mxu0 0
    %4212 = vmatprep.subr.bf16.mxu0 0
    %4213 = vmatpush2.bf16.msra.mxu0 0
    %4214 = vmatprep.subr.bf16.mxu0 0
    %4215 = vmatpush2.bf16.msra.mxu0 0
    %4216 = vmatprep.subr.bf16.mxu0 0
    %4217 = vmatpush2.bf16.msra.mxu0 0
    %4218 = vmatprep.subr.bf16.mxu0 0
    %4219 = vmatpush2.bf16.msra.mxu0 0
    %4220 = vmatprep.subr.bf16.mxu0 0
    %4221 = vmatpush2.bf16.msra.mxu0 0
    %4222 = vmatprep.subr.bf16.mxu0 0
    %4223 = vmatpush2.bf16.msra.mxu0 0
    %4224 = vmatprep.mubr.bf16.mxu0 0
    %4225 = vmatmul.mubr.bf16.gmra.mxu0 %v4178
    %v4226 = vpop.f32.mrf.mxu0
    %v4227 = vadd.f32 0.0, %v4226
    %v4228 = vpop.f32.mrf.mxu0
    %v4229 = vpop.f32.mrf.mxu0
    %v4230 = vadd.f32 0.0, %v4229
    %v4231 = vpop.f32.mrf.mxu0
    %4232 = vmatprep.mubr.bf16.mxu0 0
    %4233 = vmatmul.mubr.bf16.gmra.mxu0 %v4181
    %v4234 = vpop.f32.mrf.mxu0
    %v4235 = vadd.f32 0.0, %v4234
    %v4236 = vpop.f32.mrf.mxu0
    %v4237 = vpop.f32.mrf.mxu0
    %v4238 = vadd.f32 0.0, %v4237
    %v4239 = vpop.f32.mrf.mxu0
    %4240 = vmatprep.mubr.bf16.mxu0 0
    %4241 = vmatmul.mubr.bf16.gmra.mxu0 %v4184
    %v4242 = vpop.f32.mrf.mxu0
    %v4243 = vadd.f32 0.0, %v4242
    %v4244 = vpop.f32.mrf.mxu0
    %v4245 = vpop.f32.mrf.mxu0
    %v4246 = vadd.f32 0.0, %v4245
    %v4247 = vpop.f32.mrf.mxu0
    %4248 = vmatprep.mubr.bf16.mxu0 0
    %4249 = vmatmul.mubr.bf16.gmra.mxu0 %v4187
    %v4250 = vpop.f32.mrf.mxu0
    %v4251 = vadd.f32 0.0, %v4250
    %v4252 = vpop.f32.mrf.mxu0
    %v4253 = vpop.f32.mrf.mxu0
    %v4254 = vadd.f32 0.0, %v4253
    %v4255 = vpop.f32.mrf.mxu0
    %4256 = vmatprep.mubr.bf16.mxu0 0
    %4257 = vmatmul.mubr.bf16.gmra.mxu0 %v4190
    %v4258 = vpop.f32.mrf.mxu0
    %v4259 = vadd.f32 0.0, %v4258
    %v4260 = vpop.f32.mrf.mxu0
    %v4261 = vpop.f32.mrf.mxu0
    %v4262 = vpop.f32.mrf.mxu0
    %4263 = vdwg.mxu0
    %v4264 = vadd.f32 %v4131, %v4227
    %v4265 = vadd.f32 %v4132, %v4230
    %v4266 = vadd.f32 %v4133, %v4235
    %v4267 = vadd.f32 %v4134, %v4238
    %v4268 = vadd.f32 %v4135, %v4243
    %v4269 = vadd.f32 %v4136, %v4246
    %v4270 = vadd.f32 %v4137, %v4251
    %v4271 = vadd.f32 %v4138, %v4254
    %v4272 = vadd.f32 %v4139, %v4259
    %v4273 = vrot.slane %v3330, 2
    %v4274 = vrot.slane %v3326, 3
    %v4275 = vor.u32 %v4273, %v4274
    %v4276 = vrot.slane %v3338, 2
    %v4277 = vrot.slane %v3334, 3
    %v4278 = vor.u32 %v4276, %v4277
    %v4279 = vsel %vm1126, %v4275, %v4278
    %v4280 = vrot.slane %v3346, 2
    %v4281 = vrot.slane %v3342, 3
    %v4282 = vor.u32 %v4280, %v4281
    %v4283 = vsel %vm1126, %v4278, %v4282
    %v4285 = vshrl.u32 %v4140, 16
    %v4287 = vrot.slane %v4285, 2
    %v4288 = vshll.u32 %v4140, 16
    %v4290 = vrot.slane %v4288, 3
    %v4291 = vor.u32 %v4287, %v4290
    %v4292 = vsel %vm1126, %v4282, %v4291
    %v4294 = vshrl.u32 %v4141, 16
    %v4296 = vrot.slane %v4294, 2
    %v4297 = vshll.u32 %v4141, 16
    %v4299 = vrot.slane %v4297, 3
    %v4300 = vor.u32 %v4296, %v4299
    %v4301 = vsel %vm1126, %v4291, %v4300
    %v4310 = vunpack.c.l.b16 %v3297
    %v4311 = vunpack.c.l.b16 %v3298
    %v4312 = vunpack.c.l.b16 %v3299
    %v4313 = vunpack.c.l.b16 %v3300
    %v4314 = vunpack.c.l.b16 %v3301
    %v4315 = vunpack.c.l.b16 %v3302
    %v4316 = vunpack.c.l.b16 %v3303
    %v4317 = vunpack.c.l.b16 %v3304
    %v4318 = vpack.c.b16 %v4311, %v4310
    %v4319 = vpack.c.b16 %v4313, %v4312
    %v4320 = vpack.c.b16 %v4315, %v4314
    %v4321 = vpack.c.b16 %v4317, %v4316
    %v4327 = vsel %vm285, %v4279, 0
    %v4330 = vsel %vm285, %v4283, 0
    %v4333 = vsel %vm285, %v4292, 0
    %v4336 = vsel %vm285, %v4301, 0
    %v4339 = vsel %vm285, %v4300, 0
    %4341 = vmatprep.subr.bf16.mxu0 0
    %4342 = vmatpush1.bf16.msra.mxu0 0
    %4343 = vmatprep.subr.bf16.mxu0 0
    %4344 = vmatpush1.bf16.msra.mxu0 0
    %4345 = vmatprep.subr.bf16.mxu0 0
    %4346 = vmatpush1.bf16.msra.mxu0 0
    %4347 = vmatprep.subr.bf16.mxu0 0
    %4348 = vmatpush1.bf16.msra.mxu0 0
    %4349 = vmatprep.subr.bf16.mxu0 0
    %4350 = vmatpush1.bf16.msra.mxu0 %v4321
    %4351 = vmatprep.subr.bf16.mxu0 0
    %4352 = vmatpush1.bf16.msra.mxu0 %v4320
    %4353 = vmatprep.subr.bf16.mxu0 0
    %4354 = vmatpush1.bf16.msra.mxu0 %v4319
    %4355 = vmatprep.subr.bf16.mxu0 0
    %4356 = vmatpush1.bf16.msra.mxu0 %v4318
    %4357 = vmatprep.subr.bf16.mxu0 0
    %4358 = vmatpush2.bf16.msra.mxu0 0
    %4359 = vmatprep.subr.bf16.mxu0 0
    %4360 = vmatpush2.bf16.msra.mxu0 0
    %4361 = vmatprep.subr.bf16.mxu0 0
    %4362 = vmatpush2.bf16.msra.mxu0 0
    %4363 = vmatprep.subr.bf16.mxu0 0
    %4364 = vmatpush2.bf16.msra.mxu0 0
    %4365 = vmatprep.subr.bf16.mxu0 0
    %4366 = vmatpush2.bf16.msra.mxu0 0
    %4367 = vmatprep.subr.bf16.mxu0 0
    %4368 = vmatpush2.bf16.msra.mxu0 0
    %4369 = vmatprep.subr.bf16.mxu0 0
    %4370 = vmatpush2.bf16.msra.mxu0 0
    %4371 = vmatprep.subr.bf16.mxu0 0
    %4372 = vmatpush2.bf16.msra.mxu0 0
    %4373 = vmatprep.mubr.bf16.mxu0 0
    %4374 = vmatmul.mubr.bf16.gmra.mxu0 %v4327
    %v4375 = vpop.f32.mrf.mxu0
    %v4376 = vadd.f32 0.0, %v4375
    %v4377 = vpop.f32.mrf.mxu0
    %v4378 = vpop.f32.mrf.mxu0
    %v4379 = vadd.f32 0.0, %v4378
    %v4380 = vpop.f32.mrf.mxu0
    %4381 = vmatprep.mubr.bf16.mxu0 0
    %4382 = vmatmul.mubr.bf16.gmra.mxu0 %v4330
    %v4383 = vpop.f32.mrf.mxu0
    %v4384 = vadd.f32 0.0, %v4383
    %v4385 = vpop.f32.mrf.mxu0
    %v4386 = vpop.f32.mrf.mxu0
    %v4387 = vadd.f32 0.0, %v4386
    %v4388 = vpop.f32.mrf.mxu0
    %4389 = vmatprep.mubr.bf16.mxu0 0
    %4390 = vmatmul.mubr.bf16.gmra.mxu0 %v4333
    %v4391 = vpop.f32.mrf.mxu0
    %v4392 = vadd.f32 0.0, %v4391
    %v4393 = vpop.f32.mrf.mxu0
    %v4394 = vpop.f32.mrf.mxu0
    %v4395 = vadd.f32 0.0, %v4394
    %v4396 = vpop.f32.mrf.mxu0
    %4397 = vmatprep.mubr.bf16.mxu0 0
    %4398 = vmatmul.mubr.bf16.gmra.mxu0 %v4336
    %v4399 = vpop.f32.mrf.mxu0
    %v4400 = vadd.f32 0.0, %v4399
    %v4401 = vpop.f32.mrf.mxu0
    %v4402 = vpop.f32.mrf.mxu0
    %v4403 = vadd.f32 0.0, %v4402
    %v4404 = vpop.f32.mrf.mxu0
    %4405 = vmatprep.mubr.bf16.mxu0 0
    %4406 = vmatmul.mubr.bf16.gmra.mxu0 %v4339
    %v4407 = vpop.f32.mrf.mxu0
    %v4408 = vadd.f32 0.0, %v4407
    %v4409 = vpop.f32.mrf.mxu0
    %v4410 = vpop.f32.mrf.mxu0
    %v4411 = vpop.f32.mrf.mxu0
    %4412 = vdwg.mxu0
    %v4413 = vadd.f32 %v4264, %v4376
    %v4414 = vadd.f32 %v4265, %v4379
    %v4415 = vadd.f32 %v4266, %v4384
    %v4416 = vadd.f32 %v4267, %v4387
    %v4417 = vadd.f32 %v4268, %v4392
    %v4418 = vadd.f32 %v4269, %v4395
    %v4419 = vadd.f32 %v4270, %v4400
    %v4420 = vadd.f32 %v4271, %v4403
    %v4421 = vadd.f32 %v4272, %v4408
    %v4422 = vpack.c.bf16 %v3240, %v3239
    %v4424 = vrot.slane %v3314, 3
    %v4425 = vrot.slane %v3315, 3
    %v4426 = vsel %vm2077, %v4424, %v4425
    %v4427 = vrot.slane %v3316, 3
    %v4428 = vsel %vm2077, %v4425, %v4427
    %v4429 = vrot.slane %v4140, 3
    %v4430 = vsel %vm2077, %v4427, %v4429
    %v4431 = vrot.slane %v4422, 3
    %v4432 = vsel %vm2077, %v4429, %v4431
    %v4441 = vunpack.c.l.b16 %v3305
    %v4442 = vunpack.c.l.b16 %v3306
    %v4443 = vunpack.c.l.b16 %v3307
    %v4444 = vunpack.c.l.b16 %v3308
    %v4445 = vunpack.c.l.b16 %v3309
    %v4446 = vunpack.c.l.b16 %v3310
    %v4447 = vunpack.c.l.b16 %v3311
    %v4448 = vunpack.c.l.b16 %v3312
    %v4449 = vpack.c.b16 %v4442, %v4441
    %v4450 = vpack.c.b16 %v4444, %v4443
    %v4451 = vpack.c.b16 %v4446, %v4445
    %v4452 = vpack.c.b16 %v4448, %v4447
    %v4458 = vsel %vm285, %v4426, 0
    %v4461 = vsel %vm285, %v4428, 0
    %v4464 = vsel %vm285, %v4430, 0
    %v4467 = vsel %vm285, %v4432, 0
    %v4470 = vsel %vm285, %v4431, 0
    %4472 = vmatprep.subr.bf16.mxu0 0
    %4473 = vmatpush1.bf16.msra.mxu0 0
    %4474 = vmatprep.subr.bf16.mxu0 0
    %4475 = vmatpush1.bf16.msra.mxu0 0
    %4476 = vmatprep.subr.bf16.mxu0 0
    %4477 = vmatpush1.bf16.msra.mxu0 0
    %4478 = vmatprep.subr.bf16.mxu0 0
    %4479 = vmatpush1.bf16.msra.mxu0 0
    %4480 = vmatprep.subr.bf16.mxu0 0
    %4481 = vmatpush1.bf16.msra.mxu0 %v4452
    %4482 = vmatprep.subr.bf16.mxu0 0
    %4483 = vmatpush1.bf16.msra.mxu0 %v4451
    %4484 = vmatprep.subr.bf16.mxu0 0
    %4485 = vmatpush1.bf16.msra.mxu0 %v4450
    %4486 = vmatprep.subr.bf16.mxu0 0
    %4487 = vmatpush1.bf16.msra.mxu0 %v4449
    %4488 = vmatprep.subr.bf16.mxu0 0
    %4489 = vmatpush2.bf16.msra.mxu0 0
    %4490 = vmatprep.subr.bf16.mxu0 0
    %4491 = vmatpush2.bf16.msra.mxu0 0
    %4492 = vmatprep.subr.bf16.mxu0 0
    %4493 = vmatpush2.bf16.msra.mxu0 0
    %4494 = vmatprep.subr.bf16.mxu0 0
    %4495 = vmatpush2.bf16.msra.mxu0 0
    %4496 = vmatprep.subr.bf16.mxu0 0
    %4497 = vmatpush2.bf16.msra.mxu0 0
    %4498 = vmatprep.subr.bf16.mxu0 0
    %4499 = vmatpush2.bf16.msra.mxu0 0
    %4500 = vmatprep.subr.bf16.mxu0 0
    %4501 = vmatpush2.bf16.msra.mxu0 0
    %4502 = vmatprep.subr.bf16.mxu0 0
    %4503 = vmatpush2.bf16.msra.mxu0 0
    %4504 = vmatprep.mubr.bf16.mxu0 0
    %4505 = vmatmul.mubr.bf16.gmra.mxu0 %v4458
    %v4506 = vpop.f32.mrf.mxu0
    %v4507 = vadd.f32 0.0, %v4506
    %v4508 = vpop.f32.mrf.mxu0
    %v4509 = vpop.f32.mrf.mxu0
    %v4510 = vadd.f32 0.0, %v4509
    %v4511 = vpop.f32.mrf.mxu0
    %4512 = vmatprep.mubr.bf16.mxu0 0
    %4513 = vmatmul.mubr.bf16.gmra.mxu0 %v4461
    %v4514 = vpop.f32.mrf.mxu0
    %v4515 = vadd.f32 0.0, %v4514
    %v4516 = vpop.f32.mrf.mxu0
    %v4517 = vpop.f32.mrf.mxu0
    %v4518 = vadd.f32 0.0, %v4517
    %v4519 = vpop.f32.mrf.mxu0
    %4520 = vmatprep.mubr.bf16.mxu0 0
    %4521 = vmatmul.mubr.bf16.gmra.mxu0 %v4464
    %v4522 = vpop.f32.mrf.mxu0
    %v4523 = vadd.f32 0.0, %v4522
    %v4524 = vpop.f32.mrf.mxu0
    %v4525 = vpop.f32.mrf.mxu0
    %v4526 = vadd.f32 0.0, %v4525
    %v4527 = vpop.f32.mrf.mxu0
    %4528 = vmatprep.mubr.bf16.mxu0 0
    %4529 = vmatmul.mubr.bf16.gmra.mxu0 %v4467
    %v4530 = vpop.f32.mrf.mxu0
    %v4531 = vadd.f32 0.0, %v4530
    %v4532 = vpop.f32.mrf.mxu0
    %v4533 = vpop.f32.mrf.mxu0
    %v4534 = vadd.f32 0.0, %v4533
    %v4535 = vpop.f32.mrf.mxu0
    %4536 = vmatprep.mubr.bf16.mxu0 0
    %4537 = vmatmul.mubr.bf16.gmra.mxu0 %v4470
    %v4538 = vpop.f32.mrf.mxu0
    %v4539 = vadd.f32 0.0, %v4538
    %v4540 = vpop.f32.mrf.mxu0
    %v4541 = vpop.f32.mrf.mxu0
    %v4542 = vpop.f32.mrf.mxu0
    %4543 = vdwg.mxu0
    %v4544 = vadd.f32 %v4413, %v4507
    %v4545 = vadd.f32 %v4414, %v4510
    %v4546 = vadd.f32 %v4415, %v4515
    %v4547 = vadd.f32 %v4416, %v4518
    %v4548 = vadd.f32 %v4417, %v4523
    %v4549 = vadd.f32 %v4418, %v4526
    %v4550 = vadd.f32 %v4419, %v4531
    %v4551 = vadd.f32 %v4420, %v4534
    %v4552 = vadd.f32 %v4421, %v4539
    %v4553 = vld [vmem:[%s8] sm:$0x1]
    %v4555 = vlaneseq
    %v4556 = vshrl.u32 %v4555, 7
    %v4557 = vsub.s32 0, %v4556
    %v4558 = vrot.slane %v4553, %v4557
    %v4560 = vadd.f32 %v4544, %v4558
    %v4561 = vadd.f32 %v4545, %v4558
    %v4562 = vadd.f32 %v4546, %v4558
    %v4563 = vadd.f32 %v4547, %v4558
    %v4564 = vadd.f32 %v4548, %v4558
    %v4565 = vadd.f32 %v4549, %v4558
    %v4566 = vadd.f32 %v4550, %v4558
    %v4567 = vadd.f32 %v4551, %v4558
    %v4568 = vadd.f32 %v4552, %v4558
    %v4569 = vmax.f32 %v4560, 0.0
    %v4570 = vmax.f32 %v4561, 0.0
    %v4571 = vmax.f32 %v4562, 0.0
    %v4572 = vmax.f32 %v4563, 0.0
    %v4573 = vmax.f32 %v4564, 0.0
    %v4574 = vmax.f32 %v4565, 0.0
    %v4575 = vmax.f32 %v4566, 0.0
    %v4576 = vmax.f32 %v4567, 0.0
    %v4577 = vmax.f32 %v4568, 0.0
    %vm4580 = vcmask 1044480
    %v4581 = vrot.slane %v4570, 3
    %v4582 = vrot.slane %v4571, 3
    %v4583 = vsel %vm4580, %v4581, %v4582
    %vm4587 = vcmask 1041408
    %v4588 = vrot.slane %v4571, 6
    %v4589 = vrot.slane %v4572, 6
    %v4590 = vsel %vm4587, %v4588, %v4589
    %vm4594 = vcmask 1046528
    %v4595 = vrot.slane %v4572, 1
    %v4596 = vrot.slane %v4573, 1
    %v4597 = vsel %vm4594, %v4595, %v4596
    %v4601 = vrot.slane %v4574, 4
    %vm4605 = vcmask 1040384
    %v4606 = vrot.slane %v4575, 7
    %v4607 = vrot.slane %v4576, 7
    %v4608 = vsel %vm4605, %v4606, %v4607
    %vm4612 = vcmask 1045504
    %v4613 = vrot.slane %v4576, 2
    %v4614 = vrot.slane %v4577, 2
    %v4615 = vsel %vm4612, %v4613, %v4614
    %v4617 = vsel %vm4594, %v4569, %v4581
    %v4618 = vsel %vm4612, %v4583, %v4588
    %v4619 = vsel %vm4580, %v4590, %v4597
    %vm4620 = vcmask 1043456
    %v4621 = vsel %vm4620, %v4596, %v4601
    %vm4622 = vcmask 1042432
    %v4623 = vsel %vm4622, %v4601, %v4606
    %v4624 = vsel %vm4587, %v4608, %v4615
    %v4625 = vld [vmem:[%s1] sm:$0x1]
    %v4626 = vld [vmem:[%s2] sm:$0x1]
    %v4627 = vld [vmem:[%s9] sm:$0xff]
    %v4628 = vld [vmem:[%s9 + $0x8] sm:$0xff]
    %v4629 = vld [vmem:[%s9 + $0x10] sm:$0xff]
    %v4630 = vld [vmem:[%s9 + $0x18] sm:$0xff]
    %v4631 = vld [vmem:[%s9 + $0x20] sm:$0xff]
    %v4632 = vld [vmem:[%s9 + $0x28] sm:$0xff]
    %v4633 = vld [vmem:[%s9 + $0x30] sm:$0xff]
    %v4634 = vld [vmem:[%s9 + $0x38] sm:$0xff]
    %v4635 = vld [vmem:[%s9 + $0x40] sm:$0xff]
    %v4636 = vld [vmem:[%s9 + $0x48] sm:$0xff]
    %v4637 = vld [vmem:[%s9 + $0x50] sm:$0xff]
    %v4638 = vld [vmem:[%s9 + $0x58] sm:$0xff]
    %v4639 = vld [vmem:[%s9 + $0x60] sm:$0xff]
    %v4640 = vld [vmem:[%s9 + $0x68] sm:$0xff]
    %v4641 = vld [vmem:[%s9 + $0x70] sm:$0xff]
    %v4642 = vld [vmem:[%s9 + $0x78] sm:$0xff]
    %v4643 = vld [vmem:[%s9 + $0x80] sm:$0xff]
    %v4644 = vld [vmem:[%s9 + $0x88] sm:$0xff]
    %v4645 = vld [vmem:[%s9 + $0x90] sm:$0xff]
    %v4646 = vld [vmem:[%s9 + $0x98] sm:$0xff]
    %v4647 = vld [vmem:[%s9 + $0xa0] sm:$0xff]
    %v4648 = vld [vmem:[%s9 + $0xa8] sm:$0xff]
    %v4649 = vld [vmem:[%s9 + $0xb0] sm:$0xff]
    %v4650 = vld [vmem:[%s9 + $0xb8] sm:$0xff]
    %v4652 = vsel %vm285, %v4625, 0
    %4654 = vmatprep.subr.mxu0 0.0
    %4655 = vmatpush1.msra.mxu0 0.0
    %4656 = vmatprep.subr.mxu0 0.0
    %4657 = vmatpush1.msra.mxu0 0.0
    %4658 = vmatprep.subr.mxu0 0.0
    %4659 = vmatpush1.msra.mxu0 0.0
    %4660 = vmatprep.subr.mxu0 0.0
    %4661 = vmatpush1.msra.mxu0 0.0
    %4662 = vmatprep.subr.mxu0 0.0
    %4663 = vmatpush1.msra.mxu0 0.0
    %4664 = vmatprep.subr.mxu0 0.0
    %4665 = vmatpush1.msra.mxu0 0.0
    %4666 = vmatprep.subr.mxu0 0.0
    %4667 = vmatpush1.msra.mxu0 0.0
    %4668 = vmatprep.subr.mxu0 0.0
    %4669 = vmatpush1.msra.mxu0 0.0
    %4670 = vmatprep.subr.mxu0 %v4649
    %4671 = vmatpush1.msra.mxu0 %v4648
    %4672 = vmatprep.subr.mxu0 %v4646
    %4673 = vmatpush1.msra.mxu0 %v4645
    %4674 = vmatprep.subr.mxu0 %v4643
    %4675 = vmatpush1.msra.mxu0 %v4642
    %4676 = vmatprep.subr.mxu0 %v4640
    %4677 = vmatpush1.msra.mxu0 %v4639
    %4678 = vmatprep.subr.mxu0 %v4637
    %4679 = vmatpush1.msra.mxu0 %v4636
    %4680 = vmatprep.subr.mxu0 %v4634
    %4681 = vmatpush1.msra.mxu0 %v4633
    %4682 = vmatprep.subr.mxu0 %v4631
    %4683 = vmatpush1.msra.mxu0 %v4630
    %4684 = vmatprep.subr.mxu0 %v4628
    %4685 = vmatpush1.msra.mxu0 %v4627
    %4686 = vmatprep.subr.mxu0 0.0
    %4687 = vmatpush2.msra.mxu0 0.0
    %4688 = vmatprep.subr.mxu0 0.0
    %4689 = vmatpush2.msra.mxu0 0.0
    %4690 = vmatprep.subr.mxu0 0.0
    %4691 = vmatpush2.msra.mxu0 0.0
    %4692 = vmatprep.subr.mxu0 0.0
    %4693 = vmatpush2.msra.mxu0 0.0
    %4694 = vmatprep.subr.mxu0 0.0
    %4695 = vmatpush2.msra.mxu0 0.0
    %4696 = vmatprep.subr.mxu0 0.0
    %4697 = vmatpush2.msra.mxu0 0.0
    %4698 = vmatprep.subr.mxu0 0.0
    %4699 = vmatpush2.msra.mxu0 0.0
    %4700 = vmatprep.subr.mxu0 0.0
    %4701 = vmatpush2.msra.mxu0 0.0
    %4702 = vmatprep.subr.mxu0 0.0
    %4703 = vmatpush2.msra.mxu0 0.0
    %4704 = vmatprep.subr.mxu0 0.0
    %4705 = vmatpush2.msra.mxu0 0.0
    %4706 = vmatprep.subr.mxu0 0.0
    %4707 = vmatpush2.msra.mxu0 0.0
    %4708 = vmatprep.subr.mxu0 0.0
    %4709 = vmatpush2.msra.mxu0 0.0
    %4710 = vmatprep.subr.mxu0 0.0
    %4711 = vmatpush2.msra.mxu0 0.0
    %4712 = vmatprep.subr.mxu0 0.0
    %4713 = vmatpush2.msra.mxu0 0.0
    %4714 = vmatprep.subr.mxu0 0.0
    %4715 = vmatpush2.msra.mxu0 0.0
    %4716 = vmatprep.subr.mxu0 0.0
    %4717 = vmatpush2.msra.mxu0 0.0
    %4718 = vmatprep.mubr.f32.mxu0 0.0
    %4719 = vmatmul.mubr.f32.gmra.mxu0 %v4652
    %v4720 = vpop.f32.mrf.mxu0
    %v4721 = vadd.f32 0.0, %v4720
    %v4722 = vpop.f32.mrf.mxu0
    %v4723 = vadd.f32 0.0, %v4722
    %4724 = vdwg.mxu0
    %4725 = vmatprep.subr.mxu0 0.0
    %4726 = vmatpush1.msra.mxu0 0.0
    %4727 = vmatprep.subr.mxu0 0.0
    %4728 = vmatpush1.msra.mxu0 0.0
    %4729 = vmatprep.subr.mxu0 0.0
    %4730 = vmatpush1.msra.mxu0 0.0
    %4731 = vmatprep.subr.mxu0 0.0
    %4732 = vmatpush1.msra.mxu0 0.0
    %4733 = vmatprep.subr.mxu0 0.0
    %4734 = vmatpush1.msra.mxu0 0.0
    %4735 = vmatprep.subr.mxu0 0.0
    %4736 = vmatpush1.msra.mxu0 0.0
    %4737 = vmatprep.subr.mxu0 0.0
    %4738 = vmatpush1.msra.mxu0 0.0
    %4739 = vmatprep.subr.mxu0 0.0
    %4740 = vmatpush1.msra.mxu0 0.0
    %4741 = vmatprep.subr.mxu0 0.0
    %4742 = vmatpush1.msra.mxu0 %v4650
    %4743 = vmatprep.subr.mxu0 0.0
    %4744 = vmatpush1.msra.mxu0 %v4647
    %4745 = vmatprep.subr.mxu0 0.0
    %4746 = vmatpush1.msra.mxu0 %v4644
    %4747 = vmatprep.subr.mxu0 0.0
    %4748 = vmatpush1.msra.mxu0 %v4641
    %4749 = vmatprep.subr.mxu0 0.0
    %4750 = vmatpush1.msra.mxu0 %v4638
    %4751 = vmatprep.subr.mxu0 0.0
    %4752 = vmatpush1.msra.mxu0 %v4635
    %4753 = vmatprep.subr.mxu0 0.0
    %4754 = vmatpush1.msra.mxu0 %v4632
    %4755 = vmatprep.subr.mxu0 0.0
    %4756 = vmatpush1.msra.mxu0 %v4629
    %4757 = vmatprep.subr.mxu0 0.0
    %4758 = vmatpush2.msra.mxu0 0.0
    %4759 = vmatprep.subr.mxu0 0.0
    %4760 = vmatpush2.msra.mxu0 0.0
    %4761 = vmatprep.subr.mxu0 0.0
    %4762 = vmatpush2.msra.mxu0 0.0
    %4763 = vmatprep.subr.mxu0 0.0
    %4764 = vmatpush2.msra.mxu0 0.0
    %4765 = vmatprep.subr.mxu0 0.0
    %4766 = vmatpush2.msra.mxu0 0.0
    %4767 = vmatprep.subr.mxu0 0.0
    %4768 = vmatpush2.msra.mxu0 0.0
    %4769 = vmatprep.subr.mxu0 0.0
    %4770 = vmatpush2.msra.mxu0 0.0
    %4771 = vmatprep.subr.mxu0 0.0
    %4772 = vmatpush2.msra.mxu0 0.0
    %4773 = vmatprep.subr.mxu0 0.0
    %4774 = vmatpush2.msra.mxu0 0.0
    %4775 = vmatprep.subr.mxu0 0.0
    %4776 = vmatpush2.msra.mxu0 0.0
    %4777 = vmatprep.subr.mxu0 0.0
    %4778 = vmatpush2.msra.mxu0 0.0
    %4779 = vmatprep.subr.mxu0 0.0
    %4780 = vmatpush2.msra.mxu0 0.0
    %4781 = vmatprep.subr.mxu0 0.0
    %4782 = vmatpush2.msra.mxu0 0.0
    %4783 = vmatprep.subr.mxu0 0.0
    %4784 = vmatpush2.msra.mxu0 0.0
    %4785 = vmatprep.subr.mxu0 0.0
    %4786 = vmatpush2.msra.mxu0 0.0
    %4787 = vmatprep.subr.mxu0 0.0
    %4788 = vmatpush2.msra.mxu0 0.0
    %4789 = vmatprep.mubr.f32.mxu0 0.0
    %4790 = vmatmul.mubr.f32.gmra.mxu0 %v4652
    %v4791 = vpop.f32.mrf.mxu0
    %v4792 = vadd.f32 0.0, %v4791
    %v4793 = vpop.f32.mrf.mxu0
    %4794 = vdwg.mxu0
    %v4795 = vld [vmem:[%s10] sm:$0x1]
    %v4796 = vadd.f32 %v4721, %v4795
    %v4797 = vld [vmem:[%s11] sm:$0x3]
    %v4799 = vlaneseq
    %v4800 = vshrl.u32 %v4799, 7
    %v4801 = vsub.s32 0, %v4800
    %v4802 = vrot.slane %v4797, %v4801
    %v4803 = vlaneseq
    %v4804 = vshrl.u32 %v4803, 7
    %v4805 = vsub.s32 1, %v4804
    %v4806 = vrot.slane %v4797, %v4805
    %4807 = vrot.lane.b32.xlu0 %v4802, 64
    %v4808 = vpop.permute.xlu0 %4807
    %4809 = vrot.lane.b32.xlu0 %v4806, 64
    %v4810 = vpop.permute.xlu0 %4809
    %v4811 = vsel %vm285, %v4808, %v4810
    %v4815 = vadd.f32 %v4721, %v4808
    %v4816 = vadd.f32 %v4723, %v4811
    %v4817 = vadd.f32 %v4792, %v4810
    %v4818 = vld [vmem:[%s12] sm:$0xff]
    %v4819 = vld [vmem:[%s12 + $0x8] sm:$0xff]
    %v4820 = vld [vmem:[%s12 + $0x10] sm:$0xff]
    %v4821 = vld [vmem:[%s12 + $0x18] sm:$0xff]
    %v4822 = vld [vmem:[%s12 + $0x20] sm:$0xff]
    %v4823 = vld [vmem:[%s12 + $0x28] sm:$0xff]
    %v4824 = vld [vmem:[%s12 + $0x30] sm:$0xff]
    %v4825 = vld [vmem:[%s12 + $0x38] sm:$0xff]
    %v4826 = vld [vmem:[%s13] sm:$0x1]
    %v4828 = vlaneseq
    %v4829 = vshrl.u32 %v4828, 7
    %v4830 = vsub.s32 0, %v4829
    %v4831 = vrot.slane %v4826, %v4830
    %v4834 = vsel %vm285, %v4617, 0
    %v4837 = vsel %vm285, %v4618, 0
    %v4840 = vsel %vm285, %v4619, 0
    %v4843 = vsel %vm285, %v4621, 0
    %v4846 = vsel %vm285, %v4623, 0
    %v4849 = vsel %vm285, %v4624, 0
    %v4851 = vsel %vm285, %v4614, 0
    %4853 = vmatprep.subr.mxu0 0.0
    %4854 = vmatpush1.msra.mxu0 0.0
    %4855 = vmatprep.subr.mxu0 0.0
    %4856 = vmatpush1.msra.mxu0 0.0
    %4857 = vmatprep.subr.mxu0 0.0
    %4858 = vmatpush1.msra.mxu0 0.0
    %4859 = vmatprep.subr.mxu0 0.0
    %4860 = vmatpush1.msra.mxu0 0.0
    %4861 = vmatprep.subr.mxu0 0.0
    %4862 = vmatpush1.msra.mxu0 0.0
    %4863 = vmatprep.subr.mxu0 0.0
    %4864 = vmatpush1.msra.mxu0 0.0
    %4865 = vmatprep.subr.mxu0 0.0
    %4866 = vmatpush1.msra.mxu0 0.0
    %4867 = vmatprep.subr.mxu0 0.0
    %4868 = vmatpush1.msra.mxu0 0.0
    %4869 = vmatprep.subr.mxu0 0.0
    %4870 = vmatpush1.msra.mxu0 %v4825
    %4871 = vmatprep.subr.mxu0 0.0
    %4872 = vmatpush1.msra.mxu0 %v4824
    %4873 = vmatprep.subr.mxu0 0.0
    %4874 = vmatpush1.msra.mxu0 %v4823
    %4875 = vmatprep.subr.mxu0 0.0
    %4876 = vmatpush1.msra.mxu0 %v4822
    %4877 = vmatprep.subr.mxu0 0.0
    %4878 = vmatpush1.msra.mxu0 %v4821
    %4879 = vmatprep.subr.mxu0 0.0
    %4880 = vmatpush1.msra.mxu0 %v4820
    %4881 = vmatprep.subr.mxu0 0.0
    %4882 = vmatpush1.msra.mxu0 %v4819
    %4883 = vmatprep.subr.mxu0 0.0
    %4884 = vmatpush1.msra.mxu0 %v4818
    %4885 = vmatprep.subr.mxu0 0.0
    %4886 = vmatpush2.msra.mxu0 0.0
    %4887 = vmatprep.subr.mxu0 0.0
    %4888 = vmatpush2.msra.mxu0 0.0
    %4889 = vmatprep.subr.mxu0 0.0
    %4890 = vmatpush2.msra.mxu0 0.0
    %4891 = vmatprep.subr.mxu0 0.0
    %4892 = vmatpush2.msra.mxu0 0.0
    %4893 = vmatprep.subr.mxu0 0.0
    %4894 = vmatpush2.msra.mxu0 0.0
    %4895 = vmatprep.subr.mxu0 0.0
    %4896 = vmatpush2.msra.mxu0 0.0
    %4897 = vmatprep.subr.mxu0 0.0
    %4898 = vmatpush2.msra.mxu0 0.0
    %4899 = vmatprep.subr.mxu0 0.0
    %4900 = vmatpush2.msra.mxu0 0.0
    %4901 = vmatprep.subr.mxu0 0.0
    %4902 = vmatpush2.msra.mxu0 0.0
    %4903 = vmatprep.subr.mxu0 0.0
    %4904 = vmatpush2.msra.mxu0 0.0
    %4905 = vmatprep.subr.mxu0 0.0
    %4906 = vmatpush2.msra.mxu0 0.0
    %4907 = vmatprep.subr.mxu0 0.0
    %4908 = vmatpush2.msra.mxu0 0.0
    %4909 = vmatprep.subr.mxu0 0.0
    %4910 = vmatpush2.msra.mxu0 0.0
    %4911 = vmatprep.subr.mxu0 0.0
    %4912 = vmatpush2.msra.mxu0 0.0
    %4913 = vmatprep.subr.mxu0 0.0
    %4914 = vmatpush2.msra.mxu0 0.0
    %4915 = vmatprep.subr.mxu0 0.0
    %4916 = vmatpush2.msra.mxu0 0.0
    %4917 = vmatprep.mubr.f32.mxu0 0.0
    %4918 = vmatmul.mubr.f32.gmra.mxu0 %v4834
    %v4919 = vpop.f32.mrf.mxu0
    %v4920 = vadd.f32 %v4831, %v4919
    %v4921 = vpop.f32.mrf.mxu0
    %4922 = vmatprep.mubr.f32.mxu0 0.0
    %4923 = vmatmul.mubr.f32.gmra.mxu0 %v4837
    %v4924 = vpop.f32.mrf.mxu0
    %v4925 = vadd.f32 %v4831, %v4924
    %v4926 = vpop.f32.mrf.mxu0
    %4927 = vmatprep.mubr.f32.mxu0 0.0
    %4928 = vmatmul.mubr.f32.gmra.mxu0 %v4840
    %v4929 = vpop.f32.mrf.mxu0
    %v4930 = vadd.f32 %v4831, %v4929
    %v4931 = vpop.f32.mrf.mxu0
    %4932 = vmatprep.mubr.f32.mxu0 0.0
    %4933 = vmatmul.mubr.f32.gmra.mxu0 %v4843
    %v4934 = vpop.f32.mrf.mxu0
    %v4935 = vadd.f32 %v4831, %v4934
    %v4936 = vpop.f32.mrf.mxu0
    %4937 = vmatprep.mubr.f32.mxu0 0.0
    %4938 = vmatmul.mubr.f32.gmra.mxu0 %v4846
    %v4939 = vpop.f32.mrf.mxu0
    %v4940 = vadd.f32 %v4831, %v4939
    %v4941 = vpop.f32.mrf.mxu0
    %4942 = vmatprep.mubr.f32.mxu0 0.0
    %4943 = vmatmul.mubr.f32.gmra.mxu0 %v4849
    %v4944 = vpop.f32.mrf.mxu0
    %v4945 = vadd.f32 %v4831, %v4944
    %v4946 = vpop.f32.mrf.mxu0
    %4947 = vmatprep.mubr.f32.mxu0 0.0
    %4948 = vmatmul.mubr.f32.gmra.mxu0 %v4851
    %v4949 = vpop.f32.mrf.mxu0
    %v4950 = vadd.f32 %v4831, %v4949
    %v4951 = vpop.f32.mrf.mxu0
    %4952 = vdwg.mxu0
    %v4953 = vlaneseq
    %v4954 = vshrl.u32 %v4953, 7
    %v4955 = vsub.s32 0, %v4954
    %v4956 = vrot.slane %v4796, %v4955
    %v4957 = vadd.f32 %v4920, %v4956
    %v4958 = vadd.f32 %v4925, %v4956
    %v4959 = vadd.f32 %v4930, %v4956
    %v4960 = vadd.f32 %v4935, %v4956
    %v4961 = vadd.f32 %v4940, %v4956
    %v4962 = vadd.f32 %v4945, %v4956
    %v4963 = vadd.f32 %v4950, %v4956
    %v4964 = vtanh.pop %v4957
    %v4965 = vtanh.pop %v4958
    %v4966 = vtanh.pop %v4959
    %v4967 = vtanh.pop %v4960
    %v4968 = vtanh.pop %v4961
    %v4969 = vtanh.pop %v4962
    %v4970 = vtanh.pop %v4963
    %v4971 = vld [vmem:[%s14] sm:$0xff]
    %v4972 = vld [vmem:[%s14 + $0x8] sm:$0xff]
    %v4973 = vld [vmem:[%s14 + $0x10] sm:$0xff]
    %v4974 = vld [vmem:[%s14 + $0x18] sm:$0xff]
    %v4975 = vld [vmem:[%s14 + $0x20] sm:$0xff]
    %v4976 = vld [vmem:[%s14 + $0x28] sm:$0xff]
    %v4977 = vld [vmem:[%s14 + $0x30] sm:$0xff]
    %v4978 = vld [vmem:[%s14 + $0x38] sm:$0xff]
    %v4979 = vld [vmem:[%s15] sm:$0x1]
    %v4981 = vlaneseq
    %v4982 = vshrl.u32 %v4981, 7
    %v4983 = vsub.s32 0, %v4982
    %v4984 = vrot.slane %v4979, %v4983
    %v4987 = vsel %vm285, %v4964, 0
    %v4990 = vsel %vm285, %v4965, 0
    %v4993 = vsel %vm285, %v4966, 0
    %v4996 = vsel %vm285, %v4967, 0
    %v4999 = vsel %vm285, %v4968, 0
    %v5002 = vsel %vm285, %v4969, 0
    %v5005 = vsel %vm285, %v4970, 0
    %5007 = vmatprep.subr.mxu0 0.0
    %5008 = vmatpush1.msra.mxu0 0.0
    %5009 = vmatprep.subr.mxu0 0.0
    %5010 = vmatpush1.msra.mxu0 0.0
    %5011 = vmatprep.subr.mxu0 0.0
    %5012 = vmatpush1.msra.mxu0 0.0
    %5013 = vmatprep.subr.mxu0 0.0
    %5014 = vmatpush1.msra.mxu0 0.0
    %5015 = vmatprep.subr.mxu0 0.0
    %5016 = vmatpush1.msra.mxu0 0.0
    %5017 = vmatprep.subr.mxu0 0.0
    %5018 = vmatpush1.msra.mxu0 0.0
    %5019 = vmatprep.subr.mxu0 0.0
    %5020 = vmatpush1.msra.mxu0 0.0
    %5021 = vmatprep.subr.mxu0 0.0
    %5022 = vmatpush1.msra.mxu0 0.0
    %5023 = vmatprep.subr.mxu0 0.0
    %5024 = vmatpush1.msra.mxu0 %v4978
    %5025 = vmatprep.subr.mxu0 0.0
    %5026 = vmatpush1.msra.mxu0 %v4977
    %5027 = vmatprep.subr.mxu0 0.0
    %5028 = vmatpush1.msra.mxu0 %v4976
    %5029 = vmatprep.subr.mxu0 0.0
    %5030 = vmatpush1.msra.mxu0 %v4975
    %5031 = vmatprep.subr.mxu0 0.0
    %5032 = vmatpush1.msra.mxu0 %v4974
    %5033 = vmatprep.subr.mxu0 0.0
    %5034 = vmatpush1.msra.mxu0 %v4973
    %5035 = vmatprep.subr.mxu0 0.0
    %5036 = vmatpush1.msra.mxu0 %v4972
    %5037 = vmatprep.subr.mxu0 0.0
    %5038 = vmatpush1.msra.mxu0 %v4971
    %5039 = vmatprep.subr.mxu0 0.0
    %5040 = vmatpush2.msra.mxu0 0.0
    %5041 = vmatprep.subr.mxu0 0.0
    %5042 = vmatpush2.msra.mxu0 0.0
    %5043 = vmatprep.subr.mxu0 0.0
    %5044 = vmatpush2.msra.mxu0 0.0
    %5045 = vmatprep.subr.mxu0 0.0
    %5046 = vmatpush2.msra.mxu0 0.0
    %5047 = vmatprep.subr.mxu0 0.0
    %5048 = vmatpush2.msra.mxu0 0.0
    %5049 = vmatprep.subr.mxu0 0.0
    %5050 = vmatpush2.msra.mxu0 0.0
    %5051 = vmatprep.subr.mxu0 0.0
    %5052 = vmatpush2.msra.mxu0 0.0
    %5053 = vmatprep.subr.mxu0 0.0
    %5054 = vmatpush2.msra.mxu0 0.0
    %5055 = vmatprep.subr.mxu0 0.0
    %5056 = vmatpush2.msra.mxu0 0.0
    %5057 = vmatprep.subr.mxu0 0.0
    %5058 = vmatpush2.msra.mxu0 0.0
    %5059 = vmatprep.subr.mxu0 0.0
    %5060 = vmatpush2.msra.mxu0 0.0
    %5061 = vmatprep.subr.mxu0 0.0
    %5062 = vmatpush2.msra.mxu0 0.0
    %5063 = vmatprep.subr.mxu0 0.0
    %5064 = vmatpush2.msra.mxu0 0.0
    %5065 = vmatprep.subr.mxu0 0.0
    %5066 = vmatpush2.msra.mxu0 0.0
    %5067 = vmatprep.subr.mxu0 0.0
    %5068 = vmatpush2.msra.mxu0 0.0
    %5069 = vmatprep.subr.mxu0 0.0
    %5070 = vmatpush2.msra.mxu0 0.0
    %5071 = vmatprep.mubr.f32.mxu0 0.0
    %5072 = vmatmul.mubr.f32.gmra.mxu0 %v4987
    %v5073 = vpop.f32.mrf.mxu0
    %v5074 = vadd.f32 %v4984, %v5073
    %v5075 = vpop.f32.mrf.mxu0
    %5076 = vmatprep.mubr.f32.mxu0 0.0
    %5077 = vmatmul.mubr.f32.gmra.mxu0 %v4990
    %v5078 = vpop.f32.mrf.mxu0
    %v5079 = vadd.f32 %v4984, %v5078
    %v5080 = vpop.f32.mrf.mxu0
    %5081 = vmatprep.mubr.f32.mxu0 0.0
    %5082 = vmatmul.mubr.f32.gmra.mxu0 %v4993
    %v5083 = vpop.f32.mrf.mxu0
    %v5084 = vadd.f32 %v4984, %v5083
    %v5085 = vpop.f32.mrf.mxu0
    %5086 = vmatprep.mubr.f32.mxu0 0.0
    %5087 = vmatmul.mubr.f32.gmra.mxu0 %v4996
    %v5088 = vpop.f32.mrf.mxu0
    %v5089 = vadd.f32 %v4984, %v5088
    %v5090 = vpop.f32.mrf.mxu0
    %5091 = vmatprep.mubr.f32.mxu0 0.0
    %5092 = vmatmul.mubr.f32.gmra.mxu0 %v4999
    %v5093 = vpop.f32.mrf.mxu0
    %v5094 = vadd.f32 %v4984, %v5093
    %v5095 = vpop.f32.mrf.mxu0
    %5096 = vmatprep.mubr.f32.mxu0 0.0
    %5097 = vmatmul.mubr.f32.gmra.mxu0 %v5002
    %v5098 = vpop.f32.mrf.mxu0
    %v5099 = vadd.f32 %v4984, %v5098
    %v5100 = vpop.f32.mrf.mxu0
    %5101 = vmatprep.mubr.f32.mxu0 0.0
    %5102 = vmatmul.mubr.f32.gmra.mxu0 %v5005
    %v5103 = vpop.f32.mrf.mxu0
    %v5104 = vadd.f32 %v4984, %v5103
    %v5105 = vpop.f32.mrf.mxu0
    %5106 = vdwg.mxu0
    %v5107 = vsel %vm285, %v5074, -inf
    %5108 = vmax.xlane.f32.xlu0 %v5107
    %v5109 = vpop.xlane.xlu0 %5108
    %v5110 = vsel %vm285, %v5079, -inf
    %5111 = vmax.xlane.f32.xlu0 %v5110
    %v5112 = vpop.xlane.xlu0 %5111
    %v5113 = vsel %vm285, %v5084, -inf
    %5114 = vmax.xlane.f32.xlu0 %v5113
    %v5115 = vpop.xlane.xlu0 %5114
    %v5116 = vsel %vm285, %v5089, -inf
    %5117 = vmax.xlane.f32.xlu0 %v5116
    %v5118 = vpop.xlane.xlu0 %5117
    %v5119 = vsel %vm285, %v5094, -inf
    %5120 = vmax.xlane.f32.xlu0 %v5119
    %v5121 = vpop.xlane.xlu0 %5120
    %v5122 = vsel %vm285, %v5099, -inf
    %5123 = vmax.xlane.f32.xlu0 %v5122
    %v5124 = vpop.xlane.xlu0 %5123
    %vm5125 = vcmask 516096
    %v5126 = vsel %vm5125, %v5104, -inf
    %5127 = vmax.xlane.f32.xlu0 %v5126
    %v5128 = vpop.xlane.xlu0 %5127
    %v5129 = vsub.f32 %v5074, %v5109
    %v5130 = vsub.f32 %v5079, %v5112
    %v5131 = vsub.f32 %v5084, %v5115
    %v5132 = vsub.f32 %v5089, %v5118
    %v5133 = vsub.f32 %v5094, %v5121
    %v5134 = vsub.f32 %v5099, %v5124
    %v5135 = vsub.f32 %v5104, %v5128
    %v5136 = vmul.f32 %v5129, 1.442695
    %v5137 = vpow.pop %v5136
    %v5138 = vmul.f32 %v5130, 1.442695
    %v5139 = vpow.pop %v5138
    %v5140 = vmul.f32 %v5131, 1.442695
    %v5141 = vpow.pop %v5140
    %v5142 = vmul.f32 %v5132, 1.442695
    %v5143 = vpow.pop %v5142
    %v5144 = vmul.f32 %v5133, 1.442695
    %v5145 = vpow.pop %v5144
    %v5146 = vmul.f32 %v5134, 1.442695
    %v5147 = vpow.pop %v5146
    %v5148 = vmul.f32 %v5135, 1.442695
    %v5149 = vpow.pop %v5148
    %v5150 = vsel %vm285, %v5137, 0.0
    %5151 = vadd.xlane.f32.xlu0 %v5150
    %v5152 = vpop.xlane.xlu0 %5151
    %v5153 = vsel %vm285, %v5139, 0.0
    %5154 = vadd.xlane.f32.xlu0 %v5153
    %v5155 = vpop.xlane.xlu0 %5154
    %v5156 = vsel %vm285, %v5141, 0.0
    %5157 = vadd.xlane.f32.xlu0 %v5156
    %v5158 = vpop.xlane.xlu0 %5157
    %v5159 = vsel %vm285, %v5143, 0.0
    %5160 = vadd.xlane.f32.xlu0 %v5159
    %v5161 = vpop.xlane.xlu0 %5160
    %v5162 = vsel %vm285, %v5145, 0.0
    %5163 = vadd.xlane.f32.xlu0 %v5162
    %v5164 = vpop.xlane.xlu0 %5163
    %v5165 = vsel %vm285, %v5147, 0.0
    %5166 = vadd.xlane.f32.xlu0 %v5165
    %v5167 = vpop.xlane.xlu0 %5166
    %v5168 = vsel %vm5125, %v5149, 0.0
    %5169 = vadd.xlane.f32.xlu0 %v5168
    %v5170 = vpop.xlane.xlu0 %5169
    %v5171 = vrcp.pop %v5152
    %v5172 = vmul.f32 %v5137, %v5171
    %v5173 = vrcp.pop %v5155
    %v5174 = vmul.f32 %v5139, %v5173
    %v5175 = vrcp.pop %v5158
    %v5176 = vmul.f32 %v5141, %v5175
    %v5177 = vrcp.pop %v5161
    %v5178 = vmul.f32 %v5143, %v5177
    %v5179 = vrcp.pop %v5164
    %v5180 = vmul.f32 %v5145, %v5179
    %v5181 = vrcp.pop %v5167
    %v5182 = vmul.f32 %v5147, %v5181
    %v5183 = vrcp.pop %v5170
    %v5184 = vmul.f32 %v5149, %v5183
    %v5185 = vmul.f32 %v5172, %v4920
    %v5186 = vmul.f32 %v5174, %v4925
    %v5187 = vmul.f32 %v5176, %v4930
    %v5188 = vmul.f32 %v5178, %v4935
    %v5189 = vmul.f32 %v5180, %v4940
    %v5190 = vmul.f32 %v5182, %v4945
    %v5191 = vmul.f32 %v5184, %v4950
    %vm5192 = vcmask 400384
    %v5194 = vsel %vm5192, 1.0, 0
    %v5197 = vsel %vm4605, %v5191, 0
    %5199 = vmatprep.subr.mxu0 0.0
    %5200 = vmatpush1.msra.mxu0 0.0
    %5201 = vmatprep.subr.mxu0 0.0
    %5202 = vmatpush1.msra.mxu0 0.0
    %5203 = vmatprep.subr.mxu0 0.0
    %5204 = vmatpush1.msra.mxu0 0.0
    %5205 = vmatprep.subr.mxu0 0.0
    %5206 = vmatpush1.msra.mxu0 0.0
    %5207 = vmatprep.subr.mxu0 0.0
    %5208 = vmatpush1.msra.mxu0 0.0
    %5209 = vmatprep.subr.mxu0 0.0
    %5210 = vmatpush1.msra.mxu0 0.0
    %5211 = vmatprep.subr.mxu0 0.0
    %5212 = vmatpush1.msra.mxu0 0.0
    %5213 = vmatprep.subr.mxu0 0.0
    %5214 = vmatpush1.msra.mxu0 0.0
    %5215 = vmatprep.subr.mxu0 0.0
    %5216 = vmatpush1.msra.mxu0 0.0
    %5217 = vmatprep.subr.mxu0 0.0
    %5218 = vmatpush1.msra.mxu0 %v5197
    %5219 = vmatprep.subr.mxu0 0.0
    %5220 = vmatpush1.msra.mxu0 %v5190
    %5221 = vmatprep.subr.mxu0 0.0
    %5222 = vmatpush1.msra.mxu0 %v5189
    %5223 = vmatprep.subr.mxu0 0.0
    %5224 = vmatpush1.msra.mxu0 %v5188
    %5225 = vmatprep.subr.mxu0 0.0
    %5226 = vmatpush1.msra.mxu0 %v5187
    %5227 = vmatprep.subr.mxu0 0.0
    %5228 = vmatpush1.msra.mxu0 %v5186
    %5229 = vmatprep.subr.mxu0 0.0
    %5230 = vmatpush1.msra.mxu0 %v5185
    %5231 = vmatprep.subr.mxu0 0.0
    %5232 = vmatpush2.msra.mxu0 0.0
    %5233 = vmatprep.subr.mxu0 0.0
    %5234 = vmatpush2.msra.mxu0 0.0
    %5235 = vmatprep.subr.mxu0 0.0
    %5236 = vmatpush2.msra.mxu0 0.0
    %5237 = vmatprep.subr.mxu0 0.0
    %5238 = vmatpush2.msra.mxu0 0.0
    %5239 = vmatprep.subr.mxu0 0.0
    %5240 = vmatpush2.msra.mxu0 0.0
    %5241 = vmatprep.subr.mxu0 0.0
    %5242 = vmatpush2.msra.mxu0 0.0
    %5243 = vmatprep.subr.mxu0 0.0
    %5244 = vmatpush2.msra.mxu0 0.0
    %5245 = vmatprep.subr.mxu0 0.0
    %5246 = vmatpush2.msra.mxu0 0.0
    %5247 = vmatprep.subr.mxu0 0.0
    %5248 = vmatpush2.msra.mxu0 0.0
    %5249 = vmatprep.subr.mxu0 0.0
    %5250 = vmatpush2.msra.mxu0 0.0
    %5251 = vmatprep.subr.mxu0 0.0
    %5252 = vmatpush2.msra.mxu0 0.0
    %5253 = vmatprep.subr.mxu0 0.0
    %5254 = vmatpush2.msra.mxu0 0.0
    %5255 = vmatprep.subr.mxu0 0.0
    %5256 = vmatpush2.msra.mxu0 0.0
    %5257 = vmatprep.subr.mxu0 0.0
    %5258 = vmatpush2.msra.mxu0 0.0
    %5259 = vmatprep.subr.mxu0 0.0
    %5260 = vmatpush2.msra.mxu0 0.0
    %5261 = vmatprep.subr.mxu0 0.0
    %5262 = vmatpush2.msra.mxu0 0.0
    %5263 = vmatprep.mubr.f32.mxu0 0.0
    %5264 = vmatmul.mubr.f32.gmra.mxu0 %v5194
    %v5265 = vpop.f32.mrf.mxu0
    %v5266 = vadd.f32 0.0, %v5265
    %v5267 = vpop.f32.mrf.mxu0
    %5268 = vdwg.mxu0
    %v5269 = vld [vmem:[%s16] sm:$0xff]
    %v5270 = vld [vmem:[%s16 + $0x8] sm:$0xff]
    %v5271 = vld [vmem:[%s16 + $0x10] sm:$0xff]
    %v5272 = vld [vmem:[%s16 + $0x18] sm:$0xff]
    %v5273 = vld [vmem:[%s16 + $0x20] sm:$0xff]
    %v5274 = vld [vmem:[%s16 + $0x28] sm:$0xff]
    %v5275 = vld [vmem:[%s16 + $0x30] sm:$0xff]
    %v5276 = vld [vmem:[%s16 + $0x38] sm:$0xff]
    %v5277 = vld [vmem:[%s16 + $0x40] sm:$0xff]
    %v5278 = vld [vmem:[%s16 + $0x48] sm:$0xff]
    %v5279 = vld [vmem:[%s16 + $0x50] sm:$0xff]
    %v5280 = vld [vmem:[%s16 + $0x58] sm:$0xff]
    %v5281 = vld [vmem:[%s16 + $0x60] sm:$0xff]
    %v5282 = vld [vmem:[%s16 + $0x68] sm:$0xff]
    %v5283 = vld [vmem:[%s16 + $0x70] sm:$0xff]
    %v5284 = vld [vmem:[%s16 + $0x78] sm:$0xff]
    %v5285 = vld [vmem:[%s17] sm:$0x3]
    %v5287 = vlaneseq
    %v5288 = vshrl.u32 %v5287, 7
    %v5289 = vsub.s32 0, %v5288
    %v5290 = vrot.slane %v5285, %v5289
    %v5291 = vlaneseq
    %v5292 = vshrl.u32 %v5291, 7
    %v5293 = vsub.s32 1, %v5292
    %v5294 = vrot.slane %v5285, %v5293
    %v5298 = vsel %vm285, %v5266, 0
    %5300 = vmatprep.subr.mxu0 0.0
    %5301 = vmatpush1.msra.mxu0 0.0
    %5302 = vmatprep.subr.mxu0 0.0
    %5303 = vmatpush1.msra.mxu0 0.0
    %5304 = vmatprep.subr.mxu0 0.0
    %5305 = vmatpush1.msra.mxu0 0.0
    %5306 = vmatprep.subr.mxu0 0.0
    %5307 = vmatpush1.msra.mxu0 0.0
    %5308 = vmatprep.subr.mxu0 0.0
    %5309 = vmatpush1.msra.mxu0 0.0
    %5310 = vmatprep.subr.mxu0 0.0
    %5311 = vmatpush1.msra.mxu0 0.0
    %5312 = vmatprep.subr.mxu0 0.0
    %5313 = vmatpush1.msra.mxu0 0.0
    %5314 = vmatprep.subr.mxu0 0.0
    %5315 = vmatpush1.msra.mxu0 0.0
    %5316 = vmatprep.subr.mxu0 %v5284
    %5317 = vmatpush1.msra.mxu0 %v5283
    %5318 = vmatprep.subr.mxu0 %v5282
    %5319 = vmatpush1.msra.mxu0 %v5281
    %5320 = vmatprep.subr.mxu0 %v5280
    %5321 = vmatpush1.msra.mxu0 %v5279
    %5322 = vmatprep.subr.mxu0 %v5278
    %5323 = vmatpush1.msra.mxu0 %v5277
    %5324 = vmatprep.subr.mxu0 %v5276
    %5325 = vmatpush1.msra.mxu0 %v5275
    %5326 = vmatprep.subr.mxu0 %v5274
    %5327 = vmatpush1.msra.mxu0 %v5273
    %5328 = vmatprep.subr.mxu0 %v5272
    %5329 = vmatpush1.msra.mxu0 %v5271
    %5330 = vmatprep.subr.mxu0 %v5270
    %5331 = vmatpush1.msra.mxu0 %v5269
    %5332 = vmatprep.subr.mxu0 0.0
    %5333 = vmatpush2.msra.mxu0 0.0
    %5334 = vmatprep.subr.mxu0 0.0
    %5335 = vmatpush2.msra.mxu0 0.0
    %5336 = vmatprep.subr.mxu0 0.0
    %5337 = vmatpush2.msra.mxu0 0.0
    %5338 = vmatprep.subr.mxu0 0.0
    %5339 = vmatpush2.msra.mxu0 0.0
    %5340 = vmatprep.subr.mxu0 0.0
    %5341 = vmatpush2.msra.mxu0 0.0
    %5342 = vmatprep.subr.mxu0 0.0
    %5343 = vmatpush2.msra.mxu0 0.0
    %5344 = vmatprep.subr.mxu0 0.0
    %5345 = vmatpush2.msra.mxu0 0.0
    %5346 = vmatprep.subr.mxu0 0.0
    %5347 = vmatpush2.msra.mxu0 0.0
    %5348 = vmatprep.subr.mxu0 0.0
    %5349 = vmatpush2.msra.mxu0 0.0
    %5350 = vmatprep.subr.mxu0 0.0
    %5351 = vmatpush2.msra.mxu0 0.0
    %5352 = vmatprep.subr.mxu0 0.0
    %5353 = vmatpush2.msra.mxu0 0.0
    %5354 = vmatprep.subr.mxu0 0.0
    %5355 = vmatpush2.msra.mxu0 0.0
    %5356 = vmatprep.subr.mxu0 0.0
    %5357 = vmatpush2.msra.mxu0 0.0
    %5358 = vmatprep.subr.mxu0 0.0
    %5359 = vmatpush2.msra.mxu0 0.0
    %5360 = vmatprep.subr.mxu0 0.0
    %5361 = vmatpush2.msra.mxu0 0.0
    %5362 = vmatprep.subr.mxu0 0.0
    %5363 = vmatpush2.msra.mxu0 0.0
    %5364 = vmatprep.mubr.f32.mxu0 0.0
    %5365 = vmatmul.mubr.f32.gmra.mxu0 %v5298
    %v5366 = vpop.f32.mrf.mxu0
    %v5367 = vadd.f32 %v5290, %v5366
    %v5368 = vpop.f32.mrf.mxu0
    %v5369 = vadd.f32 %v5294, %v5368
    %5370 = vdwg.mxu0
    %5374 = vrot.lane.b32.xlu0 %v4815, 64
    %v5375 = vpop.permute.xlu0 %5374
    %5376 = vrot.lane.b32.xlu0 %v4816, 64
    %v5377 = vpop.permute.xlu0 %5376
    %5378 = vrot.lane.b32.xlu0 %v4817, 64
    %v5379 = vpop.permute.xlu0 %5378
    %v5380 = vsel %vm285, %v5375, %v5377
    %v5381 = vsel %vm285, %v5377, %v5379
    %v5384 = vadd.f32 %v5367, %v5380
    %v5385 = vadd.f32 %v5369, %v5381
    %v5386 = vxor.u32 %v5384, 2147483648
    %v5387 = vmul.f32 %v5386, 1.442695
    %v5388 = vpow.pop %v5387
    %v5389 = vadd.f32 %v5388, 1.0
    %v5390 = vrcp.pop %v5389
    %v5391 = vmul.f32 1.0, %v5390
    %v5392 = vtanh.pop %v5385
    %v5393 = vxor.u32 %v5385, 2147483648
    %v5394 = vmul.f32 %v5393, 1.442695
    %v5395 = vpow.pop %v5394
    %v5396 = vadd.f32 %v5395, 1.0
    %v5397 = vrcp.pop %v5396
    %v5398 = vmul.f32 1.0, %v5397
    %v5400 = vlaneseq
    %v5401 = vshrl.u32 %v5400, 7
    %v5402 = vsub.s32 0, %v5401
    %v5403 = vrot.slane %v4626, %v5402
    %5404 = vrot.lane.b32.xlu0 %v5403, 64
    %v5405 = vpop.permute.xlu0 %5404
    %v5407 = vmul.f32 %v5391, %v5405
    %v5408 = vmul.f32 %v5391, %v5392
    %5410 = vrot.lane.b32.xlu0 %v5408, 64
    %v5411 = vpop.permute.xlu0 %5410
    %v5413 = vadd.f32 %v5407, %v5411
    %v5414 = vtanh.pop %v5413
    %v5415 = vmul.f32 %v5398, %v5414
    %v5416 = vld [vmem:[%s18] sm:$0xff]
    %v5417 = vld [vmem:[%s18 + $0x8] sm:$0xff]
    %v5418 = vld [vmem:[%s18 + $0x10] sm:$0xff]
    %v5419 = vld [vmem:[%s18 + $0x18] sm:$0xff]
    %v5420 = vld [vmem:[%s18 + $0x20] sm:$0xff]
    %v5421 = vld [vmem:[%s18 + $0x28] sm:$0xff]
    %v5422 = vld [vmem:[%s18 + $0x30] sm:$0xff]
    %v5423 = vld [vmem:[%s18 + $0x38] sm:$0xff]
    %v5424 = vld [vmem:[%s19] sm:$0x1]
    %5426 = vrot.lane.b32.xlu0 %v5415, 64
    %v5427 = vpop.permute.xlu0 %5426
    %v5428 = vsel %vm285, %v5427, 0
    %5430 = vmatprep.subr.mxu0 0.0
    %5431 = vmatpush1.msra.mxu0 0.0
    %5432 = vmatprep.subr.mxu0 0.0
    %5433 = vmatpush1.msra.mxu0 0.0
    %5434 = vmatprep.subr.mxu0 0.0
    %5435 = vmatpush1.msra.mxu0 0.0
    %5436 = vmatprep.subr.mxu0 0.0
    %5437 = vmatpush1.msra.mxu0 0.0
    %5438 = vmatprep.subr.mxu0 0.0
    %5439 = vmatpush1.msra.mxu0 0.0
    %5440 = vmatprep.subr.mxu0 0.0
    %5441 = vmatpush1.msra.mxu0 0.0
    %5442 = vmatprep.subr.mxu0 0.0
    %5443 = vmatpush1.msra.mxu0 0.0
    %5444 = vmatprep.subr.mxu0 0.0
    %5445 = vmatpush1.msra.mxu0 0.0
    %5446 = vmatprep.subr.mxu0 0.0
    %5447 = vmatpush1.msra.mxu0 %v5423
    %5448 = vmatprep.subr.mxu0 0.0
    %5449 = vmatpush1.msra.mxu0 %v5422
    %5450 = vmatprep.subr.mxu0 0.0
    %5451 = vmatpush1.msra.mxu0 %v5421
    %5452 = vmatprep.subr.mxu0 0.0
    %5453 = vmatpush1.msra.mxu0 %v5420
    %5454 = vmatprep.subr.mxu0 0.0
    %5455 = vmatpush1.msra.mxu0 %v5419
    %5456 = vmatprep.subr.mxu0 0.0
    %5457 = vmatpush1.msra.mxu0 %v5418
    %5458 = vmatprep.subr.mxu0 0.0
    %5459 = vmatpush1.msra.mxu0 %v5417
    %5460 = vmatprep.subr.mxu0 0.0
    %5461 = vmatpush1.msra.mxu0 %v5416
    %5462 = vmatprep.subr.mxu0 0.0
    %5463 = vmatpush2.msra.mxu0 0.0
    %5464 = vmatprep.subr.mxu0 0.0
    %5465 = vmatpush2.msra.mxu0 0.0
    %5466 = vmatprep.subr.mxu0 0.0
    %5467 = vmatpush2.msra.mxu0 0.0
    %5468 = vmatprep.subr.mxu0 0.0
    %5469 = vmatpush2.msra.mxu0 0.0
    %5470 = vmatprep.subr.mxu0 0.0
    %5471 = vmatpush2.msra.mxu0 0.0
    %5472 = vmatprep.subr.mxu0 0.0
    %5473 = vmatpush2.msra.mxu0 0.0
    %5474 = vmatprep.subr.mxu0 0.0
    %5475 = vmatpush2.msra.mxu0 0.0
    %5476 = vmatprep.subr.mxu0 0.0
    %5477 = vmatpush2.msra.mxu0 0.0
    %5478 = vmatprep.subr.mxu0 0.0
    %5479 = vmatpush2.msra.mxu0 0.0
    %5480 = vmatprep.subr.mxu0 0.0
    %5481 = vmatpush2.msra.mxu0 0.0
    %5482 = vmatprep.subr.mxu0 0.0
    %5483 = vmatpush2.msra.mxu0 0.0
    %5484 = vmatprep.subr.mxu0 0.0
    %5485 = vmatpush2.msra.mxu0 0.0
    %5486 = vmatprep.subr.mxu0 0.0
    %5487 = vmatpush2.msra.mxu0 0.0
    %5488 = vmatprep.subr.mxu0 0.0
    %5489 = vmatpush2.msra.mxu0 0.0
    %5490 = vmatprep.subr.mxu0 0.0
    %5491 = vmatpush2.msra.mxu0 0.0
    %5492 = vmatprep.subr.mxu0 0.0
    %5493 = vmatpush2.msra.mxu0 0.0
    %5494 = vmatprep.mubr.f32.mxu0 0.0
    %5495 = vmatmul.mubr.f32.gmra.mxu0 %v5428
    %v5496 = vpop.f32.mrf.mxu0
    %v5497 = vadd.f32 %v5424, %v5496
    %v5498 = vpop.f32.mrf.mxu0
    %5499 = vdwg.mxu0
    %vm5500 = vcmask 32768
    %5501 = vst.msk [vmem:[#allocation2] sm:$0x1] %vm5500, %v5497
    %5503 = vst.msk [vmem:[#allocation4] sm:$0x1] %vm5125, %v5427
    %5505 = vrot.lane.b32.xlu0 %v5413, 64
    %v5506 = vpop.permute.xlu0 %5505
    %5508 = vst.msk [vmem:[#allocation6] sm:$0x1] %vm5125, %v5506
    // Predicated region
    $region82: #{qnet_darqn_forward.1} parent=1 // pred_check
      _
    $region83: #{qnet_darqn_forward.1} parent=1 // pred_check_branch
      %5510 = sbr.rel (0) target = $region85
    $region84: #{qnet_darqn_forward.1} parent=1 // pred_region
      %s5512 = ssub.s32 16, 16
      %5513 = vsyncadd [#allocation3], %s5512
      %s5515 = sshll.u32 [#allocation2], 4
      %s5516 = int_to_ptr.vmem [resolvable:$true] %s5515
      %5518 = dma.vmem_to_hbm [thread:$0]  %s5516, 16, %s20, [#allocation3]
    $region85: #{qnet_darqn_forward.1} parent=1 // pred_fallthru
      _
    // Predicated region
    $region86: #{qnet_darqn_forward.1} parent=1 // pred_check
      _
    $region87: #{qnet_darqn_forward.1} parent=1 // pred_check_branch
      %5520 = sbr.rel (0) target = $region89
    $region88: #{qnet_darqn_forward.1} parent=1 // pred_region
      %s5522 = ssub.s32 16, 16
      %5523 = vsyncadd [#allocation5], %s5522
      %s5525 = sshll.u32 [#allocation4], 4
      %s5526 = int_to_ptr.vmem [resolvable:$true] %s5525
      %5528 = dma.vmem_to_hbm [thread:$0]  %s5526, 16, %s21, [#allocation5]
    $region89: #{qnet_darqn_forward.1} parent=1 // pred_fallthru
      _
    // Predicated region
    $region90: #{qnet_darqn_forward.1} parent=1 // pred_check
      _
    $region91: #{qnet_darqn_forward.1} parent=1 // pred_check_branch
      %5530 = sbr.rel (0) target = $region93
    $region92: #{qnet_darqn_forward.1} parent=1 // pred_region
      %s5532 = ssub.s32 16, 16
      %5533 = vsyncadd [#allocation5], %s5532
      %s5535 = sshll.u32 [#allocation6], 4
      %s5536 = int_to_ptr.vmem [resolvable:$true] %s5535
      %5538 = dma.vmem_to_hbm [thread:$0]  %s5536, 16, %s22, [#allocation5]
    $region93: #{qnet_darqn_forward.1} parent=1 // pred_fallthru
      _
    // Predicated region
    $region94: #{qnet_darqn_forward.1} parent=1 // pred_check
      _
    $region95: #{qnet_darqn_forward.1} parent=1 // pred_check_branch
      %5540 = sbr.rel (0) target = $region97
    $region96: #{qnet_darqn_forward.1} parent=1 // pred_region
      %5541 = dma.done [#allocation3], 16
    $region97: #{qnet_darqn_forward.1} parent=1 // pred_fallthru
      _
    // Predicated region
    $region98: #{qnet_darqn_forward.1} parent=1 // pred_check
      _
    $region99: #{qnet_darqn_forward.1} parent=1 // pred_check_branch
      %5543 = sbr.rel (0) target = $region101
    $region100: #{qnet_darqn_forward.1} parent=1 // pred_region
      %5544 = dma.done [#allocation5], 16
    $region101: #{qnet_darqn_forward.1} parent=1 // pred_fallthru
      _
    // Predicated region
    $region102: #{qnet_darqn_forward.1} parent=1 // pred_check
      _
    $region103: #{qnet_darqn_forward.1} parent=1 // pred_check_branch
      %5546 = sbr.rel (0) target = $region105
    $region104: #{qnet_darqn_forward.1} parent=1 // pred_region
      %5547 = dma.done [#allocation5], 16
    $region105: #{qnet_darqn_forward.1} parent=1 // pred_fallthru
      _
    %5548 = vsyncpa [#allocation3], 1
    %5549 = vsyncpa [#allocation5], 1

</llo_original>
